<compile_context>
chip_gen: v7x
topology: tpu7x:2x2x1
jax: 0.10.0
libtpu: 0.0.40
codegen_flags: <defaults>
</compile_context>

<pallas_src>
import functools

import jax
import jax.numpy as jnp
from jax.experimental import pallas as pl
from jax.experimental.pallas import tpu as pltpu


# ------------------------------- helpers -------------------------------------

def _round_up(v, m):
    return (v + m - 1) // m * m


def _pad_to(a, shape):
    """Zero-pad `a` (trailing) up to `shape` (trace-time, XLA side)."""
    out = jnp.zeros(shape, a.dtype)
    return out.at[tuple(slice(0, s) for s in a.shape)].set(a)


def _zero_border(ref, r0, rn, c0, cn):
    """Zero all of `ref` except rows [r0,r0+rn) x cols [c0,c0+cn) (dims 1, 2).

    Only thin border strips are written, every grid step, so the padded
    scratch is always consistent regardless of how the parallel grid axis is
    scheduled across TensorCores.
    """
    Nb, Hq, Wq, C = ref.shape
    dt = ref.dtype
    if r0 > 0:
        ref[:, 0:r0, :, :] = jnp.zeros((Nb, r0, Wq, C), dt)
    if r0 + rn < Hq:
        ref[:, r0 + rn:Hq, :, :] = jnp.zeros((Nb, Hq - r0 - rn, Wq, C), dt)
    if c0 > 0:
        ref[:, r0:r0 + rn, 0:c0, :] = jnp.zeros((Nb, rn, c0, C), dt)
    if c0 + cn < Wq:
        ref[:, r0:r0 + rn, c0 + cn:Wq, :] = jnp.zeros((Nb, rn, Wq - c0 - cn, C), dt)


# ------------------------------ fused kernel ---------------------------------

def _mobile_block_kernel(x_ref, w_pw_ref, b_pw_ref, w_dw_ref, b_dw_ref,
                         w_pwl_ref, b_pwl_ref, *rest,
                         stride, pad, K, H, W, has_sc_conv):
    """Fused MobileBlock forward for Nb images.

    x_ref     : (Nb, H*W, Cin)      f32, rows phase-deinterleaved when stride>1
    w_pw_ref  : (Cin, innerp)       bf16, BN scale folded, inner zero-padded
    b_pw_ref  : (1, innerp)         f32
    w_dw_ref  : (K*K, innerp)       f32 depthwise taps, BN scale folded
    b_dw_ref  : (1, innerp)         f32
    w_pwl_ref : (innerp, Coutp)     bf16
    b_pwl_ref : (1, Coutp)          f32
    [w_sc_ref]: (Cin, Coutp)        bf16 (only when Cin != Cout)
    o_ref     : (Nb, Ho*Wo, Coutp)  f32 lane-dense output
    phase_refs: stride*stride VMEM scratch (Nb, Hq, Wq, innerp) f32
    """
    if has_sc_conv:
        w_sc_ref, o_ref = rest[0], rest[1]
        phase_refs = rest[2:]
    else:
        o_ref = rest[0]
        phase_refs = rest[1:]

    S = stride
    Nb, HW, Cin = x_ref.shape
    innerp = w_dw_ref.shape[1]
    Coutp = o_ref.shape[-1]
    Hn, Wn = H // S, W // S
    Hp, Wp = H + 2 * pad, W + 2 * pad
    Ho = (Hp - K) // S + 1
    Wo = (Wp - K) // S + 1
    M = Nb * Ho * Wo

    # ---- 1x1 expand + folded BN + ReLU (MXU: bf16 x bf16 -> f32 acc) -------
    x = x_ref[...]                                          # (Nb, H*W, Cin) f32
    h1 = jnp.dot(x.reshape(Nb * HW, Cin).astype(jnp.bfloat16), w_pw_ref[...],
                 preferred_element_type=jnp.float32)
    h1 = jnp.maximum(h1 + b_pw_ref[...], 0.0)               # (Nb*H*W, innerp)

    # ---- scatter h1 into zero-padded phase scratch (stays in VMEM) ---------
    h1 = h1.reshape(Nb, S * S, Hn * Wn, innerp)             # major-dim split (free)
    for rh in range(S):
        for rw in range(S):
            pr = phase_refs[((rh + pad) % S) * S + ((rw + pad) % S)]
            qh0, qw0 = (rh + pad) // S, (rw + pad) // S
            _zero_border(pr, qh0, Hn, qw0, Wn)
            pr[:, qh0:qh0 + Hn, qw0:qw0 + Wn, :] = (
                h1[:, rh * S + rw].reshape(Nb, Hn, Wn, innerp))

    # ---- depthwise KxK + folded BN + ReLU (VPU, contiguous tap slices) -----
    wdw = w_dw_ref[...]                                     # loaded once, (K*K, innerp)
    bdw = b_dw_ref[...]
    acc = None
    for kh in range(K):                                     # unrolled K*K taps
        for kw in range(K):
            pr = phase_refs[(kh % S) * S + (kw % S)]
            patch = pr[:, kh // S:kh // S + Ho, kw // S:kw // S + Wo, :]
            term = patch * wdw[kh * K + kw]
            acc = term if acc is None else acc + term
    h2 = jnp.maximum(acc + bdw[0], 0.0)                     # (Nb, Ho, Wo, innerp)

    # ---- 1x1 linear projection + folded BN (MXU) ---------------------------
    y = jnp.dot(h2.reshape(M, innerp).astype(jnp.bfloat16), w_pwl_ref[...],
                preferred_element_type=jnp.float32)
    y = y + b_pwl_ref[...]                                  # (M, Coutp)

    # ---- shortcut branch ----------------------------------------------------
    if S > 1:
        # F.avg_pool2d(res, S, padding=0) == mean over the S*S input phases.
        xs = x.reshape(Nb, S * S, Hn * Wn, Cin)
        sc = xs[:, 0]
        for p in range(1, S * S):
            sc = sc + xs[:, p]
        sc = (sc * (1.0 / (S * S))).reshape(M, Cin)
    else:
        sc = x.reshape(M, Cin)
    if has_sc_conv:
        sc = jnp.dot(sc.astype(jnp.bfloat16), w_sc_ref[...],
                     preferred_element_type=jnp.float32)    # (M, Coutp)
    elif Coutp > Cin:
        # identity shortcut (Cin == Cout): lane-pad residual to Coutp, exact f32
        sc = jnp.concatenate(
            [sc, jnp.zeros((M, Coutp - Cin), jnp.float32)], axis=-1)

    o_ref[...] = (y + sc).reshape(Nb, Ho * Wo, Coutp).astype(o_ref.dtype)


# ------------------------------ kernel wrapper --------------------------------

def mobile_block_pallas(x, wp, *, stride, images_per_step=None):
    """Fused MobileBlock forward (NHWC in / NHWC out), one pallas_call per block."""
    N, H, W, Cin = x.shape
    K = wp["ksize"]
    Cout = wp["cout"]
    innerp = wp["w_dw"].shape[1]
    Coutp = wp["w_pwl"].shape[1]
    S = stride
    pad = 1 if K == 3 else 2
    Hp, Wp = H + 2 * pad, W + 2 * pad
    Ho = (Hp - K) // S + 1
    Wo = (Wp - K) // S + 1
    has_sc_conv = (Cin != Cout)

    if S > 1:
        # TODO(synk): odd spatial sizes need the avg_pool2d padding=1 path.
        assert H % S == 0 and W % S == 0 and Ho == H // S and Wo == W // S
        Hn, Wn = H // S, W // S
        # Wrapper-side phase deinterleave (XLA layout plumbing) so the kernel's
        # depthwise taps / avg-pool shortcut only use contiguous slices.
        x_flat = (x.reshape(N, Hn, S, Wn, S, Cin)
                  .transpose(0, 2, 4, 1, 3, 5)
                  .reshape(N, H * W, Cin))
    else:
        x_flat = x.reshape(N, H * W, Cin)
    Hq, Wq = -(-Hp // S), -(-Wp // S)            # phase-buffer spatial extents

    if images_per_step is None:
        # Largest divisor of N that still leaves >= 2 grid steps (v7x: 2 TCs);
        # taller M per step amortizes per-step overhead and fills the MXU.
        images_per_step = 1
        for d in range(1, N + 1):
            if N % d == 0 and N // d >= 2:
                images_per_step = d
    Nb = images_per_step
    assert N % Nb == 0
    grid = (N // Nb,)

    args = [x_flat, wp["w_pw"], wp["b_pw"], wp["w_dw"], wp["b_dw"],
            wp["w_pwl"], wp["b_pwl"]]
    in_specs = [
        pl.BlockSpec((Nb, H * W, Cin), lambda n: (n, 0, 0)),
        pl.BlockSpec((Cin, innerp), lambda n: (0, 0)),       # weights stay resident
        pl.BlockSpec((1, innerp), lambda n: (0, 0)),
        pl.BlockSpec((K * K, innerp), lambda n: (0, 0)),
        pl.BlockSpec((1, innerp), lambda n: (0, 0)),
        pl.BlockSpec((innerp, Coutp), lambda n: (0, 0)),
        pl.BlockSpec((1, Coutp), lambda n: (0, 0)),
    ]
    if has_sc_conv:
        args.append(wp["w_sc"])
        in_specs.append(pl.BlockSpec((Cin, Coutp), lambda n: (0, 0)))

    out = pl.pallas_call(
        functools.partial(_mobile_block_kernel, stride=S, pad=pad, K=K,
                          H=H, W=W, has_sc_conv=has_sc_conv),
        out_shape=jax.ShapeDtypeStruct((N, Ho * Wo, Coutp), jnp.float32),
        grid=grid,
        in_specs=in_specs,
        out_specs=pl.BlockSpec((Nb, Ho * Wo, Coutp), lambda n: (n, 0, 0)),
        scratch_shapes=[pltpu.VMEM((Nb, Hq, Wq, innerp), jnp.float32)
                        for _ in range(S * S)],
        compiler_params=pltpu.CompilerParams(
            dimension_semantics=("parallel",)),
    )(*args)

    # lane-padded (Coutp) output -> real channels, back to NHWC
    return out[..., :Cout].reshape(N, Ho, Wo, Cout)


# ----------------------- weight prep / BN fold (trace time) -------------------

def fold_bn(bn, c, eps=1e-5):
    scale = bn["gamma"][:c] / jnp.sqrt(bn["var"][:c] + eps)
    bias = bn["beta"][:c] - bn["mean"][:c] * scale
    return scale, bias


def prep_block_weights(p, *, in_channels, ratio, max_ratio, ksize, out_channels):
    """Slice elastic weights, fold BN, zero-pad inner/Cout to lane multiples (128)."""
    # TODO(synk): max(ratio) == 1 (no pointwise expansion) path not implemented.
    assert max_ratio > 1 and ksize in (3, 5)
    inner = in_channels * ratio
    innerp = _round_up(inner, 128)
    coutp = _round_up(out_channels, 128)

    w_pw = jnp.transpose(p["pw_w"][:inner, :in_channels, 0, 0])         # (Cin, inner)
    s, b = fold_bn(p["pw_bn"], inner)
    w_pw = _pad_to(w_pw * s[None, :], (in_channels, innerp)).astype(jnp.bfloat16)
    b_pw = _pad_to(b.reshape(1, inner), (1, innerp)).astype(jnp.float32)

    wdw = (p["dw_w"][:inner, 0, 1:4, 1:4] if ksize == 3                 # elastic kernel
           else p["dw_w"][:inner, 0, :, :])
    wdw = jnp.transpose(wdw, (1, 2, 0)).reshape(ksize * ksize, inner)   # (K*K, inner)
    s, b = fold_bn(p["dw_bn"], inner)
    w_dw = _pad_to(wdw * s[None, :], (ksize * ksize, innerp)).astype(jnp.float32)
    b_dw = _pad_to(b.reshape(1, inner), (1, innerp)).astype(jnp.float32)

    w_pwl = jnp.transpose(p["pwl_w"][:out_channels, :inner, 0, 0])      # (inner, Cout)
    s, b = fold_bn(p["pwl_bn"], out_channels)
    w_pwl = _pad_to(w_pwl * s[None, :], (innerp, coutp)).astype(jnp.bfloat16)
    b_pwl = _pad_to(b.reshape(1, out_channels), (1, coutp)).astype(jnp.float32)

    w_sc = _pad_to(jnp.transpose(p["sc_w"][:out_channels, :in_channels, 0, 0]),
                   (in_channels, coutp)).astype(jnp.bfloat16)

    return dict(w_pw=w_pw, b_pw=b_pw, w_dw=w_dw, b_dw=b_dw,
                w_pwl=w_pwl, b_pwl=b_pwl, w_sc=w_sc,
                ksize=ksize, cout=out_channels)


# --------------------------- pure-JAX reference --------------------------------

def mobile_block_ref(x, p, *, stride, ratio, max_ratio, ksize, out_channels):
    """MobileBlock.forward in plain f32 JAX (NHWC) for correctness checking."""
    N, H, W, Cin = x.shape
    inner = Cin * ratio
    hp = jax.lax.Precision.HIGHEST
    res = x

    if max_ratio > 1:
        w = jnp.transpose(p["pw_w"][:inner, :Cin, 0, 0])
        s, b = fold_bn(p["pw_bn"], inner)
        x = jnp.einsum("nhwc,cd->nhwd", x, w, precision=hp) * s + b
        x = jnp.maximum(x, 0.0)

    pad = 1 if ksize == 3 else 2
    wdw = (p["dw_w"][:inner, 0, 1:4, 1:4] if ksize == 3
           else p["dw_w"][:inner, 0, :, :])
    wdw = jnp.transpose(wdw, (1, 2, 0)).reshape(ksize, ksize, 1, inner)
    s, b = fold_bn(p["dw_bn"], inner)
    x = jax.lax.conv_general_dilated(
        x, wdw, window_strides=(stride, stride),
        padding=[(pad, pad), (pad, pad)],
        dimension_numbers=("NHWC", "HWIO", "NHWC"),
        feature_group_count=inner, precision=hp)
    x = jnp.maximum(x * s + b, 0.0)

    w = jnp.transpose(p["pwl_w"][:out_channels, :inner, 0, 0])
    s, b = fold_bn(p["pwl_bn"], out_channels)
    x = jnp.einsum("nhwc,cd->nhwd", x, w, precision=hp) * s + b

    if Cin == out_channels and stride == 1:
        return x + res
    sc = res
    if stride > 1:
        # F.avg_pool2d(res, stride, padding=0) for even spatial sizes.
        sc = sc.reshape(N, H // stride, stride, W // stride, stride, Cin)
        sc = sc.mean(axis=(2, 4))
    if Cin != out_channels:
        wsc = jnp.transpose(p["sc_w"][:out_channels, :Cin, 0, 0])
        sc = jnp.einsum("nhwc,cd->nhwd", sc, wsc, precision=hp)
    return x + sc


# --------------------------- SuperCNNLayer forward -----------------------------

def super_cnn_layer_forward(x_nchw, params, cfg, use_pallas=True):
    """SuperCNNLayer.forward; accepts NCHW (PyTorch convention)."""
    x = jnp.transpose(x_nchw, (0, 2, 3, 1))          # NHWC for the kernels
    for idx in range(cfg["sampled_layers"]):
        stride = 2 if (idx == 0 and cfg["downsampling"]) else 1
        blk = dict(ratio=cfg["sampled_ratio"], max_ratio=max(cfg["ratio"]),
                   ksize=cfg["sampled_kernel_size"],
                   out_channels=cfg["sampled_out_channels"])
        if use_pallas:
            wp = prep_block_weights(params[idx], in_channels=x.shape[-1], **blk)
            x = mobile_block_pallas(x, wp, stride=stride)
        else:
            x = mobile_block_ref(x, params[idx], stride=stride, **blk)
    return jnp.transpose(x, (0, 3, 1, 2))            # back to NCHW


# ------------------------------- params init -----------------------------------

def init_block_params(key, max_in_param, max_inner, max_out):
    ks = jax.random.split(key, 7)

    def n(k, shape, s=0.1):
        return jax.random.normal(k, shape, jnp.float32) * s

    def bn(k, c):
        k1, k2, k3, k4 = jax.random.split(k, 4)
        return dict(
            gamma=1.0 + n(k1, (c,), 0.3),
            beta=n(k2, (c,), 0.2),
            mean=n(k3, (c,), 0.2),
            var=jax.random.uniform(k4, (c,), jnp.float32, 0.5, 1.5),
        )

    return dict(
        pw_w=n(ks[0], (max_inner, max_in_param, 1, 1)),   # nn.Conv2d(max_ch, max_inner, 1)
        dw_w=n(ks[1], (max_inner, 1, 5, 5)),              # depthwise 5x5
        pwl_w=n(ks[2], (max_out, max_inner, 1, 1)),
        sc_w=n(ks[3], (max_out, max_in_param, 1, 1)),
        pw_bn=bn(ks[4], max_inner),
        dw_bn=bn(ks[5], max_inner),
        pwl_bn=bn(ks[6], max_out),
    )


# ----------------------------------- main ---------------------------------------

if __name__ == "__main__":
    key = jax.random.PRNGKey(0)
    kx, kp = jax.random.split(key)

    # SuperCNNLayer(depth=2, min_depth=1, min_channels=8, in_channels=8,
    #               out_channels=16, ratio=[2,4], downsampling=True, res=[16])
    # with arch_sampling(mode='max'):
    depth = 2
    in_channels = 8
    out_channels = 16
    ratio = [2, 4]
    kr_size = [5, 3]
    cfg = dict(
        sampled_layers=depth,
        sampled_ratio=max(ratio),            # 4
        sampled_kernel_size=max(kr_size),    # 5
        sampled_out_channels=out_channels,   # 16
        ratio=ratio,
        downsampling=True,
    )

    max_inner = out_channels * max(ratio)    # 64
    pkeys = jax.random.split(kp, depth)
    params = [init_block_params(pkeys[i], out_channels, max_inner, out_channels)
              for i in range(depth)]

    # input: NCHW, batch=2, channels=8, spatial=16x16
    x = jax.random.normal(kx, (2, in_channels, 16, 16), jnp.float32)

    fwd = jax.jit(lambda xx, pp: super_cnn_layer_forward(xx, pp, cfg, True))
    ref = jax.jit(lambda xx, pp: super_cnn_layer_forward(xx, pp, cfg, False))

    y = jax.block_until_ready(fwd(x, params))
    y_ref = jax.block_until_ready(ref(x, params))

    assert y.shape == (2, out_channels, 8, 8), y.shape
    assert jnp.all(jnp.isfinite(y))
    # Tolerance: kernel matmuls are bf16 x bf16 -> f32 (per-operand rounding
    # ~2^-9), three chained dots per block, two blocks; errors accumulate in
    # quadrature to ~1e-2 worst case on |y| ~ O(1), so 3e-2 bounds that with
    # margin while still catching real bugs against the f32/HIGHEST reference.
    max_err = float(jnp.max(jnp.abs(y - y_ref)))
    assert jnp.allclose(y, y_ref, atol=3e-2, rtol=3e-2), max_err

    print("KERNEL_OK")
</pallas_src>

<mosaic_0001>
module attributes {stable_mosaic.version = 11 : i64} {
  func.func @_mobile_block_kernel(%arg0: i32, %arg1: memref<1x256x8xf32, #tpu.memory_space<vmem>>, %arg2: memref<8x128xbf16, #tpu.memory_space<vmem>>, %arg3: memref<1x128xf32, #tpu.memory_space<vmem>>, %arg4: memref<25x128xf32, #tpu.memory_space<vmem>>, %arg5: memref<1x128xf32, #tpu.memory_space<vmem>>, %arg6: memref<128x128xbf16, #tpu.memory_space<vmem>>, %arg7: memref<1x128xf32, #tpu.memory_space<vmem>>, %arg8: memref<8x128xbf16, #tpu.memory_space<vmem>>, %arg9: memref<1x64x128xf32, #tpu.memory_space<vmem>>, %arg10: memref<1x10x10x128xf32, #tpu.memory_space<vmem>>, %arg11: memref<1x10x10x128xf32, #tpu.memory_space<vmem>>, %arg12: memref<1x10x10x128xf32, #tpu.memory_space<vmem>>, %arg13: memref<1x10x10x128xf32, #tpu.memory_space<vmem>>) attributes {dimension_semantics = [#tpu.dimension_semantics<parallel>], iteration_bounds = array<i64: 2>, scalar_prefetch = 0 : i64, scratch_operands = 4 : i64, tpu.core_type = #tpu.core_type<tc>, window_params = [{transform_indices = @transform_0, window_bounds = array<i64: 1, 256, 8>}, {pipeline_mode = #tpu.pipeline_mode<synchronous>, transform_indices = @transform_1, window_bounds = array<i64: 8, 128>}, {pipeline_mode = #tpu.pipeline_mode<synchronous>, transform_indices = @transform_2, window_bounds = array<i64: 1, 128>}, {pipeline_mode = #tpu.pipeline_mode<synchronous>, transform_indices = @transform_3, window_bounds = array<i64: 25, 128>}, {pipeline_mode = #tpu.pipeline_mode<synchronous>, transform_indices = @transform_4, window_bounds = array<i64: 1, 128>}, {pipeline_mode = #tpu.pipeline_mode<synchronous>, transform_indices = @transform_5, window_bounds = array<i64: 128, 128>}, {pipeline_mode = #tpu.pipeline_mode<synchronous>, transform_indices = @transform_6, window_bounds = array<i64: 1, 128>}, {pipeline_mode = #tpu.pipeline_mode<synchronous>, transform_indices = @transform_7, window_bounds = array<i64: 8, 128>}, {transform_indices = @transform_8, window_bounds = array<i64: 1, 64, 128>}]} {
    %c0 = arith.constant 0 : index
    %c0_0 = arith.constant 0 : index
    %c0_1 = arith.constant 0 : index
    %0 = vector.load %arg1[%c0, %c0_0, %c0_1] : memref<1x256x8xf32, #tpu.memory_space<vmem>>, vector<1x256x8xf32>
    %1 = vector.shape_cast %0 : vector<1x256x8xf32> to vector<256x8xf32>
    %2 = arith.truncf %1 : vector<256x8xf32> to vector<256x8xbf16>
    %c0_2 = arith.constant 0 : index
    %c0_3 = arith.constant 0 : index
    %3 = vector.load %arg2[%c0_2, %c0_3] : memref<8x128xbf16, #tpu.memory_space<vmem>>, vector<8x128xbf16>
    %cst = arith.constant dense<0.000000e+00> : vector<256x128xf32>
    %4 = tpu.matmul %2, %3, %cst {dimension_numbers = #tpu.dot_dimension_numbers<[1], [0], [0], [1], [0, 0, 1, 1], [], []>} : vector<256x8xbf16>, vector<8x128xbf16>, vector<256x128xf32> -> vector<256x128xf32>
    %c0_4 = arith.constant 0 : index
    %c0_5 = arith.constant 0 : index
    %5 = vector.load %arg3[%c0_4, %c0_5] : memref<1x128xf32, #tpu.memory_space<vmem>>, vector<1x128xf32>
    %6 = vector.broadcast %5 : vector<1x128xf32> to vector<256x128xf32>
    %7 = arith.addf %4, %6 : vector<256x128xf32>
    %cst_6 = arith.constant 0.000000e+00 : f32
    %8 = vector.broadcast %cst_6 : f32 to vector<256x128xf32>
    %9 = arith.maximumf %7, %8 : vector<256x128xf32>
    %10 = vector.shape_cast %9 : vector<256x128xf32> to vector<1x4x64x128xf32>
    %cst_7 = arith.constant 0.000000e+00 : f32
    %11 = vector.broadcast %cst_7 : f32 to vector<1x1x10x128xf32>
    %c0_8 = arith.constant 0 : index
    %c0_9 = arith.constant 0 : index
    %c0_10 = arith.constant 0 : index
    %c0_11 = arith.constant 0 : index
    %12 = vector.load %arg10[%c0_8, %c0_9, %c0_10, %c0_11] : memref<1x10x10x128xf32, #tpu.memory_space<vmem>>, vector<1x1x10x128xf32>
    tpu.vector_store %arg10[%c0_8, %c0_9, %c0_10, %c0_11], %11 {strides = array<i32>} : memref<1x10x10x128xf32, #tpu.memory_space<vmem>>, vector<1x1x10x128xf32>,
    %cst_12 = arith.constant 0.000000e+00 : f32
    %13 = vector.broadcast %cst_12 : f32 to vector<1x1x10x128xf32>
    %c0_13 = arith.constant 0 : index
    %c9 = arith.constant 9 : index
    %c0_14 = arith.constant 0 : index
    %c0_15 = arith.constant 0 : index
    %14 = vector.load %arg10[%c0_13, %c9, %c0_14, %c0_15] : memref<1x10x10x128xf32, #tpu.memory_space<vmem>>, vector<1x1x10x128xf32>
    tpu.vector_store %arg10[%c0_13, %c9, %c0_14, %c0_15], %13 {strides = array<i32>} : memref<1x10x10x128xf32, #tpu.memory_space<vmem>>, vector<1x1x10x128xf32>,
    %cst_16 = arith.constant 0.000000e+00 : f32
    %15 = vector.broadcast %cst_16 : f32 to vector<1x8x1x128xf32>
    %c0_17 = arith.constant 0 : index
    %c1 = arith.constant 1 : index
    %c0_18 = arith.constant 0 : index
    %c0_19 = arith.constant 0 : index
    %16 = vector.load %arg10[%c0_17, %c1, %c0_18, %c0_19] : memref<1x10x10x128xf32, #tpu.memory_space<vmem>>, vector<1x8x1x128xf32>
    tpu.vector_store %arg10[%c0_17, %c1, %c0_18, %c0_19], %15 {strides = array<i32>} : memref<1x10x10x128xf32, #tpu.memory_space<vmem>>, vector<1x8x1x128xf32>,
    %cst_20 = arith.constant 0.000000e+00 : f32
    %17 = vector.broadcast %cst_20 : f32 to vector<1x8x1x128xf32>
    %c0_21 = arith.constant 0 : index
    %c1_22 = arith.constant 1 : index
    %c9_23 = arith.constant 9 : index
    %c0_24 = arith.constant 0 : index
    %18 = vector.load %arg10[%c0_21, %c1_22, %c9_23, %c0_24] : memref<1x10x10x128xf32, #tpu.memory_space<vmem>>, vector<1x8x1x128xf32>
    tpu.vector_store %arg10[%c0_21, %c1_22, %c9_23, %c0_24], %17 {strides = array<i32>} : memref<1x10x10x128xf32, #tpu.memory_space<vmem>>, vector<1x8x1x128xf32>,
    %19 = vector.extract_strided_slice %10 {offsets = [0, 0, 0, 0], sizes = [1, 1, 64, 128], strides = [1, 1, 1, 1]} : vector<1x4x64x128xf32> to vector<1x1x64x128xf32>
    %20 = vector.shape_cast %19 : vector<1x1x64x128xf32> to vector<1x64x128xf32>
    %21 = vector.shape_cast %20 : vector<1x64x128xf32> to vector<1x8x8x128xf32>
    %c0_25 = arith.constant 0 : index
    %c1_26 = arith.constant 1 : index
    %c1_27 = arith.constant 1 : index
    %c0_28 = arith.constant 0 : index
    %22 = vector.load %arg10[%c0_25, %c1_26, %c1_27, %c0_28] : memref<1x10x10x128xf32, #tpu.memory_space<vmem>>, vector<1x8x8x128xf32>
    tpu.vector_store %arg10[%c0_25, %c1_26, %c1_27, %c0_28], %21 {strides = array<i32>} : memref<1x10x10x128xf32, #tpu.memory_space<vmem>>, vector<1x8x8x128xf32>,
    %cst_29 = arith.constant 0.000000e+00 : f32
    %23 = vector.broadcast %cst_29 : f32 to vector<1x1x10x128xf32>
    %c0_30 = arith.constant 0 : index
    %c0_31 = arith.constant 0 : index
    %c0_32 = arith.constant 0 : index
    %c0_33 = arith.constant 0 : index
    %24 = vector.load %arg11[%c0_30, %c0_31, %c0_32, %c0_33] : memref<1x10x10x128xf32, #tpu.memory_space<vmem>>, vector<1x1x10x128xf32>
    tpu.vector_store %arg11[%c0_30, %c0_31, %c0_32, %c0_33], %23 {strides = array<i32>} : memref<1x10x10x128xf32, #tpu.memory_space<vmem>>, vector<1x1x10x128xf32>,
    %cst_34 = arith.constant 0.000000e+00 : f32
    %25 = vector.broadcast %cst_34 : f32 to vector<1x1x10x128xf32>
    %c0_35 = arith.constant 0 : index
    %c9_36 = arith.constant 9 : index
    %c0_37 = arith.constant 0 : index
    %c0_38 = arith.constant 0 : index
    %26 = vector.load %arg11[%c0_35, %c9_36, %c0_37, %c0_38] : memref<1x10x10x128xf32, #tpu.memory_space<vmem>>, vector<1x1x10x128xf32>
    tpu.vector_store %arg11[%c0_35, %c9_36, %c0_37, %c0_38], %25 {strides = array<i32>} : memref<1x10x10x128xf32, #tpu.memory_space<vmem>>, vector<1x1x10x128xf32>,
    %cst_39 = arith.constant 0.000000e+00 : f32
    %27 = vector.broadcast %cst_39 : f32 to vector<1x8x1x128xf32>
    %c0_40 = arith.constant 0 : index
    %c1_41 = arith.constant 1 : index
    %c0_42 = arith.constant 0 : index
    %c0_43 = arith.constant 0 : index
    %28 = vector.load %arg11[%c0_40, %c1_41, %c0_42, %c0_43] : memref<1x10x10x128xf32, #tpu.memory_space<vmem>>, vector<1x8x1x128xf32>
    tpu.vector_store %arg11[%c0_40, %c1_41, %c0_42, %c0_43], %27 {strides = array<i32>} : memref<1x10x10x128xf32, #tpu.memory_space<vmem>>, vector<1x8x1x128xf32>,
    %cst_44 = arith.constant 0.000000e+00 : f32
    %29 = vector.broadcast %cst_44 : f32 to vector<1x8x1x128xf32>
    %c0_45 = arith.constant 0 : index
    %c1_46 = arith.constant 1 : index
    %c9_47 = arith.constant 9 : index
    %c0_48 = arith.constant 0 : index
    %30 = vector.load %arg11[%c0_45, %c1_46, %c9_47, %c0_48] : memref<1x10x10x128xf32, #tpu.memory_space<vmem>>, vector<1x8x1x128xf32>
    tpu.vector_store %arg11[%c0_45, %c1_46, %c9_47, %c0_48], %29 {strides = array<i32>} : memref<1x10x10x128xf32, #tpu.memory_space<vmem>>, vector<1x8x1x128xf32>,
    %31 = vector.extract_strided_slice %10 {offsets = [0, 1, 0, 0], sizes = [1, 1, 64, 128], strides = [1, 1, 1, 1]} : vector<1x4x64x128xf32> to vector<1x1x64x128xf32>
    %32 = vector.shape_cast %31 : vector<1x1x64x128xf32> to vector<1x64x128xf32>
    %33 = vector.shape_cast %32 : vector<1x64x128xf32> to vector<1x8x8x128xf32>
    %c0_49 = arith.constant 0 : index
    %c1_50 = arith.constant 1 : index
    %c1_51 = arith.constant 1 : index
    %c0_52 = arith.constant 0 : index
    %34 = vector.load %arg11[%c0_49, %c1_50, %c1_51, %c0_52] : memref<1x10x10x128xf32, #tpu.memory_space<vmem>>, vector<1x8x8x128xf32>
    tpu.vector_store %arg11[%c0_49, %c1_50, %c1_51, %c0_52], %33 {strides = array<i32>} : memref<1x10x10x128xf32, #tpu.memory_space<vmem>>, vector<1x8x8x128xf32>,
    %cst_53 = arith.constant 0.000000e+00 : f32
    %35 = vector.broadcast %cst_53 : f32 to vector<1x1x10x128xf32>
    %c0_54 = arith.constant 0 : index
    %c0_55 = arith.constant 0 : index
    %c0_56 = arith.constant 0 : index
    %c0_57 = arith.constant 0 : index
    %36 = vector.load %arg12[%c0_54, %c0_55, %c0_56, %c0_57] : memref<1x10x10x128xf32, #tpu.memory_space<vmem>>, vector<1x1x10x128xf32>
    tpu.vector_store %arg12[%c0_54, %c0_55, %c0_56, %c0_57], %35 {strides = array<i32>} : memref<1x10x10x128xf32, #tpu.memory_space<vmem>>, vector<1x1x10x128xf32>,
    %cst_58 = arith.constant 0.000000e+00 : f32
    %37 = vector.broadcast %cst_58 : f32 to vector<1x1x10x128xf32>
    %c0_59 = arith.constant 0 : index
    %c9_60 = arith.constant 9 : index
    %c0_61 = arith.constant 0 : index
    %c0_62 = arith.constant 0 : index
    %38 = vector.load %arg12[%c0_59, %c9_60, %c0_61, %c0_62] : memref<1x10x10x128xf32, #tpu.memory_space<vmem>>, vector<1x1x10x128xf32>
    tpu.vector_store %arg12[%c0_59, %c9_60, %c0_61, %c0_62], %37 {strides = array<i32>} : memref<1x10x10x128xf32, #tpu.memory_space<vmem>>, vector<1x1x10x128xf32>,
    %cst_63 = arith.constant 0.000000e+00 : f32
    %39 = vector.broadcast %cst_63 : f32 to vector<1x8x1x128xf32>
    %c0_64 = arith.constant 0 : index
    %c1_65 = arith.constant 1 : index
    %c0_66 = arith.constant 0 : index
    %c0_67 = arith.constant 0 : index
    %40 = vector.load %arg12[%c0_64, %c1_65, %c0_66, %c0_67] : memref<1x10x10x128xf32, #tpu.memory_space<vmem>>, vector<1x8x1x128xf32>
    tpu.vector_store %arg12[%c0_64, %c1_65, %c0_66, %c0_67], %39 {strides = array<i32>} : memref<1x10x10x128xf32, #tpu.memory_space<vmem>>, vector<1x8x1x128xf32>,
    %cst_68 = arith.constant 0.000000e+00 : f32
    %41 = vector.broadcast %cst_68 : f32 to vector<1x8x1x128xf32>
    %c0_69 = arith.constant 0 : index
    %c1_70 = arith.constant 1 : index
    %c9_71 = arith.constant 9 : index
    %c0_72 = arith.constant 0 : index
    %42 = vector.load %arg12[%c0_69, %c1_70, %c9_71, %c0_72] : memref<1x10x10x128xf32, #tpu.memory_space<vmem>>, vector<1x8x1x128xf32>
    tpu.vector_store %arg12[%c0_69, %c1_70, %c9_71, %c0_72], %41 {strides = array<i32>} : memref<1x10x10x128xf32, #tpu.memory_space<vmem>>, vector<1x8x1x128xf32>,
    %43 = vector.extract_strided_slice %10 {offsets = [0, 2, 0, 0], sizes = [1, 1, 64, 128], strides = [1, 1, 1, 1]} : vector<1x4x64x128xf32> to vector<1x1x64x128xf32>
    %44 = vector.shape_cast %43 : vector<1x1x64x128xf32> to vector<1x64x128xf32>
    %45 = vector.shape_cast %44 : vector<1x64x128xf32> to vector<1x8x8x128xf32>
    %c0_73 = arith.constant 0 : index
    %c1_74 = arith.constant 1 : index
    %c1_75 = arith.constant 1 : index
    %c0_76 = arith.constant 0 : index
    %46 = vector.load %arg12[%c0_73, %c1_74, %c1_75, %c0_76] : memref<1x10x10x128xf32, #tpu.memory_space<vmem>>, vector<1x8x8x128xf32>
    tpu.vector_store %arg12[%c0_73, %c1_74, %c1_75, %c0_76], %45 {strides = array<i32>} : memref<1x10x10x128xf32, #tpu.memory_space<vmem>>, vector<1x8x8x128xf32>,
    %cst_77 = arith.constant 0.000000e+00 : f32
    %47 = vector.broadcast %cst_77 : f32 to vector<1x1x10x128xf32>
    %c0_78 = arith.constant 0 : index
    %c0_79 = arith.constant 0 : index
    %c0_80 = arith.constant 0 : index
    %c0_81 = arith.constant 0 : index
    %48 = vector.load %arg13[%c0_78, %c0_79, %c0_80, %c0_81] : memref<1x10x10x128xf32, #tpu.memory_space<vmem>>, vector<1x1x10x128xf32>
    tpu.vector_store %arg13[%c0_78, %c0_79, %c0_80, %c0_81], %47 {strides = array<i32>} : memref<1x10x10x128xf32, #tpu.memory_space<vmem>>, vector<1x1x10x128xf32>,
    %cst_82 = arith.constant 0.000000e+00 : f32
    %49 = vector.broadcast %cst_82 : f32 to vector<1x1x10x128xf32>
    %c0_83 = arith.constant 0 : index
    %c9_84 = arith.constant 9 : index
    %c0_85 = arith.constant 0 : index
    %c0_86 = arith.constant 0 : index
    %50 = vector.load %arg13[%c0_83, %c9_84, %c0_85, %c0_86] : memref<1x10x10x128xf32, #tpu.memory_space<vmem>>, vector<1x1x10x128xf32>
    tpu.vector_store %arg13[%c0_83, %c9_84, %c0_85, %c0_86], %49 {strides = array<i32>} : memref<1x10x10x128xf32, #tpu.memory_space<vmem>>, vector<1x1x10x128xf32>,
    %cst_87 = arith.constant 0.000000e+00 : f32
    %51 = vector.broadcast %cst_87 : f32 to vector<1x8x1x128xf32>
    %c0_88 = arith.constant 0 : index
    %c1_89 = arith.constant 1 : index
    %c0_90 = arith.constant 0 : index
    %c0_91 = arith.constant 0 : index
    %52 = vector.load %arg13[%c0_88, %c1_89, %c0_90, %c0_91] : memref<1x10x10x128xf32, #tpu.memory_space<vmem>>, vector<1x8x1x128xf32>
    tpu.vector_store %arg13[%c0_88, %c1_89, %c0_90, %c0_91], %51 {strides = array<i32>} : memref<1x10x10x128xf32, #tpu.memory_space<vmem>>, vector<1x8x1x128xf32>,
    %cst_92 = arith.constant 0.000000e+00 : f32
    %53 = vector.broadcast %cst_92 : f32 to vector<1x8x1x128xf32>
    %c0_93 = arith.constant 0 : index
    %c1_94 = arith.constant 1 : index
    %c9_95 = arith.constant 9 : index
    %c0_96 = arith.constant 0 : index
    %54 = vector.load %arg13[%c0_93, %c1_94, %c9_95, %c0_96] : memref<1x10x10x128xf32, #tpu.memory_space<vmem>>, vector<1x8x1x128xf32>
    tpu.vector_store %arg13[%c0_93, %c1_94, %c9_95, %c0_96], %53 {strides = array<i32>} : memref<1x10x10x128xf32, #tpu.memory_space<vmem>>, vector<1x8x1x128xf32>,
    %55 = vector.extract_strided_slice %10 {offsets = [0, 3, 0, 0], sizes = [1, 1, 64, 128], strides = [1, 1, 1, 1]} : vector<1x4x64x128xf32> to vector<1x1x64x128xf32>
    %56 = vector.shape_cast %55 : vector<1x1x64x128xf32> to vector<1x64x128xf32>
    %57 = vector.shape_cast %56 : vector<1x64x128xf32> to vector<1x8x8x128xf32>
    %c0_97 = arith.constant 0 : index
    %c1_98 = arith.constant 1 : index
    %c1_99 = arith.constant 1 : index
    %c0_100 = arith.constant 0 : index
    %58 = vector.load %arg13[%c0_97, %c1_98, %c1_99, %c0_100] : memref<1x10x10x128xf32, #tpu.memory_space<vmem>>, vector<1x8x8x128xf32>
    tpu.vector_store %arg13[%c0_97, %c1_98, %c1_99, %c0_100], %57 {strides = array<i32>} : memref<1x10x10x128xf32, #tpu.memory_space<vmem>>, vector<1x8x8x128xf32>,
    %c0_101 = arith.constant 0 : index
    %c0_102 = arith.constant 0 : index
    %59 = vector.load %arg4[%c0_101, %c0_102] : memref<25x128xf32, #tpu.memory_space<vmem>>, vector<25x128xf32>
    %c0_103 = arith.constant 0 : index
    %c0_104 = arith.constant 0 : index
    %60 = vector.load %arg5[%c0_103, %c0_104] : memref<1x128xf32, #tpu.memory_space<vmem>>, vector<1x128xf32>
    %c0_105 = arith.constant 0 : index
    %c0_106 = arith.constant 0 : index
    %c0_107 = arith.constant 0 : index
    %c0_108 = arith.constant 0 : index
    %61 = vector.load %arg10[%c0_105, %c0_106, %c0_107, %c0_108] : memref<1x10x10x128xf32, #tpu.memory_space<vmem>>, vector<1x8x8x128xf32>
    %62 = vector.extract_strided_slice %59 {offsets = [0, 0], sizes = [1, 128], strides = [1, 1]} : vector<25x128xf32> to vector<1x128xf32>
    %63 = vector.shape_cast %62 : vector<1x128xf32> to vector<128xf32>
    %64 = vector.shape_cast %63 : vector<128xf32> to vector<1x1x1x128xf32>
    %65 = vector.broadcast %64 : vector<1x1x1x128xf32> to vector<1x8x8x128xf32>
    %66 = arith.mulf %61, %65 : vector<1x8x8x128xf32>
    %c0_109 = arith.constant 0 : index
    %c0_110 = arith.constant 0 : index
    %c0_111 = arith.constant 0 : index
    %c0_112 = arith.constant 0 : index
    %67 = vector.load %arg11[%c0_109, %c0_110, %c0_111, %c0_112] : memref<1x10x10x128xf32, #tpu.memory_space<vmem>>, vector<1x8x8x128xf32>
    %68 = vector.extract_strided_slice %59 {offsets = [1, 0], sizes = [1, 128], strides = [1, 1]} : vector<25x128xf32> to vector<1x128xf32>
    %69 = vector.shape_cast %68 : vector<1x128xf32> to vector<128xf32>
    %70 = vector.shape_cast %69 : vector<128xf32> to vector<1x1x1x128xf32>
    %71 = vector.broadcast %70 : vector<1x1x1x128xf32> to vector<1x8x8x128xf32>
    %72 = arith.mulf %67, %71 : vector<1x8x8x128xf32>
    %73 = arith.addf %66, %72 : vector<1x8x8x128xf32>
    %c0_113 = arith.constant 0 : index
    %c0_114 = arith.constant 0 : index
    %c1_115 = arith.constant 1 : index
    %c0_116 = arith.constant 0 : index
    %74 = vector.load %arg10[%c0_113, %c0_114, %c1_115, %c0_116] : memref<1x10x10x128xf32, #tpu.memory_space<vmem>>, vector<1x8x8x128xf32>
    %75 = vector.extract_strided_slice %59 {offsets = [2, 0], sizes = [1, 128], strides = [1, 1]} : vector<25x128xf32> to vector<1x128xf32>
    %76 = vector.shape_cast %75 : vector<1x128xf32> to vector<128xf32>
    %77 = vector.shape_cast %76 : vector<128xf32> to vector<1x1x1x128xf32>
    %78 = vector.broadcast %77 : vector<1x1x1x128xf32> to vector<1x8x8x128xf32>
    %79 = arith.mulf %74, %78 : vector<1x8x8x128xf32>
    %80 = arith.addf %73, %79 : vector<1x8x8x128xf32>
    %c0_117 = arith.constant 0 : index
    %c0_118 = arith.constant 0 : index
    %c1_119 = arith.constant 1 : index
    %c0_120 = arith.constant 0 : index
    %81 = vector.load %arg11[%c0_117, %c0_118, %c1_119, %c0_120] : memref<1x10x10x128xf32, #tpu.memory_space<vmem>>, vector<1x8x8x128xf32>
    %82 = vector.extract_strided_slice %59 {offsets = [3, 0], sizes = [1, 128], strides = [1, 1]} : vector<25x128xf32> to vector<1x128xf32>
    %83 = vector.shape_cast %82 : vector<1x128xf32> to vector<128xf32>
    %84 = vector.shape_cast %83 : vector<128xf32> to vector<1x1x1x128xf32>
    %85 = vector.broadcast %84 : vector<1x1x1x128xf32> to vector<1x8x8x128xf32>
    %86 = arith.mulf %81, %85 : vector<1x8x8x128xf32>
    %87 = arith.addf %80, %86 : vector<1x8x8x128xf32>
    %c0_121 = arith.constant 0 : index
    %c0_122 = arith.constant 0 : index
    %c2 = arith.constant 2 : index
    %c0_123 = arith.constant 0 : index
    %88 = vector.load %arg10[%c0_121, %c0_122, %c2, %c0_123] : memref<1x10x10x128xf32, #tpu.memory_space<vmem>>, vector<1x8x8x128xf32>
    %89 = vector.extract_strided_slice %59 {offsets = [4, 0], sizes = [1, 128], strides = [1, 1]} : vector<25x128xf32> to vector<1x128xf32>
    %90 = vector.shape_cast %89 : vector<1x128xf32> to vector<128xf32>
    %91 = vector.shape_cast %90 : vector<128xf32> to vector<1x1x1x128xf32>
    %92 = vector.broadcast %91 : vector<1x1x1x128xf32> to vector<1x8x8x128xf32>
    %93 = arith.mulf %88, %92 : vector<1x8x8x128xf32>
    %94 = arith.addf %87, %93 : vector<1x8x8x128xf32>
    %c0_124 = arith.constant 0 : index
    %c0_125 = arith.constant 0 : index
    %c0_126 = arith.constant 0 : index
    %c0_127 = arith.constant 0 : index
    %95 = vector.load %arg12[%c0_124, %c0_125, %c0_126, %c0_127] : memref<1x10x10x128xf32, #tpu.memory_space<vmem>>, vector<1x8x8x128xf32>
    %96 = vector.extract_strided_slice %59 {offsets = [5, 0], sizes = [1, 128], strides = [1, 1]} : vector<25x128xf32> to vector<1x128xf32>
    %97 = vector.shape_cast %96 : vector<1x128xf32> to vector<128xf32>
    %98 = vector.shape_cast %97 : vector<128xf32> to vector<1x1x1x128xf32>
    %99 = vector.broadcast %98 : vector<1x1x1x128xf32> to vector<1x8x8x128xf32>
    %100 = arith.mulf %95, %99 : vector<1x8x8x128xf32>
    %101 = arith.addf %94, %100 : vector<1x8x8x128xf32>
    %c0_128 = arith.constant 0 : index
    %c0_129 = arith.constant 0 : index
    %c0_130 = arith.constant 0 : index
    %c0_131 = arith.constant 0 : index
    %102 = vector.load %arg13[%c0_128, %c0_129, %c0_130, %c0_131] : memref<1x10x10x128xf32, #tpu.memory_space<vmem>>, vector<1x8x8x128xf32>
    %103 = vector.extract_strided_slice %59 {offsets = [6, 0], sizes = [1, 128], strides = [1, 1]} : vector<25x128xf32> to vector<1x128xf32>
    %104 = vector.shape_cast %103 : vector<1x128xf32> to vector<128xf32>
    %105 = vector.shape_cast %104 : vector<128xf32> to vector<1x1x1x128xf32>
    %106 = vector.broadcast %105 : vector<1x1x1x128xf32> to vector<1x8x8x128xf32>
    %107 = arith.mulf %102, %106 : vector<1x8x8x128xf32>
    %108 = arith.addf %101, %107 : vector<1x8x8x128xf32>
    %c0_132 = arith.constant 0 : index
    %c0_133 = arith.constant 0 : index
    %c1_134 = arith.constant 1 : index
    %c0_135 = arith.constant 0 : index
    %109 = vector.load %arg12[%c0_132, %c0_133, %c1_134, %c0_135] : memref<1x10x10x128xf32, #tpu.memory_space<vmem>>, vector<1x8x8x128xf32>
    %110 = vector.extract_strided_slice %59 {offsets = [7, 0], sizes = [1, 128], strides = [1, 1]} : vector<25x128xf32> to vector<1x128xf32>
    %111 = vector.shape_cast %110 : vector<1x128xf32> to vector<128xf32>
    %112 = vector.shape_cast %111 : vector<128xf32> to vector<1x1x1x128xf32>
    %113 = vector.broadcast %112 : vector<1x1x1x128xf32> to vector<1x8x8x128xf32>
    %114 = arith.mulf %109, %113 : vector<1x8x8x128xf32>
    %115 = arith.addf %108, %114 : vector<1x8x8x128xf32>
    %c0_136 = arith.constant 0 : index
    %c0_137 = arith.constant 0 : index
    %c1_138 = arith.constant 1 : index
    %c0_139 = arith.constant 0 : index
    %116 = vector.load %arg13[%c0_136, %c0_137, %c1_138, %c0_139] : memref<1x10x10x128xf32, #tpu.memory_space<vmem>>, vector<1x8x8x128xf32>
    %117 = vector.extract_strided_slice %59 {offsets = [8, 0], sizes = [1, 128], strides = [1, 1]} : vector<25x128xf32> to vector<1x128xf32>
    %118 = vector.shape_cast %117 : vector<1x128xf32> to vector<128xf32>
    %119 = vector.shape_cast %118 : vector<128xf32> to vector<1x1x1x128xf32>
    %120 = vector.broadcast %119 : vector<1x1x1x128xf32> to vector<1x8x8x128xf32>
    %121 = arith.mulf %116, %120 : vector<1x8x8x128xf32>
    %122 = arith.addf %115, %121 : vector<1x8x8x128xf32>
    %c0_140 = arith.constant 0 : index
    %c0_141 = arith.constant 0 : index
    %c2_142 = arith.constant 2 : index
    %c0_143 = arith.constant 0 : index
    %123 = vector.load %arg12[%c0_140, %c0_141, %c2_142, %c0_143] : memref<1x10x10x128xf32, #tpu.memory_space<vmem>>, vector<1x8x8x128xf32>
    %124 = vector.extract_strided_slice %59 {offsets = [9, 0], sizes = [1, 128], strides = [1, 1]} : vector<25x128xf32> to vector<1x128xf32>
    %125 = vector.shape_cast %124 : vector<1x128xf32> to vector<128xf32>
    %126 = vector.shape_cast %125 : vector<128xf32> to vector<1x1x1x128xf32>
    %127 = vector.broadcast %126 : vector<1x1x1x128xf32> to vector<1x8x8x128xf32>
    %128 = arith.mulf %123, %127 : vector<1x8x8x128xf32>
    %129 = arith.addf %122, %128 : vector<1x8x8x128xf32>
    %c0_144 = arith.constant 0 : index
    %c1_145 = arith.constant 1 : index
    %c0_146 = arith.constant 0 : index
    %c0_147 = arith.constant 0 : index
    %130 = vector.load %arg10[%c0_144, %c1_145, %c0_146, %c0_147] : memref<1x10x10x128xf32, #tpu.memory_space<vmem>>, vector<1x8x8x128xf32>
    %131 = vector.extract_strided_slice %59 {offsets = [10, 0], sizes = [1, 128], strides = [1, 1]} : vector<25x128xf32> to vector<1x128xf32>
    %132 = vector.shape_cast %131 : vector<1x128xf32> to vector<128xf32>
    %133 = vector.shape_cast %132 : vector<128xf32> to vector<1x1x1x128xf32>
    %134 = vector.broadcast %133 : vector<1x1x1x128xf32> to vector<1x8x8x128xf32>
    %135 = arith.mulf %130, %134 : vector<1x8x8x128xf32>
    %136 = arith.addf %129, %135 : vector<1x8x8x128xf32>
    %c0_148 = arith.constant 0 : index
    %c1_149 = arith.constant 1 : index
    %c0_150 = arith.constant 0 : index
    %c0_151 = arith.constant 0 : index
    %137 = vector.load %arg11[%c0_148, %c1_149, %c0_150, %c0_151] : memref<1x10x10x128xf32, #tpu.memory_space<vmem>>, vector<1x8x8x128xf32>
    %138 = vector.extract_strided_slice %59 {offsets = [11, 0], sizes = [1, 128], strides = [1, 1]} : vector<25x128xf32> to vector<1x128xf32>
    %139 = vector.shape_cast %138 : vector<1x128xf32> to vector<128xf32>
    %140 = vector.shape_cast %139 : vector<128xf32> to vector<1x1x1x128xf32>
    %141 = vector.broadcast %140 : vector<1x1x1x128xf32> to vector<1x8x8x128xf32>
    %142 = arith.mulf %137, %141 : vector<1x8x8x128xf32>
    %143 = arith.addf %136, %142 : vector<1x8x8x128xf32>
    %c0_152 = arith.constant 0 : index
    %c1_153 = arith.constant 1 : index
    %c1_154 = arith.constant 1 : index
    %c0_155 = arith.constant 0 : index
    %144 = vector.load %arg10[%c0_152, %c1_153, %c1_154, %c0_155] : memref<1x10x10x128xf32, #tpu.memory_space<vmem>>, vector<1x8x8x128xf32>
    %145 = vector.extract_strided_slice %59 {offsets = [12, 0], sizes = [1, 128], strides = [1, 1]} : vector<25x128xf32> to vector<1x128xf32>
    %146 = vector.shape_cast %145 : vector<1x128xf32> to vector<128xf32>
    %147 = vector.shape_cast %146 : vector<128xf32> to vector<1x1x1x128xf32>
    %148 = vector.broadcast %147 : vector<1x1x1x128xf32> to vector<1x8x8x128xf32>
    %149 = arith.mulf %144, %148 : vector<1x8x8x128xf32>
    %150 = arith.addf %143, %149 : vector<1x8x8x128xf32>
    %c0_156 = arith.constant 0 : index
    %c1_157 = arith.constant 1 : index
    %c1_158 = arith.constant 1 : index
    %c0_159 = arith.constant 0 : index
    %151 = vector.load %arg11[%c0_156, %c1_157, %c1_158, %c0_159] : memref<1x10x10x128xf32, #tpu.memory_space<vmem>>, vector<1x8x8x128xf32>
    %152 = vector.extract_strided_slice %59 {offsets = [13, 0], sizes = [1, 128], strides = [1, 1]} : vector<25x128xf32> to vector<1x128xf32>
    %153 = vector.shape_cast %152 : vector<1x128xf32> to vector<128xf32>
    %154 = vector.shape_cast %153 : vector<128xf32> to vector<1x1x1x128xf32>
    %155 = vector.broadcast %154 : vector<1x1x1x128xf32> to vector<1x8x8x128xf32>
    %156 = arith.mulf %151, %155 : vector<1x8x8x128xf32>
    %157 = arith.addf %150, %156 : vector<1x8x8x128xf32>
    %c0_160 = arith.constant 0 : index
    %c1_161 = arith.constant 1 : index
    %c2_162 = arith.constant 2 : index
    %c0_163 = arith.constant 0 : index
    %158 = vector.load %arg10[%c0_160, %c1_161, %c2_162, %c0_163] : memref<1x10x10x128xf32, #tpu.memory_space<vmem>>, vector<1x8x8x128xf32>
    %159 = vector.extract_strided_slice %59 {offsets = [14, 0], sizes = [1, 128], strides = [1, 1]} : vector<25x128xf32> to vector<1x128xf32>
    %160 = vector.shape_cast %159 : vector<1x128xf32> to vector<128xf32>
    %161 = vector.shape_cast %160 : vector<128xf32> to vector<1x1x1x128xf32>
    %162 = vector.broadcast %161 : vector<1x1x1x128xf32> to vector<1x8x8x128xf32>
    %163 = arith.mulf %158, %162 : vector<1x8x8x128xf32>
    %164 = arith.addf %157, %163 : vector<1x8x8x128xf32>
    %c0_164 = arith.constant 0 : index
    %c1_165 = arith.constant 1 : index
    %c0_166 = arith.constant 0 : index
    %c0_167 = arith.constant 0 : index
    %165 = vector.load %arg12[%c0_164, %c1_165, %c0_166, %c0_167] : memref<1x10x10x128xf32, #tpu.memory_space<vmem>>, vector<1x8x8x128xf32>
    %166 = vector.extract_strided_slice %59 {offsets = [15, 0], sizes = [1, 128], strides = [1, 1]} : vector<25x128xf32> to vector<1x128xf32>
    %167 = vector.shape_cast %166 : vector<1x128xf32> to vector<128xf32>
    %168 = vector.shape_cast %167 : vector<128xf32> to vector<1x1x1x128xf32>
    %169 = vector.broadcast %168 : vector<1x1x1x128xf32> to vector<1x8x8x128xf32>
    %170 = arith.mulf %165, %169 : vector<1x8x8x128xf32>
    %171 = arith.addf %164, %170 : vector<1x8x8x128xf32>
    %c0_168 = arith.constant 0 : index
    %c1_169 = arith.constant 1 : index
    %c0_170 = arith.constant 0 : index
    %c0_171 = arith.constant 0 : index
    %172 = vector.load %arg13[%c0_168, %c1_169, %c0_170, %c0_171] : memref<1x10x10x128xf32, #tpu.memory_space<vmem>>, vector<1x8x8x128xf32>
    %173 = vector.extract_strided_slice %59 {offsets = [16, 0], sizes = [1, 128], strides = [1, 1]} : vector<25x128xf32> to vector<1x128xf32>
    %174 = vector.shape_cast %173 : vector<1x128xf32> to vector<128xf32>
    %175 = vector.shape_cast %174 : vector<128xf32> to vector<1x1x1x128xf32>
    %176 = vector.broadcast %175 : vector<1x1x1x128xf32> to vector<1x8x8x128xf32>
    %177 = arith.mulf %172, %176 : vector<1x8x8x128xf32>
    %178 = arith.addf %171, %177 : vector<1x8x8x128xf32>
    %c0_172 = arith.constant 0 : index
    %c1_173 = arith.constant 1 : index
    %c1_174 = arith.constant 1 : index
    %c0_175 = arith.constant 0 : index
    %179 = vector.load %arg12[%c0_172, %c1_173, %c1_174, %c0_175] : memref<1x10x10x128xf32, #tpu.memory_space<vmem>>, vector<1x8x8x128xf32>
    %180 = vector.extract_strided_slice %59 {offsets = [17, 0], sizes = [1, 128], strides = [1, 1]} : vector<25x128xf32> to vector<1x128xf32>
    %181 = vector.shape_cast %180 : vector<1x128xf32> to vector<128xf32>
    %182 = vector.shape_cast %181 : vector<128xf32> to vector<1x1x1x128xf32>
    %183 = vector.broadcast %182 : vector<1x1x1x128xf32> to vector<1x8x8x128xf32>
    %184 = arith.mulf %179, %183 : vector<1x8x8x128xf32>
    %185 = arith.addf %178, %184 : vector<1x8x8x128xf32>
    %c0_176 = arith.constant 0 : index
    %c1_177 = arith.constant 1 : index
    %c1_178 = arith.constant 1 : index
    %c0_179 = arith.constant 0 : index
    %186 = vector.load %arg13[%c0_176, %c1_177, %c1_178, %c0_179] : memref<1x10x10x128xf32, #tpu.memory_space<vmem>>, vector<1x8x8x128xf32>
    %187 = vector.extract_strided_slice %59 {offsets = [18, 0], sizes = [1, 128], strides = [1, 1]} : vector<25x128xf32> to vector<1x128xf32>
    %188 = vector.shape_cast %187 : vector<1x128xf32> to vector<128xf32>
    %189 = vector.shape_cast %188 : vector<128xf32> to vector<1x1x1x128xf32>
    %190 = vector.broadcast %189 : vector<1x1x1x128xf32> to vector<1x8x8x128xf32>
    %191 = arith.mulf %186, %190 : vector<1x8x8x128xf32>
    %192 = arith.addf %185, %191 : vector<1x8x8x128xf32>
    %c0_180 = arith.constant 0 : index
    %c1_181 = arith.constant 1 : index
    %c2_182 = arith.constant 2 : index
    %c0_183 = arith.constant 0 : index
    %193 = vector.load %arg12[%c0_180, %c1_181, %c2_182, %c0_183] : memref<1x10x10x128xf32, #tpu.memory_space<vmem>>, vector<1x8x8x128xf32>
    %194 = vector.extract_strided_slice %59 {offsets = [19, 0], sizes = [1, 128], strides = [1, 1]} : vector<25x128xf32> to vector<1x128xf32>
    %195 = vector.shape_cast %194 : vector<1x128xf32> to vector<128xf32>
    %196 = vector.shape_cast %195 : vector<128xf32> to vector<1x1x1x128xf32>
    %197 = vector.broadcast %196 : vector<1x1x1x128xf32> to vector<1x8x8x128xf32>
    %198 = arith.mulf %193, %197 : vector<1x8x8x128xf32>
    %199 = arith.addf %192, %198 : vector<1x8x8x128xf32>
    %c0_184 = arith.constant 0 : index
    %c2_185 = arith.constant 2 : index
    %c0_186 = arith.constant 0 : index
    %c0_187 = arith.constant 0 : index
    %200 = vector.load %arg10[%c0_184, %c2_185, %c0_186, %c0_187] : memref<1x10x10x128xf32, #tpu.memory_space<vmem>>, vector<1x8x8x128xf32>
    %201 = vector.extract_strided_slice %59 {offsets = [20, 0], sizes = [1, 128], strides = [1, 1]} : vector<25x128xf32> to vector<1x128xf32>
    %202 = vector.shape_cast %201 : vector<1x128xf32> to vector<128xf32>
    %203 = vector.shape_cast %202 : vector<128xf32> to vector<1x1x1x128xf32>
    %204 = vector.broadcast %203 : vector<1x1x1x128xf32> to vector<1x8x8x128xf32>
    %205 = arith.mulf %200, %204 : vector<1x8x8x128xf32>
    %206 = arith.addf %199, %205 : vector<1x8x8x128xf32>
    %c0_188 = arith.constant 0 : index
    %c2_189 = arith.constant 2 : index
    %c0_190 = arith.constant 0 : index
    %c0_191 = arith.constant 0 : index
    %207 = vector.load %arg11[%c0_188, %c2_189, %c0_190, %c0_191] : memref<1x10x10x128xf32, #tpu.memory_space<vmem>>, vector<1x8x8x128xf32>
    %208 = vector.extract_strided_slice %59 {offsets = [21, 0], sizes = [1, 128], strides = [1, 1]} : vector<25x128xf32> to vector<1x128xf32>
    %209 = vector.shape_cast %208 : vector<1x128xf32> to vector<128xf32>
    %210 = vector.shape_cast %209 : vector<128xf32> to vector<1x1x1x128xf32>
    %211 = vector.broadcast %210 : vector<1x1x1x128xf32> to vector<1x8x8x128xf32>
    %212 = arith.mulf %207, %211 : vector<1x8x8x128xf32>
    %213 = arith.addf %206, %212 : vector<1x8x8x128xf32>
    %c0_192 = arith.constant 0 : index
    %c2_193 = arith.constant 2 : index
    %c1_194 = arith.constant 1 : index
    %c0_195 = arith.constant 0 : index
    %214 = vector.load %arg10[%c0_192, %c2_193, %c1_194, %c0_195] : memref<1x10x10x128xf32, #tpu.memory_space<vmem>>, vector<1x8x8x128xf32>
    %215 = vector.extract_strided_slice %59 {offsets = [22, 0], sizes = [1, 128], strides = [1, 1]} : vector<25x128xf32> to vector<1x128xf32>
    %216 = vector.shape_cast %215 : vector<1x128xf32> to vector<128xf32>
    %217 = vector.shape_cast %216 : vector<128xf32> to vector<1x1x1x128xf32>
    %218 = vector.broadcast %217 : vector<1x1x1x128xf32> to vector<1x8x8x128xf32>
    %219 = arith.mulf %214, %218 : vector<1x8x8x128xf32>
    %220 = arith.addf %213, %219 : vector<1x8x8x128xf32>
    %c0_196 = arith.constant 0 : index
    %c2_197 = arith.constant 2 : index
    %c1_198 = arith.constant 1 : index
    %c0_199 = arith.constant 0 : index
    %221 = vector.load %arg11[%c0_196, %c2_197, %c1_198, %c0_199] : memref<1x10x10x128xf32, #tpu.memory_space<vmem>>, vector<1x8x8x128xf32>
    %222 = vector.extract_strided_slice %59 {offsets = [23, 0], sizes = [1, 128], strides = [1, 1]} : vector<25x128xf32> to vector<1x128xf32>
    %223 = vector.shape_cast %222 : vector<1x128xf32> to vector<128xf32>
    %224 = vector.shape_cast %223 : vector<128xf32> to vector<1x1x1x128xf32>
    %225 = vector.broadcast %224 : vector<1x1x1x128xf32> to vector<1x8x8x128xf32>
    %226 = arith.mulf %221, %225 : vector<1x8x8x128xf32>
    %227 = arith.addf %220, %226 : vector<1x8x8x128xf32>
    %c0_200 = arith.constant 0 : index
    %c2_201 = arith.constant 2 : index
    %c2_202 = arith.constant 2 : index
    %c0_203 = arith.constant 0 : index
    %228 = vector.load %arg10[%c0_200, %c2_201, %c2_202, %c0_203] : memref<1x10x10x128xf32, #tpu.memory_space<vmem>>, vector<1x8x8x128xf32>
    %229 = vector.extract_strided_slice %59 {offsets = [24, 0], sizes = [1, 128], strides = [1, 1]} : vector<25x128xf32> to vector<1x128xf32>
    %230 = vector.shape_cast %229 : vector<1x128xf32> to vector<128xf32>
    %231 = vector.shape_cast %230 : vector<128xf32> to vector<1x1x1x128xf32>
    %232 = vector.broadcast %231 : vector<1x1x1x128xf32> to vector<1x8x8x128xf32>
    %233 = arith.mulf %228, %232 : vector<1x8x8x128xf32>
    %234 = arith.addf %227, %233 : vector<1x8x8x128xf32>
    %235 = vector.shape_cast %60 : vector<1x128xf32> to vector<128xf32>
    %236 = vector.shape_cast %235 : vector<128xf32> to vector<1x1x1x128xf32>
    %237 = vector.broadcast %236 : vector<1x1x1x128xf32> to vector<1x8x8x128xf32>
    %238 = arith.addf %234, %237 : vector<1x8x8x128xf32>
    %cst_204 = arith.constant 0.000000e+00 : f32
    %239 = vector.broadcast %cst_204 : f32 to vector<1x8x8x128xf32>
    %240 = arith.maximumf %238, %239 : vector<1x8x8x128xf32>
    %241 = vector.shape_cast %240 : vector<1x8x8x128xf32> to vector<64x128xf32>
    %242 = arith.truncf %241 : vector<64x128xf32> to vector<64x128xbf16>
    %c0_205 = arith.constant 0 : index
    %c0_206 = arith.constant 0 : index
    %243 = vector.load %arg6[%c0_205, %c0_206] : memref<128x128xbf16, #tpu.memory_space<vmem>>, vector<128x128xbf16>
    %cst_207 = arith.constant dense<0.000000e+00> : vector<64x128xf32>
    %244 = tpu.matmul %242, %243, %cst_207 {dimension_numbers = #tpu.dot_dimension_numbers<[1], [0], [0], [1], [0, 0, 1, 1], [], []>} : vector<64x128xbf16>, vector<128x128xbf16>, vector<64x128xf32> -> vector<64x128xf32>
    %c0_208 = arith.constant 0 : index
    %c0_209 = arith.constant 0 : index
    %245 = vector.load %arg7[%c0_208, %c0_209] : memref<1x128xf32, #tpu.memory_space<vmem>>, vector<1x128xf32>
    %246 = vector.broadcast %245 : vector<1x128xf32> to vector<64x128xf32>
    %247 = arith.addf %244, %246 : vector<64x128xf32>
    %248 = vector.shape_cast %0 : vector<1x256x8xf32> to vector<1x4x64x8xf32>
    %249 = vector.extract_strided_slice %248 {offsets = [0, 0, 0, 0], sizes = [1, 1, 64, 8], strides = [1, 1, 1, 1]} : vector<1x4x64x8xf32> to vector<1x1x64x8xf32>
    %250 = vector.shape_cast %249 : vector<1x1x64x8xf32> to vector<1x64x8xf32>
    %251 = vector.extract_strided_slice %248 {offsets = [0, 1, 0, 0], sizes = [1, 1, 64, 8], strides = [1, 1, 1, 1]} : vector<1x4x64x8xf32> to vector<1x1x64x8xf32>
    %252 = vector.shape_cast %251 : vector<1x1x64x8xf32> to vector<1x64x8xf32>
    %253 = arith.addf %250, %252 : vector<1x64x8xf32>
    %254 = vector.extract_strided_slice %248 {offsets = [0, 2, 0, 0], sizes = [1, 1, 64, 8], strides = [1, 1, 1, 1]} : vector<1x4x64x8xf32> to vector<1x1x64x8xf32>
    %255 = vector.shape_cast %254 : vector<1x1x64x8xf32> to vector<1x64x8xf32>
    %256 = arith.addf %253, %255 : vector<1x64x8xf32>
    %257 = vector.extract_strided_slice %248 {offsets = [0, 3, 0, 0], sizes = [1, 1, 64, 8], strides = [1, 1, 1, 1]} : vector<1x4x64x8xf32> to vector<1x1x64x8xf32>
    %258 = vector.shape_cast %257 : vector<1x1x64x8xf32> to vector<1x64x8xf32>
    %259 = arith.addf %256, %258 : vector<1x64x8xf32>
    %cst_210 = arith.constant 2.500000e-01 : f32
    %260 = vector.broadcast %cst_210 : f32 to vector<1x64x8xf32>
    %261 = arith.mulf %259, %260 : vector<1x64x8xf32>
    %262 = vector.shape_cast %261 : vector<1x64x8xf32> to vector<64x8xf32>
    %263 = arith.truncf %262 : vector<64x8xf32> to vector<64x8xbf16>
    %c0_211 = arith.constant 0 : index
    %c0_212 = arith.constant 0 : index
    %264 = vector.load %arg8[%c0_211, %c0_212] : memref<8x128xbf16, #tpu.memory_space<vmem>>, vector<8x128xbf16>
    %cst_213 = arith.constant dense<0.000000e+00> : vector<64x128xf32>
    %265 = tpu.matmul %263, %264, %cst_213 {dimension_numbers = #tpu.dot_dimension_numbers<[1], [0], [0], [1], [0, 0, 1, 1], [], []>} : vector<64x8xbf16>, vector<8x128xbf16>, vector<64x128xf32> -> vector<64x128xf32>
    %266 = arith.addf %247, %265 : vector<64x128xf32>
    %267 = vector.shape_cast %266 : vector<64x128xf32> to vector<1x64x128xf32>
    %c0_214 = arith.constant 0 : index
    %c0_215 = arith.constant 0 : index
    %c0_216 = arith.constant 0 : index
    %268 = vector.load %arg9[%c0_214, %c0_215, %c0_216] : memref<1x64x128xf32, #tpu.memory_space<vmem>>, vector<1x64x128xf32>
    tpu.vector_store %arg9[%c0_214, %c0_215, %c0_216], %267 {strides = array<i32>} : memref<1x64x128xf32, #tpu.memory_space<vmem>>, vector<1x64x128xf32>,
    return
  }
  func.func @transform_0(%arg0: i32) -> (i32, i32, i32) {
    %c0_i32 = arith.constant 0 : i32
    %c0_i32_0 = arith.constant 0 : i32
    %c0_i32_1 = arith.constant 0 : i32
    return %arg0, %c0_i32, %c0_i32_0 : i32, i32, i32
  }
  func.func @transform_1(%arg0: i32) -> (i32, i32) {
    %c0_i32 = arith.constant 0 : i32
    %c0_i32_0 = arith.constant 0 : i32
    %c0_i32_1 = arith.constant 0 : i32
    return %c0_i32, %c0_i32_0 : i32, i32
  }
  func.func @transform_2(%arg0: i32) -> (i32, i32) {
    %c0_i32 = arith.constant 0 : i32
    %c0_i32_0 = arith.constant 0 : i32
    %c0_i32_1 = arith.constant 0 : i32
    return %c0_i32, %c0_i32_0 : i32, i32
  }
  func.func @transform_3(%arg0: i32) -> (i32, i32) {
    %c0_i32 = arith.constant 0 : i32
    %c0_i32_0 = arith.constant 0 : i32
    %c0_i32_1 = arith.constant 0 : i32
    return %c0_i32, %c0_i32_0 : i32, i32
  }
  func.func @transform_4(%arg0: i32) -> (i32, i32) {
    %c0_i32 = arith.constant 0 : i32
    %c0_i32_0 = arith.constant 0 : i32
    %c0_i32_1 = arith.constant 0 : i32
    return %c0_i32, %c0_i32_0 : i32, i32
  }
  func.func @transform_5(%arg0: i32) -> (i32, i32) {
    %c0_i32 = arith.constant 0 : i32
    %c0_i32_0 = arith.constant 0 : i32
    %c0_i32_1 = arith.constant 0 : i32
    return %c0_i32, %c0_i32_0 : i32, i32
  }
  func.func @transform_6(%arg0: i32) -> (i32, i32) {
    %c0_i32 = arith.constant 0 : i32
    %c0_i32_0 = arith.constant 0 : i32
    %c0_i32_1 = arith.constant 0 : i32
    return %c0_i32, %c0_i32_0 : i32, i32
  }
  func.func @transform_7(%arg0: i32) -> (i32, i32) {
    %c0_i32 = arith.constant 0 : i32
    %c0_i32_0 = arith.constant 0 : i32
    %c0_i32_1 = arith.constant 0 : i32
    return %c0_i32, %c0_i32_0 : i32, i32
  }
  func.func @transform_8(%arg0: i32) -> (i32, i32, i32) {
    %c0_i32 = arith.constant 0 : i32
    %c0_i32_0 = arith.constant 0 : i32
    %c0_i32_1 = arith.constant 0 : i32
    return %arg0, %c0_i32, %c0_i32_0 : i32, i32, i32
  }
}

module attributes {stable_mosaic.version = 11 : i64} {
  func.func @_mobile_block_kernel(%arg0: i32, %arg1: memref<1x64x16xf32, #tpu.memory_space<vmem>>, %arg2: memref<16x128xbf16, #tpu.memory_space<vmem>>, %arg3: memref<1x128xf32, #tpu.memory_space<vmem>>, %arg4: memref<25x128xf32, #tpu.memory_space<vmem>>, %arg5: memref<1x128xf32, #tpu.memory_space<vmem>>, %arg6: memref<128x128xbf16, #tpu.memory_space<vmem>>, %arg7: memref<1x128xf32, #tpu.memory_space<vmem>>, %arg8: memref<1x64x128xf32, #tpu.memory_space<vmem>>, %arg9: memref<1x12x12x128xf32, #tpu.memory_space<vmem>>) attributes {dimension_semantics = [#tpu.dimension_semantics<parallel>], iteration_bounds = array<i64: 2>, scalar_prefetch = 0 : i64, scratch_operands = 1 : i64, tpu.core_type = #tpu.core_type<tc>, window_params = [{transform_indices = @transform_0, window_bounds = array<i64: 1, 64, 16>}, {pipeline_mode = #tpu.pipeline_mode<synchronous>, transform_indices = @transform_1, window_bounds = array<i64: 16, 128>}, {pipeline_mode = #tpu.pipeline_mode<synchronous>, transform_indices = @transform_2, window_bounds = array<i64: 1, 128>}, {pipeline_mode = #tpu.pipeline_mode<synchronous>, transform_indices = @transform_3, window_bounds = array<i64: 25, 128>}, {pipeline_mode = #tpu.pipeline_mode<synchronous>, transform_indices = @transform_4, window_bounds = array<i64: 1, 128>}, {pipeline_mode = #tpu.pipeline_mode<synchronous>, transform_indices = @transform_5, window_bounds = array<i64: 128, 128>}, {pipeline_mode = #tpu.pipeline_mode<synchronous>, transform_indices = @transform_6, window_bounds = array<i64: 1, 128>}, {transform_indices = @transform_7, window_bounds = array<i64: 1, 64, 128>}]} {
    %c0 = arith.constant 0 : index
    %c0_0 = arith.constant 0 : index
    %c0_1 = arith.constant 0 : index
    %0 = vector.load %arg1[%c0, %c0_0, %c0_1] : memref<1x64x16xf32, #tpu.memory_space<vmem>>, vector<1x64x16xf32>
    %1 = vector.shape_cast %0 : vector<1x64x16xf32> to vector<64x16xf32>
    %2 = arith.truncf %1 : vector<64x16xf32> to vector<64x16xbf16>
    %c0_2 = arith.constant 0 : index
    %c0_3 = arith.constant 0 : index
    %3 = vector.load %arg2[%c0_2, %c0_3] : memref<16x128xbf16, #tpu.memory_space<vmem>>, vector<16x128xbf16>
    %cst = arith.constant dense<0.000000e+00> : vector<64x128xf32>
    %4 = tpu.matmul %2, %3, %cst {dimension_numbers = #tpu.dot_dimension_numbers<[1], [0], [0], [1], [0, 0, 1, 1], [], []>} : vector<64x16xbf16>, vector<16x128xbf16>, vector<64x128xf32> -> vector<64x128xf32>
    %c0_4 = arith.constant 0 : index
    %c0_5 = arith.constant 0 : index
    %5 = vector.load %arg3[%c0_4, %c0_5] : memref<1x128xf32, #tpu.memory_space<vmem>>, vector<1x128xf32>
    %6 = vector.broadcast %5 : vector<1x128xf32> to vector<64x128xf32>
    %7 = arith.addf %4, %6 : vector<64x128xf32>
    %cst_6 = arith.constant 0.000000e+00 : f32
    %8 = vector.broadcast %cst_6 : f32 to vector<64x128xf32>
    %9 = arith.maximumf %7, %8 : vector<64x128xf32>
    %10 = vector.shape_cast %9 : vector<64x128xf32> to vector<1x1x64x128xf32>
    %cst_7 = arith.constant 0.000000e+00 : f32
    %11 = vector.broadcast %cst_7 : f32 to vector<1x2x12x128xf32>
    %c0_8 = arith.constant 0 : index
    %c0_9 = arith.constant 0 : index
    %c0_10 = arith.constant 0 : index
    %c0_11 = arith.constant 0 : index
    %12 = vector.load %arg9[%c0_8, %c0_9, %c0_10, %c0_11] : memref<1x12x12x128xf32, #tpu.memory_space<vmem>>, vector<1x2x12x128xf32>
    tpu.vector_store %arg9[%c0_8, %c0_9, %c0_10, %c0_11], %11 {strides = array<i32>} : memref<1x12x12x128xf32, #tpu.memory_space<vmem>>, vector<1x2x12x128xf32>,
    %cst_12 = arith.constant 0.000000e+00 : f32
    %13 = vector.broadcast %cst_12 : f32 to vector<1x2x12x128xf32>
    %c0_13 = arith.constant 0 : index
    %c10 = arith.constant 10 : index
    %c0_14 = arith.constant 0 : index
    %c0_15 = arith.constant 0 : index
    %14 = vector.load %arg9[%c0_13, %c10, %c0_14, %c0_15] : memref<1x12x12x128xf32, #tpu.memory_space<vmem>>, vector<1x2x12x128xf32>
    tpu.vector_store %arg9[%c0_13, %c10, %c0_14, %c0_15], %13 {strides = array<i32>} : memref<1x12x12x128xf32, #tpu.memory_space<vmem>>, vector<1x2x12x128xf32>,
    %cst_16 = arith.constant 0.000000e+00 : f32
    %15 = vector.broadcast %cst_16 : f32 to vector<1x8x2x128xf32>
    %c0_17 = arith.constant 0 : index
    %c2 = arith.constant 2 : index
    %c0_18 = arith.constant 0 : index
    %c0_19 = arith.constant 0 : index
    %16 = vector.load %arg9[%c0_17, %c2, %c0_18, %c0_19] : memref<1x12x12x128xf32, #tpu.memory_space<vmem>>, vector<1x8x2x128xf32>
    tpu.vector_store %arg9[%c0_17, %c2, %c0_18, %c0_19], %15 {strides = array<i32>} : memref<1x12x12x128xf32, #tpu.memory_space<vmem>>, vector<1x8x2x128xf32>,
    %cst_20 = arith.constant 0.000000e+00 : f32
    %17 = vector.broadcast %cst_20 : f32 to vector<1x8x2x128xf32>
    %c0_21 = arith.constant 0 : index
    %c2_22 = arith.constant 2 : index
    %c10_23 = arith.constant 10 : index
    %c0_24 = arith.constant 0 : index
    %18 = vector.load %arg9[%c0_21, %c2_22, %c10_23, %c0_24] : memref<1x12x12x128xf32, #tpu.memory_space<vmem>>, vector<1x8x2x128xf32>
    tpu.vector_store %arg9[%c0_21, %c2_22, %c10_23, %c0_24], %17 {strides = array<i32>} : memref<1x12x12x128xf32, #tpu.memory_space<vmem>>, vector<1x8x2x128xf32>,
    %19 = vector.shape_cast %10 : vector<1x1x64x128xf32> to vector<1x64x128xf32>
    %20 = vector.shape_cast %19 : vector<1x64x128xf32> to vector<1x8x8x128xf32>
    %c0_25 = arith.constant 0 : index
    %c2_26 = arith.constant 2 : index
    %c2_27 = arith.constant 2 : index
    %c0_28 = arith.constant 0 : index
    %21 = vector.load %arg9[%c0_25, %c2_26, %c2_27, %c0_28] : memref<1x12x12x128xf32, #tpu.memory_space<vmem>>, vector<1x8x8x128xf32>
    tpu.vector_store %arg9[%c0_25, %c2_26, %c2_27, %c0_28], %20 {strides = array<i32>} : memref<1x12x12x128xf32, #tpu.memory_space<vmem>>, vector<1x8x8x128xf32>,
    %c0_29 = arith.constant 0 : index
    %c0_30 = arith.constant 0 : index
    %22 = vector.load %arg4[%c0_29, %c0_30] : memref<25x128xf32, #tpu.memory_space<vmem>>, vector<25x128xf32>
    %c0_31 = arith.constant 0 : index
    %c0_32 = arith.constant 0 : index
    %23 = vector.load %arg5[%c0_31, %c0_32] : memref<1x128xf32, #tpu.memory_space<vmem>>, vector<1x128xf32>
    %c0_33 = arith.constant 0 : index
    %c0_34 = arith.constant 0 : index
    %c0_35 = arith.constant 0 : index
    %c0_36 = arith.constant 0 : index
    %24 = vector.load %arg9[%c0_33, %c0_34, %c0_35, %c0_36] : memref<1x12x12x128xf32, #tpu.memory_space<vmem>>, vector<1x8x8x128xf32>
    %25 = vector.extract_strided_slice %22 {offsets = [0, 0], sizes = [1, 128], strides = [1, 1]} : vector<25x128xf32> to vector<1x128xf32>
    %26 = vector.shape_cast %25 : vector<1x128xf32> to vector<128xf32>
    %27 = vector.shape_cast %26 : vector<128xf32> to vector<1x1x1x128xf32>
    %28 = vector.broadcast %27 : vector<1x1x1x128xf32> to vector<1x8x8x128xf32>
    %29 = arith.mulf %24, %28 : vector<1x8x8x128xf32>
    %c0_37 = arith.constant 0 : index
    %c0_38 = arith.constant 0 : index
    %c1 = arith.constant 1 : index
    %c0_39 = arith.constant 0 : index
    %30 = vector.load %arg9[%c0_37, %c0_38, %c1, %c0_39] : memref<1x12x12x128xf32, #tpu.memory_space<vmem>>, vector<1x8x8x128xf32>
    %31 = vector.extract_strided_slice %22 {offsets = [1, 0], sizes = [1, 128], strides = [1, 1]} : vector<25x128xf32> to vector<1x128xf32>
    %32 = vector.shape_cast %31 : vector<1x128xf32> to vector<128xf32>
    %33 = vector.shape_cast %32 : vector<128xf32> to vector<1x1x1x128xf32>
    %34 = vector.broadcast %33 : vector<1x1x1x128xf32> to vector<1x8x8x128xf32>
    %35 = arith.mulf %30, %34 : vector<1x8x8x128xf32>
    %36 = arith.addf %29, %35 : vector<1x8x8x128xf32>
    %c0_40 = arith.constant 0 : index
    %c0_41 = arith.constant 0 : index
    %c2_42 = arith.constant 2 : index
    %c0_43 = arith.constant 0 : index
    %37 = vector.load %arg9[%c0_40, %c0_41, %c2_42, %c0_43] : memref<1x12x12x128xf32, #tpu.memory_space<vmem>>, vector<1x8x8x128xf32>
    %38 = vector.extract_strided_slice %22 {offsets = [2, 0], sizes = [1, 128], strides = [1, 1]} : vector<25x128xf32> to vector<1x128xf32>
    %39 = vector.shape_cast %38 : vector<1x128xf32> to vector<128xf32>
    %40 = vector.shape_cast %39 : vector<128xf32> to vector<1x1x1x128xf32>
    %41 = vector.broadcast %40 : vector<1x1x1x128xf32> to vector<1x8x8x128xf32>
    %42 = arith.mulf %37, %41 : vector<1x8x8x128xf32>
    %43 = arith.addf %36, %42 : vector<1x8x8x128xf32>
    %c0_44 = arith.constant 0 : index
    %c0_45 = arith.constant 0 : index
    %c3 = arith.constant 3 : index
    %c0_46 = arith.constant 0 : index
    %44 = vector.load %arg9[%c0_44, %c0_45, %c3, %c0_46] : memref<1x12x12x128xf32, #tpu.memory_space<vmem>>, vector<1x8x8x128xf32>
    %45 = vector.extract_strided_slice %22 {offsets = [3, 0], sizes = [1, 128], strides = [1, 1]} : vector<25x128xf32> to vector<1x128xf32>
    %46 = vector.shape_cast %45 : vector<1x128xf32> to vector<128xf32>
    %47 = vector.shape_cast %46 : vector<128xf32> to vector<1x1x1x128xf32>
    %48 = vector.broadcast %47 : vector<1x1x1x128xf32> to vector<1x8x8x128xf32>
    %49 = arith.mulf %44, %48 : vector<1x8x8x128xf32>
    %50 = arith.addf %43, %49 : vector<1x8x8x128xf32>
    %c0_47 = arith.constant 0 : index
    %c0_48 = arith.constant 0 : index
    %c4 = arith.constant 4 : index
    %c0_49 = arith.constant 0 : index
    %51 = vector.load %arg9[%c0_47, %c0_48, %c4, %c0_49] : memref<1x12x12x128xf32, #tpu.memory_space<vmem>>, vector<1x8x8x128xf32>
    %52 = vector.extract_strided_slice %22 {offsets = [4, 0], sizes = [1, 128], strides = [1, 1]} : vector<25x128xf32> to vector<1x128xf32>
    %53 = vector.shape_cast %52 : vector<1x128xf32> to vector<128xf32>
    %54 = vector.shape_cast %53 : vector<128xf32> to vector<1x1x1x128xf32>
    %55 = vector.broadcast %54 : vector<1x1x1x128xf32> to vector<1x8x8x128xf32>
    %56 = arith.mulf %51, %55 : vector<1x8x8x128xf32>
    %57 = arith.addf %50, %56 : vector<1x8x8x128xf32>
    %c0_50 = arith.constant 0 : index
    %c1_51 = arith.constant 1 : index
    %c0_52 = arith.constant 0 : index
    %c0_53 = arith.constant 0 : index
    %58 = vector.load %arg9[%c0_50, %c1_51, %c0_52, %c0_53] : memref<1x12x12x128xf32, #tpu.memory_space<vmem>>, vector<1x8x8x128xf32>
    %59 = vector.extract_strided_slice %22 {offsets = [5, 0], sizes = [1, 128], strides = [1, 1]} : vector<25x128xf32> to vector<1x128xf32>
    %60 = vector.shape_cast %59 : vector<1x128xf32> to vector<128xf32>
    %61 = vector.shape_cast %60 : vector<128xf32> to vector<1x1x1x128xf32>
    %62 = vector.broadcast %61 : vector<1x1x1x128xf32> to vector<1x8x8x128xf32>
    %63 = arith.mulf %58, %62 : vector<1x8x8x128xf32>
    %64 = arith.addf %57, %63 : vector<1x8x8x128xf32>
    %c0_54 = arith.constant 0 : index
    %c1_55 = arith.constant 1 : index
    %c1_56 = arith.constant 1 : index
    %c0_57 = arith.constant 0 : index
    %65 = vector.load %arg9[%c0_54, %c1_55, %c1_56, %c0_57] : memref<1x12x12x128xf32, #tpu.memory_space<vmem>>, vector<1x8x8x128xf32>
    %66 = vector.extract_strided_slice %22 {offsets = [6, 0], sizes = [1, 128], strides = [1, 1]} : vector<25x128xf32> to vector<1x128xf32>
    %67 = vector.shape_cast %66 : vector<1x128xf32> to vector<128xf32>
    %68 = vector.shape_cast %67 : vector<128xf32> to vector<1x1x1x128xf32>
    %69 = vector.broadcast %68 : vector<1x1x1x128xf32> to vector<1x8x8x128xf32>
    %70 = arith.mulf %65, %69 : vector<1x8x8x128xf32>
    %71 = arith.addf %64, %70 : vector<1x8x8x128xf32>
    %c0_58 = arith.constant 0 : index
    %c1_59 = arith.constant 1 : index
    %c2_60 = arith.constant 2 : index
    %c0_61 = arith.constant 0 : index
    %72 = vector.load %arg9[%c0_58, %c1_59, %c2_60, %c0_61] : memref<1x12x12x128xf32, #tpu.memory_space<vmem>>, vector<1x8x8x128xf32>
    %73 = vector.extract_strided_slice %22 {offsets = [7, 0], sizes = [1, 128], strides = [1, 1]} : vector<25x128xf32> to vector<1x128xf32>
    %74 = vector.shape_cast %73 : vector<1x128xf32> to vector<128xf32>
    %75 = vector.shape_cast %74 : vector<128xf32> to vector<1x1x1x128xf32>
    %76 = vector.broadcast %75 : vector<1x1x1x128xf32> to vector<1x8x8x128xf32>
    %77 = arith.mulf %72, %76 : vector<1x8x8x128xf32>
    %78 = arith.addf %71, %77 : vector<1x8x8x128xf32>
    %c0_62 = arith.constant 0 : index
    %c1_63 = arith.constant 1 : index
    %c3_64 = arith.constant 3 : index
    %c0_65 = arith.constant 0 : index
    %79 = vector.load %arg9[%c0_62, %c1_63, %c3_64, %c0_65] : memref<1x12x12x128xf32, #tpu.memory_space<vmem>>, vector<1x8x8x128xf32>
    %80 = vector.extract_strided_slice %22 {offsets = [8, 0], sizes = [1, 128], strides = [1, 1]} : vector<25x128xf32> to vector<1x128xf32>
    %81 = vector.shape_cast %80 : vector<1x128xf32> to vector<128xf32>
    %82 = vector.shape_cast %81 : vector<128xf32> to vector<1x1x1x128xf32>
    %83 = vector.broadcast %82 : vector<1x1x1x128xf32> to vector<1x8x8x128xf32>
    %84 = arith.mulf %79, %83 : vector<1x8x8x128xf32>
    %85 = arith.addf %78, %84 : vector<1x8x8x128xf32>
    %c0_66 = arith.constant 0 : index
    %c1_67 = arith.constant 1 : index
    %c4_68 = arith.constant 4 : index
    %c0_69 = arith.constant 0 : index
    %86 = vector.load %arg9[%c0_66, %c1_67, %c4_68, %c0_69] : memref<1x12x12x128xf32, #tpu.memory_space<vmem>>, vector<1x8x8x128xf32>
    %87 = vector.extract_strided_slice %22 {offsets = [9, 0], sizes = [1, 128], strides = [1, 1]} : vector<25x128xf32> to vector<1x128xf32>
    %88 = vector.shape_cast %87 : vector<1x128xf32> to vector<128xf32>
    %89 = vector.shape_cast %88 : vector<128xf32> to vector<1x1x1x128xf32>
    %90 = vector.broadcast %89 : vector<1x1x1x128xf32> to vector<1x8x8x128xf32>
    %91 = arith.mulf %86, %90 : vector<1x8x8x128xf32>
    %92 = arith.addf %85, %91 : vector<1x8x8x128xf32>
    %c0_70 = arith.constant 0 : index
    %c2_71 = arith.constant 2 : index
    %c0_72 = arith.constant 0 : index
    %c0_73 = arith.constant 0 : index
    %93 = vector.load %arg9[%c0_70, %c2_71, %c0_72, %c0_73] : memref<1x12x12x128xf32, #tpu.memory_space<vmem>>, vector<1x8x8x128xf32>
    %94 = vector.extract_strided_slice %22 {offsets = [10, 0], sizes = [1, 128], strides = [1, 1]} : vector<25x128xf32> to vector<1x128xf32>
    %95 = vector.shape_cast %94 : vector<1x128xf32> to vector<128xf32>
    %96 = vector.shape_cast %95 : vector<128xf32> to vector<1x1x1x128xf32>
    %97 = vector.broadcast %96 : vector<1x1x1x128xf32> to vector<1x8x8x128xf32>
    %98 = arith.mulf %93, %97 : vector<1x8x8x128xf32>
    %99 = arith.addf %92, %98 : vector<1x8x8x128xf32>
    %c0_74 = arith.constant 0 : index
    %c2_75 = arith.constant 2 : index
    %c1_76 = arith.constant 1 : index
    %c0_77 = arith.constant 0 : index
    %100 = vector.load %arg9[%c0_74, %c2_75, %c1_76, %c0_77] : memref<1x12x12x128xf32, #tpu.memory_space<vmem>>, vector<1x8x8x128xf32>
    %101 = vector.extract_strided_slice %22 {offsets = [11, 0], sizes = [1, 128], strides = [1, 1]} : vector<25x128xf32> to vector<1x128xf32>
    %102 = vector.shape_cast %101 : vector<1x128xf32> to vector<128xf32>
    %103 = vector.shape_cast %102 : vector<128xf32> to vector<1x1x1x128xf32>
    %104 = vector.broadcast %103 : vector<1x1x1x128xf32> to vector<1x8x8x128xf32>
    %105 = arith.mulf %100, %104 : vector<1x8x8x128xf32>
    %106 = arith.addf %99, %105 : vector<1x8x8x128xf32>
    %c0_78 = arith.constant 0 : index
    %c2_79 = arith.constant 2 : index
    %c2_80 = arith.constant 2 : index
    %c0_81 = arith.constant 0 : index
    %107 = vector.load %arg9[%c0_78, %c2_79, %c2_80, %c0_81] : memref<1x12x12x128xf32, #tpu.memory_space<vmem>>, vector<1x8x8x128xf32>
    %108 = vector.extract_strided_slice %22 {offsets = [12, 0], sizes = [1, 128], strides = [1, 1]} : vector<25x128xf32> to vector<1x128xf32>
    %109 = vector.shape_cast %108 : vector<1x128xf32> to vector<128xf32>
    %110 = vector.shape_cast %109 : vector<128xf32> to vector<1x1x1x128xf32>
    %111 = vector.broadcast %110 : vector<1x1x1x128xf32> to vector<1x8x8x128xf32>
    %112 = arith.mulf %107, %111 : vector<1x8x8x128xf32>
    %113 = arith.addf %106, %112 : vector<1x8x8x128xf32>
    %c0_82 = arith.constant 0 : index
    %c2_83 = arith.constant 2 : index
    %c3_84 = arith.constant 3 : index
    %c0_85 = arith.constant 0 : index
    %114 = vector.load %arg9[%c0_82, %c2_83, %c3_84, %c0_85] : memref<1x12x12x128xf32, #tpu.memory_space<vmem>>, vector<1x8x8x128xf32>
    %115 = vector.extract_strided_slice %22 {offsets = [13, 0], sizes = [1, 128], strides = [1, 1]} : vector<25x128xf32> to vector<1x128xf32>
    %116 = vector.shape_cast %115 : vector<1x128xf32> to vector<128xf32>
    %117 = vector.shape_cast %116 : vector<128xf32> to vector<1x1x1x128xf32>
    %118 = vector.broadcast %117 : vector<1x1x1x128xf32> to vector<1x8x8x128xf32>
    %119 = arith.mulf %114, %118 : vector<1x8x8x128xf32>
    %120 = arith.addf %113, %119 : vector<1x8x8x128xf32>
    %c0_86 = arith.constant 0 : index
    %c2_87 = arith.constant 2 : index
    %c4_88 = arith.constant 4 : index
    %c0_89 = arith.constant 0 : index
    %121 = vector.load %arg9[%c0_86, %c2_87, %c4_88, %c0_89] : memref<1x12x12x128xf32, #tpu.memory_space<vmem>>, vector<1x8x8x128xf32>
    %122 = vector.extract_strided_slice %22 {offsets = [14, 0], sizes = [1, 128], strides = [1, 1]} : vector<25x128xf32> to vector<1x128xf32>
    %123 = vector.shape_cast %122 : vector<1x128xf32> to vector<128xf32>
    %124 = vector.shape_cast %123 : vector<128xf32> to vector<1x1x1x128xf32>
    %125 = vector.broadcast %124 : vector<1x1x1x128xf32> to vector<1x8x8x128xf32>
    %126 = arith.mulf %121, %125 : vector<1x8x8x128xf32>
    %127 = arith.addf %120, %126 : vector<1x8x8x128xf32>
    %c0_90 = arith.constant 0 : index
    %c3_91 = arith.constant 3 : index
    %c0_92 = arith.constant 0 : index
    %c0_93 = arith.constant 0 : index
    %128 = vector.load %arg9[%c0_90, %c3_91, %c0_92, %c0_93] : memref<1x12x12x128xf32, #tpu.memory_space<vmem>>, vector<1x8x8x128xf32>
    %129 = vector.extract_strided_slice %22 {offsets = [15, 0], sizes = [1, 128], strides = [1, 1]} : vector<25x128xf32> to vector<1x128xf32>
    %130 = vector.shape_cast %129 : vector<1x128xf32> to vector<128xf32>
    %131 = vector.shape_cast %130 : vector<128xf32> to vector<1x1x1x128xf32>
    %132 = vector.broadcast %131 : vector<1x1x1x128xf32> to vector<1x8x8x128xf32>
    %133 = arith.mulf %128, %132 : vector<1x8x8x128xf32>
    %134 = arith.addf %127, %133 : vector<1x8x8x128xf32>
    %c0_94 = arith.constant 0 : index
    %c3_95 = arith.constant 3 : index
    %c1_96 = arith.constant 1 : index
    %c0_97 = arith.constant 0 : index
    %135 = vector.load %arg9[%c0_94, %c3_95, %c1_96, %c0_97] : memref<1x12x12x128xf32, #tpu.memory_space<vmem>>, vector<1x8x8x128xf32>
    %136 = vector.extract_strided_slice %22 {offsets = [16, 0], sizes = [1, 128], strides = [1, 1]} : vector<25x128xf32> to vector<1x128xf32>
    %137 = vector.shape_cast %136 : vector<1x128xf32> to vector<128xf32>
    %138 = vector.shape_cast %137 : vector<128xf32> to vector<1x1x1x128xf32>
    %139 = vector.broadcast %138 : vector<1x1x1x128xf32> to vector<1x8x8x128xf32>
    %140 = arith.mulf %135, %139 : vector<1x8x8x128xf32>
    %141 = arith.addf %134, %140 : vector<1x8x8x128xf32>
    %c0_98 = arith.constant 0 : index
    %c3_99 = arith.constant 3 : index
    %c2_100 = arith.constant 2 : index
    %c0_101 = arith.constant 0 : index
    %142 = vector.load %arg9[%c0_98, %c3_99, %c2_100, %c0_101] : memref<1x12x12x128xf32, #tpu.memory_space<vmem>>, vector<1x8x8x128xf32>
    %143 = vector.extract_strided_slice %22 {offsets = [17, 0], sizes = [1, 128], strides = [1, 1]} : vector<25x128xf32> to vector<1x128xf32>
    %144 = vector.shape_cast %143 : vector<1x128xf32> to vector<128xf32>
    %145 = vector.shape_cast %144 : vector<128xf32> to vector<1x1x1x128xf32>
    %146 = vector.broadcast %145 : vector<1x1x1x128xf32> to vector<1x8x8x128xf32>
    %147 = arith.mulf %142, %146 : vector<1x8x8x128xf32>
    %148 = arith.addf %141, %147 : vector<1x8x8x128xf32>
    %c0_102 = arith.constant 0 : index
    %c3_103 = arith.constant 3 : index
    %c3_104 = arith.constant 3 : index
    %c0_105 = arith.constant 0 : index
    %149 = vector.load %arg9[%c0_102, %c3_103, %c3_104, %c0_105] : memref<1x12x12x128xf32, #tpu.memory_space<vmem>>, vector<1x8x8x128xf32>
    %150 = vector.extract_strided_slice %22 {offsets = [18, 0], sizes = [1, 128], strides = [1, 1]} : vector<25x128xf32> to vector<1x128xf32>
    %151 = vector.shape_cast %150 : vector<1x128xf32> to vector<128xf32>
    %152 = vector.shape_cast %151 : vector<128xf32> to vector<1x1x1x128xf32>
    %153 = vector.broadcast %152 : vector<1x1x1x128xf32> to vector<1x8x8x128xf32>
    %154 = arith.mulf %149, %153 : vector<1x8x8x128xf32>
    %155 = arith.addf %148, %154 : vector<1x8x8x128xf32>
    %c0_106 = arith.constant 0 : index
    %c3_107 = arith.constant 3 : index
    %c4_108 = arith.constant 4 : index
    %c0_109 = arith.constant 0 : index
    %156 = vector.load %arg9[%c0_106, %c3_107, %c4_108, %c0_109] : memref<1x12x12x128xf32, #tpu.memory_space<vmem>>, vector<1x8x8x128xf32>
    %157 = vector.extract_strided_slice %22 {offsets = [19, 0], sizes = [1, 128], strides = [1, 1]} : vector<25x128xf32> to vector<1x128xf32>
    %158 = vector.shape_cast %157 : vector<1x128xf32> to vector<128xf32>
    %159 = vector.shape_cast %158 : vector<128xf32> to vector<1x1x1x128xf32>
    %160 = vector.broadcast %159 : vector<1x1x1x128xf32> to vector<1x8x8x128xf32>
    %161 = arith.mulf %156, %160 : vector<1x8x8x128xf32>
    %162 = arith.addf %155, %161 : vector<1x8x8x128xf32>
    %c0_110 = arith.constant 0 : index
    %c4_111 = arith.constant 4 : index
    %c0_112 = arith.constant 0 : index
    %c0_113 = arith.constant 0 : index
    %163 = vector.load %arg9[%c0_110, %c4_111, %c0_112, %c0_113] : memref<1x12x12x128xf32, #tpu.memory_space<vmem>>, vector<1x8x8x128xf32>
    %164 = vector.extract_strided_slice %22 {offsets = [20, 0], sizes = [1, 128], strides = [1, 1]} : vector<25x128xf32> to vector<1x128xf32>
    %165 = vector.shape_cast %164 : vector<1x128xf32> to vector<128xf32>
    %166 = vector.shape_cast %165 : vector<128xf32> to vector<1x1x1x128xf32>
    %167 = vector.broadcast %166 : vector<1x1x1x128xf32> to vector<1x8x8x128xf32>
    %168 = arith.mulf %163, %167 : vector<1x8x8x128xf32>
    %169 = arith.addf %162, %168 : vector<1x8x8x128xf32>
    %c0_114 = arith.constant 0 : index
    %c4_115 = arith.constant 4 : index
    %c1_116 = arith.constant 1 : index
    %c0_117 = arith.constant 0 : index
    %170 = vector.load %arg9[%c0_114, %c4_115, %c1_116, %c0_117] : memref<1x12x12x128xf32, #tpu.memory_space<vmem>>, vector<1x8x8x128xf32>
    %171 = vector.extract_strided_slice %22 {offsets = [21, 0], sizes = [1, 128], strides = [1, 1]} : vector<25x128xf32> to vector<1x128xf32>
    %172 = vector.shape_cast %171 : vector<1x128xf32> to vector<128xf32>
    %173 = vector.shape_cast %172 : vector<128xf32> to vector<1x1x1x128xf32>
    %174 = vector.broadcast %173 : vector<1x1x1x128xf32> to vector<1x8x8x128xf32>
    %175 = arith.mulf %170, %174 : vector<1x8x8x128xf32>
    %176 = arith.addf %169, %175 : vector<1x8x8x128xf32>
    %c0_118 = arith.constant 0 : index
    %c4_119 = arith.constant 4 : index
    %c2_120 = arith.constant 2 : index
    %c0_121 = arith.constant 0 : index
    %177 = vector.load %arg9[%c0_118, %c4_119, %c2_120, %c0_121] : memref<1x12x12x128xf32, #tpu.memory_space<vmem>>, vector<1x8x8x128xf32>
    %178 = vector.extract_strided_slice %22 {offsets = [22, 0], sizes = [1, 128], strides = [1, 1]} : vector<25x128xf32> to vector<1x128xf32>
    %179 = vector.shape_cast %178 : vector<1x128xf32> to vector<128xf32>
    %180 = vector.shape_cast %179 : vector<128xf32> to vector<1x1x1x128xf32>
    %181 = vector.broadcast %180 : vector<1x1x1x128xf32> to vector<1x8x8x128xf32>
    %182 = arith.mulf %177, %181 : vector<1x8x8x128xf32>
    %183 = arith.addf %176, %182 : vector<1x8x8x128xf32>
    %c0_122 = arith.constant 0 : index
    %c4_123 = arith.constant 4 : index
    %c3_124 = arith.constant 3 : index
    %c0_125 = arith.constant 0 : index
    %184 = vector.load %arg9[%c0_122, %c4_123, %c3_124, %c0_125] : memref<1x12x12x128xf32, #tpu.memory_space<vmem>>, vector<1x8x8x128xf32>
    %185 = vector.extract_strided_slice %22 {offsets = [23, 0], sizes = [1, 128], strides = [1, 1]} : vector<25x128xf32> to vector<1x128xf32>
    %186 = vector.shape_cast %185 : vector<1x128xf32> to vector<128xf32>
    %187 = vector.shape_cast %186 : vector<128xf32> to vector<1x1x1x128xf32>
    %188 = vector.broadcast %187 : vector<1x1x1x128xf32> to vector<1x8x8x128xf32>
    %189 = arith.mulf %184, %188 : vector<1x8x8x128xf32>
    %190 = arith.addf %183, %189 : vector<1x8x8x128xf32>
    %c0_126 = arith.constant 0 : index
    %c4_127 = arith.constant 4 : index
    %c4_128 = arith.constant 4 : index
    %c0_129 = arith.constant 0 : index
    %191 = vector.load %arg9[%c0_126, %c4_127, %c4_128, %c0_129] : memref<1x12x12x128xf32, #tpu.memory_space<vmem>>, vector<1x8x8x128xf32>
    %192 = vector.extract_strided_slice %22 {offsets = [24, 0], sizes = [1, 128], strides = [1, 1]} : vector<25x128xf32> to vector<1x128xf32>
    %193 = vector.shape_cast %192 : vector<1x128xf32> to vector<128xf32>
    %194 = vector.shape_cast %193 : vector<128xf32> to vector<1x1x1x128xf32>
    %195 = vector.broadcast %194 : vector<1x1x1x128xf32> to vector<1x8x8x128xf32>
    %196 = arith.mulf %191, %195 : vector<1x8x8x128xf32>
    %197 = arith.addf %190, %196 : vector<1x8x8x128xf32>
    %198 = vector.shape_cast %23 : vector<1x128xf32> to vector<128xf32>
    %199 = vector.shape_cast %198 : vector<128xf32> to vector<1x1x1x128xf32>
    %200 = vector.broadcast %199 : vector<1x1x1x128xf32> to vector<1x8x8x128xf32>
    %201 = arith.addf %197, %200 : vector<1x8x8x128xf32>
    %cst_130 = arith.constant 0.000000e+00 : f32
    %202 = vector.broadcast %cst_130 : f32 to vector<1x8x8x128xf32>
    %203 = arith.maximumf %201, %202 : vector<1x8x8x128xf32>
    %204 = vector.shape_cast %203 : vector<1x8x8x128xf32> to vector<64x128xf32>
    %205 = arith.truncf %204 : vector<64x128xf32> to vector<64x128xbf16>
    %c0_131 = arith.constant 0 : index
    %c0_132 = arith.constant 0 : index
    %206 = vector.load %arg6[%c0_131, %c0_132] : memref<128x128xbf16, #tpu.memory_space<vmem>>, vector<128x128xbf16>
    %cst_133 = arith.constant dense<0.000000e+00> : vector<64x128xf32>
    %207 = tpu.matmul %205, %206, %cst_133 {dimension_numbers = #tpu.dot_dimension_numbers<[1], [0], [0], [1], [0, 0, 1, 1], [], []>} : vector<64x128xbf16>, vector<128x128xbf16>, vector<64x128xf32> -> vector<64x128xf32>
    %c0_134 = arith.constant 0 : index
    %c0_135 = arith.constant 0 : index
    %208 = vector.load %arg7[%c0_134, %c0_135] : memref<1x128xf32, #tpu.memory_space<vmem>>, vector<1x128xf32>
    %209 = vector.broadcast %208 : vector<1x128xf32> to vector<64x128xf32>
    %210 = arith.addf %207, %209 : vector<64x128xf32>
    %211 = vector.shape_cast %0 : vector<1x64x16xf32> to vector<64x16xf32>
    %cst_136 = arith.constant 0.000000e+00 : f32
    %212 = vector.broadcast %cst_136 : f32 to vector<64x112xf32>
    %213 = tpu.concatenate %211, %212 in 1 : vector<64x16xf32>, vector<64x112xf32> -> vector<64x128xf32>
    %214 = arith.addf %210, %213 : vector<64x128xf32>
    %215 = vector.shape_cast %214 : vector<64x128xf32> to vector<1x64x128xf32>
    %c0_137 = arith.constant 0 : index
    %c0_138 = arith.constant 0 : index
    %c0_139 = arith.constant 0 : index
    %216 = vector.load %arg8[%c0_137, %c0_138, %c0_139] : memref<1x64x128xf32, #tpu.memory_space<vmem>>, vector<1x64x128xf32>
    tpu.vector_store %arg8[%c0_137, %c0_138, %c0_139], %215 {strides = array<i32>} : memref<1x64x128xf32, #tpu.memory_space<vmem>>, vector<1x64x128xf32>,
    return
  }
  func.func @transform_0(%arg0: i32) -> (i32, i32, i32) {
    %c0_i32 = arith.constant 0 : i32
    %c0_i32_0 = arith.constant 0 : i32
    %c0_i32_1 = arith.constant 0 : i32
    return %arg0, %c0_i32, %c0_i32_0 : i32, i32, i32
  }
  func.func @transform_1(%arg0: i32) -> (i32, i32) {
    %c0_i32 = arith.constant 0 : i32
    %c0_i32_0 = arith.constant 0 : i32
    %c0_i32_1 = arith.constant 0 : i32
    return %c0_i32, %c0_i32_0 : i32, i32
  }
  func.func @transform_2(%arg0: i32) -> (i32, i32) {
    %c0_i32 = arith.constant 0 : i32
    %c0_i32_0 = arith.constant 0 : i32
    %c0_i32_1 = arith.constant 0 : i32
    return %c0_i32, %c0_i32_0 : i32, i32
  }
  func.func @transform_3(%arg0: i32) -> (i32, i32) {
    %c0_i32 = arith.constant 0 : i32
    %c0_i32_0 = arith.constant 0 : i32
    %c0_i32_1 = arith.constant 0 : i32
    return %c0_i32, %c0_i32_0 : i32, i32
  }
  func.func @transform_4(%arg0: i32) -> (i32, i32) {
    %c0_i32 = arith.constant 0 : i32
    %c0_i32_0 = arith.constant 0 : i32
    %c0_i32_1 = arith.constant 0 : i32
    return %c0_i32, %c0_i32_0 : i32, i32
  }
  func.func @transform_5(%arg0: i32) -> (i32, i32) {
    %c0_i32 = arith.constant 0 : i32
    %c0_i32_0 = arith.constant 0 : i32
    %c0_i32_1 = arith.constant 0 : i32
    return %c0_i32, %c0_i32_0 : i32, i32
  }
  func.func @transform_6(%arg0: i32) -> (i32, i32) {
    %c0_i32 = arith.constant 0 : i32
    %c0_i32_0 = arith.constant 0 : i32
    %c0_i32_1 = arith.constant 0 : i32
    return %c0_i32, %c0_i32_0 : i32, i32
  }
  func.func @transform_7(%arg0: i32) -> (i32, i32, i32) {
    %c0_i32 = arith.constant 0 : i32
    %c0_i32_0 = arith.constant 0 : i32
    %c0_i32_1 = arith.constant 0 : i32
    return %arg0, %c0_i32, %c0_i32_0 : i32, i32, i32
  }
}

</mosaic_0001>

<llo_original>
// kernel: _lambda_.3
$region0: #{_lambda_.3}
  #allocation0 [shape = 'u32[]', space=smem, size = 0x4, offset = 0x4, fixed_abs, tag = 'smem constant byte address 0x4 - core index']
  #allocation1 [shape = 'u32[144,128]{1,0:T(1,128)}', space=vmem, size = 0x12000, scoped, tag = 'internal scratch']
  #allocation2 [shape = 'f32[1,12,12,128]{3,2,1,0:T(8,128)}', space=vmem, size = 0x18000, scoped, tag = 'scratch operand']
  %s0 = inlined_call_operand.vmem [shape: f32[2,64,16], index: 0, kind: input, shape index: {}]
  %s1 = inlined_call_operand.vmem [shape: bf16[16,128], index: 1, kind: input, shape index: {}]
  %s2 = inlined_call_operand.vmem [shape: f32[1,128], index: 2, kind: input, shape index: {}]
  %s3 = inlined_call_operand.vmem [shape: f32[25,128], index: 3, kind: input, shape index: {}]
  %s4 = inlined_call_operand.vmem [shape: f32[1,128], index: 4, kind: input, shape index: {}]
  %s5 = inlined_call_operand.vmem [shape: bf16[128,128], index: 5, kind: input, shape index: {}]
  %s6 = inlined_call_operand.vmem [shape: f32[1,128], index: 6, kind: input, shape index: {}]
  %s7 = inlined_call_operand.vmem [shape: f32[2,64,128], index: 7, kind: output, shape index: {}]
  %s8 = sld [smem:[#allocation0]]
  $region61: #{_lambda_.3} parent=0
    _
  %s10 = ssub.s32 1, %s8
  %s11 = scalar_select 0, %s10, %s8
  loop: start=0, step=1, limit=4
  $region2: #{_lambda_.3} parent=0 // loop_pre_header
    _
  $region3: #{_lambda_.3} parent=0 // loop_header
    %s13 = sphi 0, %s17
    %p14 = scmp.ge.s32.totalorder %s13, 4
    %s23 = sphi 0, %s25
    %s26 = sphi 0, %s23
    %s27 = sphi 0, %s26
    %s43 = sphi 0, %s27
    %s47 = sphi 0, %s47
    %s49 = sphi 0, %s47
    %s50 = sphi 0, %s49
    %s64 = sphi 0, %s50
    %s68 = sphi 0, %s68
    %s70 = sphi 0, %s68
    %s71 = sphi 0, %s70
    %s85 = sphi 0, %s71
    %s89 = sphi 0, %s89
    %s91 = sphi 0, %s89
    %s92 = sphi 0, %s91
    %s106 = sphi 0, %s92
    %s110 = sphi 0, %s110
    %s112 = sphi 0, %s110
    %s113 = sphi 0, %s112
    %s127 = sphi 0, %s113
    %s131 = sphi 0, %s131
    %s133 = sphi 0, %s131
    %s134 = sphi 0, %s133
    %s148 = sphi 0, %s134
    %s152 = sphi 0, %s152
    %s154 = sphi 0, %s152
    %s155 = sphi 0, %s154
    %s169 = sphi 0, %s155
    %s175 = sphi 0, %s177
    %s178 = sphi 0, %s175
    %s179 = sphi 0, %s178
    %s195 = sphi 0, %s179
  $region4: #{_lambda_.3} parent=0 // loop_header_branch
    %16 = sbr.rel (%p14) target = $region8
  $region5: #{_lambda_.3} parent=0 // loop_body
    %s18 = ssub.s32 %s13, 1
    %s19 = ssub.s32 %s13, 2
    %s20 = sadd.s32 %s13, 1
    %s21 = ssub.s32 %s13, %s20
    %p22 = scmp.eq.s32.totalorder %s21, 0
    %s24 = sadd.s32 %s23, 1
    %s25 = scalar_select %p22, %s23, %s24
    %p28 = pneg %p22
    %p29 = scmp.eq.s32.totalorder %s13, 1
    %p30 = por %p28, %p29
    %p31 = scmp.ne.s32.totalorder %s23, %s26
    %p32 = scmp.eq.s32.totalorder %s13, 0
    %p33 = por %p31, %p32
    %p34 = scmp.ne.s32.totalorder %s23, %s26
    %p35 = scmp.eq.s32.totalorder %s18, 1
    %p36 = por %p34, %p35
    %p37 = scmp.ne.s32.totalorder %s26, %s27
    %p38 = scmp.eq.s32.totalorder %s18, 0
    %p39 = por %p37, %p38
    %p40 = scmp.ne.s32.totalorder %s26, %s27
    %p41 = scmp.eq.s32.totalorder %s19, 1
    %p42 = por %p40, %p41
    %p44 = scmp.ne.s32.totalorder %s27, %s43
    %p45 = scmp.eq.s32.totalorder %s19, 0
    %p46 = por %p44, %p45
    %s48 = sadd.s32 %s47, 1
    %p51 = scmp.eq.s32.totalorder %s13, 1
    %p52 = scmp.ne.s32.totalorder %s47, %s49
    %p53 = scmp.eq.s32.totalorder %s13, 0
    %p54 = por %p52, %p53
    %p55 = scmp.ne.s32.totalorder %s47, %s49
    %p56 = scmp.eq.s32.totalorder %s18, 1
    %p57 = por %p55, %p56
    %p58 = scmp.ne.s32.totalorder %s49, %s50
    %p59 = scmp.eq.s32.totalorder %s18, 0
    %p60 = por %p58, %p59
    %p61 = scmp.ne.s32.totalorder %s49, %s50
    %p62 = scmp.eq.s32.totalorder %s19, 1
    %p63 = por %p61, %p62
    %p65 = scmp.ne.s32.totalorder %s50, %s64
    %p66 = scmp.eq.s32.totalorder %s19, 0
    %p67 = por %p65, %p66
    %s69 = sadd.s32 %s68, 1
    %p72 = scmp.eq.s32.totalorder %s13, 1
    %p73 = scmp.ne.s32.totalorder %s68, %s70
    %p74 = scmp.eq.s32.totalorder %s13, 0
    %p75 = por %p73, %p74
    %p76 = scmp.ne.s32.totalorder %s68, %s70
    %p77 = scmp.eq.s32.totalorder %s18, 1
    %p78 = por %p76, %p77
    %p79 = scmp.ne.s32.totalorder %s70, %s71
    %p80 = scmp.eq.s32.totalorder %s18, 0
    %p81 = por %p79, %p80
    %p82 = scmp.ne.s32.totalorder %s70, %s71
    %p83 = scmp.eq.s32.totalorder %s19, 1
    %p84 = por %p82, %p83
    %p86 = scmp.ne.s32.totalorder %s71, %s85
    %p87 = scmp.eq.s32.totalorder %s19, 0
    %p88 = por %p86, %p87
    %s90 = sadd.s32 %s89, 1
    %p93 = scmp.eq.s32.totalorder %s13, 1
    %p94 = scmp.ne.s32.totalorder %s89, %s91
    %p95 = scmp.eq.s32.totalorder %s13, 0
    %p96 = por %p94, %p95
    %p97 = scmp.ne.s32.totalorder %s89, %s91
    %p98 = scmp.eq.s32.totalorder %s18, 1
    %p99 = por %p97, %p98
    %p100 = scmp.ne.s32.totalorder %s91, %s92
    %p101 = scmp.eq.s32.totalorder %s18, 0
    %p102 = por %p100, %p101
    %p103 = scmp.ne.s32.totalorder %s91, %s92
    %p104 = scmp.eq.s32.totalorder %s19, 1
    %p105 = por %p103, %p104
    %p107 = scmp.ne.s32.totalorder %s92, %s106
    %p108 = scmp.eq.s32.totalorder %s19, 0
    %p109 = por %p107, %p108
    %s111 = sadd.s32 %s110, 1
    %p114 = scmp.eq.s32.totalorder %s13, 1
    %p115 = scmp.ne.s32.totalorder %s110, %s112
    %p116 = scmp.eq.s32.totalorder %s13, 0
    %p117 = por %p115, %p116
    %p118 = scmp.ne.s32.totalorder %s110, %s112
    %p119 = scmp.eq.s32.totalorder %s18, 1
    %p120 = por %p118, %p119
    %p121 = scmp.ne.s32.totalorder %s112, %s113
    %p122 = scmp.eq.s32.totalorder %s18, 0
    %p123 = por %p121, %p122
    %p124 = scmp.ne.s32.totalorder %s112, %s113
    %p125 = scmp.eq.s32.totalorder %s19, 1
    %p126 = por %p124, %p125
    %p128 = scmp.ne.s32.totalorder %s113, %s127
    %p129 = scmp.eq.s32.totalorder %s19, 0
    %p130 = por %p128, %p129
    %s132 = sadd.s32 %s131, 1
    %p135 = scmp.eq.s32.totalorder %s13, 1
    %p136 = scmp.ne.s32.totalorder %s131, %s133
    %p137 = scmp.eq.s32.totalorder %s13, 0
    %p138 = por %p136, %p137
    %p139 = scmp.ne.s32.totalorder %s131, %s133
    %p140 = scmp.eq.s32.totalorder %s18, 1
    %p141 = por %p139, %p140
    %p142 = scmp.ne.s32.totalorder %s133, %s134
    %p143 = scmp.eq.s32.totalorder %s18, 0
    %p144 = por %p142, %p143
    %p145 = scmp.ne.s32.totalorder %s133, %s134
    %p146 = scmp.eq.s32.totalorder %s19, 1
    %p147 = por %p145, %p146
    %p149 = scmp.ne.s32.totalorder %s134, %s148
    %p150 = scmp.eq.s32.totalorder %s19, 0
    %p151 = por %p149, %p150
    %s153 = sadd.s32 %s152, 1
    %p156 = scmp.eq.s32.totalorder %s13, 1
    %p157 = scmp.ne.s32.totalorder %s152, %s154
    %p158 = scmp.eq.s32.totalorder %s13, 0
    %p159 = por %p157, %p158
    %p160 = scmp.ne.s32.totalorder %s152, %s154
    %p161 = scmp.eq.s32.totalorder %s18, 1
    %p162 = por %p160, %p161
    %p163 = scmp.ne.s32.totalorder %s154, %s155
    %p164 = scmp.eq.s32.totalorder %s18, 0
    %p165 = por %p163, %p164
    %p166 = scmp.ne.s32.totalorder %s154, %s155
    %p167 = scmp.eq.s32.totalorder %s19, 1
    %p168 = por %p166, %p167
    %p170 = scmp.ne.s32.totalorder %s155, %s169
    %p171 = scmp.eq.s32.totalorder %s19, 0
    %p172 = por %p170, %p171
    %s173 = ssub.s32 %s13, %s20
    %p174 = scmp.eq.s32.totalorder %s173, 0
    %s176 = sadd.s32 %s175, 1
    %s177 = scalar_select %p174, %s175, %s176
    %p180 = pneg %p174
    %p181 = scmp.eq.s32.totalorder %s13, 1
    %p182 = por %p180, %p181
    %p183 = scmp.ne.s32.totalorder %s175, %s178
    %p184 = scmp.eq.s32.totalorder %s13, 0
    %p185 = por %p183, %p184
    %p186 = scmp.ne.s32.totalorder %s175, %s178
    %p187 = scmp.eq.s32.totalorder %s18, 1
    %p188 = por %p186, %p187
    %p189 = scmp.ne.s32.totalorder %s178, %s179
    %p190 = scmp.eq.s32.totalorder %s18, 0
    %p191 = por %p189, %p190
    %p192 = scmp.ne.s32.totalorder %s178, %s179
    %p193 = scmp.eq.s32.totalorder %s19, 1
    %p194 = por %p192, %p193
    %p196 = scmp.ne.s32.totalorder %s179, %s195
    %p197 = scmp.eq.s32.totalorder %s19, 0
    %p198 = por %p196, %p197
    %p199 = scmp.le.s32.totalorder 1, %s13
    %p200 = scmp.lt.s32.totalorder %s13, 3
    %p201 = pnand %p199, %p200
    %p202 = pneg %p201
    // Predicated region
    $region9: #{_lambda_.3} parent=5 // pred_check
      _
    $region10: #{_lambda_.3} parent=5 // pred_check_branch
      %204 = sbr.rel (%p201) target = $region12
    $region11: #{_lambda_.3} parent=5 // pred_region
      %s205 = ssub.s32 %s13, 1
      // Predicated region
      $region13: #{_lambda_.3} parent=11 // pred_check
        %p206 = pneg %p60
      $region14: #{_lambda_.3} parent=11 // pred_check_branch
        %208 = sbr.rel (%p206) target = $region16
      $region15: #{_lambda_.3} parent=11 // pred_region
        _
      $region16: #{_lambda_.3} parent=11 // pred_fallthru
        _
      // Predicated region
      $region17: #{_lambda_.3} parent=11 // pred_check
        %p209 = pneg %p81
      $region18: #{_lambda_.3} parent=11 // pred_check_branch
        %211 = sbr.rel (%p209) target = $region20
      $region19: #{_lambda_.3} parent=11 // pred_region
        _
      $region20: #{_lambda_.3} parent=11 // pred_fallthru
        _
      // Predicated region
      $region21: #{_lambda_.3} parent=11 // pred_check
        %p212 = pneg %p102
      $region22: #{_lambda_.3} parent=11 // pred_check_branch
        %214 = sbr.rel (%p212) target = $region24
      $region23: #{_lambda_.3} parent=11 // pred_region
        _
      $region24: #{_lambda_.3} parent=11 // pred_fallthru
        _
      // Predicated region
      $region25: #{_lambda_.3} parent=11 // pred_check
        %p215 = pneg %p123
      $region26: #{_lambda_.3} parent=11 // pred_check_branch
        %217 = sbr.rel (%p215) target = $region28
      $region27: #{_lambda_.3} parent=11 // pred_region
        _
      $region28: #{_lambda_.3} parent=11 // pred_fallthru
        _
      // Predicated region
      $region29: #{_lambda_.3} parent=11 // pred_check
        %p218 = pneg %p144
      $region30: #{_lambda_.3} parent=11 // pred_check_branch
        %220 = sbr.rel (%p218) target = $region32
      $region31: #{_lambda_.3} parent=11 // pred_region
        _
      $region32: #{_lambda_.3} parent=11 // pred_fallthru
        _
      // Predicated region
      $region33: #{_lambda_.3} parent=11 // pred_check
        %p221 = pneg %p165
      $region34: #{_lambda_.3} parent=11 // pred_check_branch
        %223 = sbr.rel (%p221) target = $region36
      $region35: #{_lambda_.3} parent=11 // pred_region
        _
      $region36: #{_lambda_.3} parent=11 // pred_fallthru
        _
    $region12: #{_lambda_.3} parent=5 // pred_fallthru
      _
    %p224 = scmp.lt.s32.totalorder %s13, 2
    // Predicated region
    $region37: #{_lambda_.3} parent=5 // pred_check
      %p225 = pneg %p224
    $region38: #{_lambda_.3} parent=5 // pred_check_branch
      %227 = sbr.rel (%p225) target = $region40
    $region39: #{_lambda_.3} parent=5 // pred_region
      // Predicated region
      $region41: #{_lambda_.3} parent=39 // pred_check
        %p228 = pneg %p33
      $region42: #{_lambda_.3} parent=39 // pred_check_branch
        %230 = sbr.rel (%p228) target = $region44
      $region43: #{_lambda_.3} parent=39 // pred_region
        %p231 = scmp.lt.s32.totalorder %s13, 1
        %s232 = scalar_select %p231, %s13, 1
        %s233 = smul.addr %s232, 8
        %s234 = smul.addr %s233, 8
        %s235 = scalar_lea.vmem %s0, %s234
      $region44: #{_lambda_.3} parent=39 // pred_fallthru
        _
    $region40: #{_lambda_.3} parent=5 // pred_fallthru
      _
    %p236 = scmp.le.s32.totalorder 1, %s13
    %p237 = scmp.lt.s32.totalorder %s13, 3
    %p238 = pnand %p236, %p237
    %p239 = pneg %p238
    // Predicated region
    $region45: #{_lambda_.3} parent=5 // pred_check
      _
    $region46: #{_lambda_.3} parent=5 // pred_check_branch
      %241 = sbr.rel (%p238) target = $region48
    $region47: #{_lambda_.3} parent=5 // pred_region
      %s242 = ssub.s32 %s13, 1
      %p243 = scmp.lt.s32.totalorder %s18, 1
      %s244 = scalar_select %p243, %s18, 1
      %s245 = smul.addr %s244, 8
      %s246 = smul.addr %s245, 8
      %s247 = scalar_lea.vmem %s0, %s246
      %p248 = pneg %p39
      %p249 = pneg %p36
      %p250 = pneg %p60
      %p251 = pneg %p57
      %p252 = pneg %p81
      %p253 = pneg %p78
      %p254 = pneg %p102
      %p255 = pneg %p99
      %p256 = pneg %p123
      %p257 = pneg %p120
      %p258 = pneg %p144
      %p259 = pneg %p141
      %p260 = pneg %p165
      %p261 = pneg %p162
      %p262 = pneg %p191
      %p263 = pneg %p188
      %p264 = scmp.lt.s32.totalorder %s18, 1
      %s265 = scalar_select %p264, %s18, 1
      %s266 = smul.addr %s265, 8
      %s267 = smul.addr %s266, 8
      %s268 = scalar_lea.vmem %s7, %s267
      %p269 = scmp.lt.s32.totalorder %s18, 1
      %s270 = scalar_select %p269, %s18, 1
      %s271 = smul.addr %s270, 8
      %s272 = smul.addr %s271, 8
      %s273 = scalar_lea.vmem %s0, %s272
      %p274 = scmp.lt.s32.totalorder %s18, 1
      %s275 = scalar_select %p274, %s18, 1
      %s276 = smul.addr %s275, 8
      %s277 = smul.addr %s276, 8
      %s278 = scalar_lea.vmem %s7, %s277
      %v280 = vld [vmem:[%s273] sm:$0xff]
      %v281 = vld [vmem:[%s273 + $0x8] sm:$0xff]
      %v282 = vld [vmem:[%s273 + $0x10] sm:$0xff]
      %v283 = vld [vmem:[%s273 + $0x18] sm:$0xff]
      %v284 = vld [vmem:[%s273 + $0x20] sm:$0xff]
      %v285 = vld [vmem:[%s273 + $0x28] sm:$0xff]
      %v286 = vld [vmem:[%s273 + $0x30] sm:$0xff]
      %v287 = vld [vmem:[%s273 + $0x38] sm:$0xff]
      %v288 = vpack.c.bf16 %v281, %v280
      %v289 = vpack.c.bf16 %v283, %v282
      %v290 = vpack.c.bf16 %v285, %v284
      %v291 = vpack.c.bf16 %v287, %v286
      %v292 = vld [vmem:[%s1] sm:$0xf]
      %v293 = vld [vmem:[%s1 + $0x4] sm:$0xf]
      %v294 = vld [vmem:[%s2] sm:$0x1]
      %v296 = vlaneseq
      %v297 = vshrl.u32 %v296, 7
      %v298 = vsub.s32 0, %v297
      %v299 = vrot.slane %v294, %v298
      %v303 = vunpack.c.l.b16 %v292
      %v304 = vunpack.c.l.b16 %v293
      %v305 = vpack.c.b16 %v304, %v303
      %vm307 = vcmask 130048
      %v309 = vsel %vm307, %v288, 0
      %v312 = vsel %vm307, %v289, 0
      %v315 = vsel %vm307, %v290, 0
      %v318 = vsel %vm307, %v291, 0
      %320 = vmatprep.subr.bf16.mxu0 0
      %321 = vmatpush1.bf16.msra.mxu0 %v305
      %322 = vmatprep.subr.bf16.mxu0 0
      %323 = vmatpush1.bf16.msra.mxu0 0
      %324 = vmatprep.subr.bf16.mxu0 0
      %325 = vmatpush1.bf16.msra.mxu0 0
      %326 = vmatprep.subr.bf16.mxu0 0
      %327 = vmatpush1.bf16.msra.mxu0 0
      %328 = vmatprep.subr.bf16.mxu0 0
      %329 = vmatpush1.bf16.msra.mxu0 0
      %330 = vmatprep.subr.bf16.mxu0 0
      %331 = vmatpush1.bf16.msra.mxu0 0
      %332 = vmatprep.subr.bf16.mxu0 0
      %333 = vmatpush1.bf16.msra.mxu0 0
      %334 = vmatprep.subr.bf16.mxu0 0
      %335 = vmatpush1.bf16.msra.mxu0 0
      %336 = vmatprep.subr.bf16.mxu0 0
      %337 = vmatpush1.bf16.msra.mxu0 0
      %338 = vmatprep.subr.bf16.mxu0 0
      %339 = vmatpush1.bf16.msra.mxu0 0
      %340 = vmatprep.subr.bf16.mxu0 0
      %341 = vmatpush1.bf16.msra.mxu0 0
      %342 = vmatprep.subr.bf16.mxu0 0
      %343 = vmatpush1.bf16.msra.mxu0 0
      %344 = vmatprep.subr.bf16.mxu0 0
      %345 = vmatpush1.bf16.msra.mxu0 0
      %346 = vmatprep.subr.bf16.mxu0 0
      %347 = vmatpush1.bf16.msra.mxu0 0
      %348 = vmatprep.subr.bf16.mxu0 0
      %349 = vmatpush1.bf16.msra.mxu0 0
      %350 = vmatprep.subr.bf16.mxu0 0
      %351 = vmatpush1.bf16.msra.mxu0 0
      %352 = vmatprep.mubr.bf16.mxu0 0
      %353 = vmatmul.mubr.bf16.gmra.mrb[0].mxu0 %v309
      %v354 = vpop.f32.mrb[0].mxu0
      %v355 = vadd.f32 %v299, %v354
      %v356 = vpop.f32.mrb[0].mxu0
      %v357 = vpop.f32.mrb[0].mxu0
      %v358 = vadd.f32 %v299, %v357
      %v359 = vpop.f32.mrb[0].mxu0
      %360 = vmatprep.mubr.bf16.mxu0 0
      %361 = vmatmul.mubr.bf16.gmra.mrb[0].mxu0 %v312
      %v362 = vpop.f32.mrb[0].mxu0
      %v363 = vadd.f32 %v299, %v362
      %v364 = vpop.f32.mrb[0].mxu0
      %v365 = vpop.f32.mrb[0].mxu0
      %v366 = vadd.f32 %v299, %v365
      %v367 = vpop.f32.mrb[0].mxu0
      %368 = vmatprep.mubr.bf16.mxu0 0
      %369 = vmatmul.mubr.bf16.gmra.mrb[0].mxu0 %v315
      %v370 = vpop.f32.mrb[0].mxu0
      %v371 = vadd.f32 %v299, %v370
      %v372 = vpop.f32.mrb[0].mxu0
      %v373 = vpop.f32.mrb[0].mxu0
      %v374 = vadd.f32 %v299, %v373
      %v375 = vpop.f32.mrb[0].mxu0
      %376 = vmatprep.mubr.bf16.mxu0 0
      %377 = vmatmul.mubr.bf16.gmra.mrb[0].mxu0 %v318
      %v378 = vpop.f32.mrb[0].mxu0
      %v379 = vadd.f32 %v299, %v378
      %v380 = vpop.f32.mrb[0].mxu0
      %v381 = vpop.f32.mrb[0].mxu0
      %v382 = vadd.f32 %v299, %v381
      %v383 = vpop.f32.mrb[0].mxu0
      %384 = vdwg.mxu0
      %v385 = vmax.f32 %v355, 0.0
      %v386 = vmax.f32 %v358, 0.0
      %v387 = vmax.f32 %v363, 0.0
      %v388 = vmax.f32 %v366, 0.0
      %v389 = vmax.f32 %v371, 0.0
      %v390 = vmax.f32 %v374, 0.0
      %v391 = vmax.f32 %v379, 0.0
      %v392 = vmax.f32 %v382, 0.0
      %393 = vst [vmem:[#allocation2] sm:$0xff] 0.0
      %394 = vst [vmem:[#allocation2 + $0x8] sm:$0xf] 0.0
      %395 = vst [vmem:[#allocation2 + $0x10] sm:$0xff] 0.0
      %396 = vst [vmem:[#allocation2 + $0x18] sm:$0xf] 0.0
      %s397 = scalar_lea.vmem [#allocation2], 160
      %398 = vst [vmem:[%s397] sm:$0xff] 0.0
      %399 = vst [vmem:[%s397 + $0x8] sm:$0xf] 0.0
      %400 = vst [vmem:[%s397 + $0x10] sm:$0xff] 0.0
      %401 = vst [vmem:[%s397 + $0x18] sm:$0xf] 0.0
      %s402 = scalar_lea.vmem [#allocation2], 32
      %403 = vst [vmem:[%s402] sm:$0x3] 0.0
      %404 = vst [vmem:[%s402 + $0x10] sm:$0x3] 0.0
      %405 = vst [vmem:[%s402 + $0x20] sm:$0x3] 0.0
      %406 = vst [vmem:[%s402 + $0x30] sm:$0x3] 0.0
      %407 = vst [vmem:[%s402 + $0x40] sm:$0x3] 0.0
      %408 = vst [vmem:[%s402 + $0x50] sm:$0x3] 0.0
      %409 = vst [vmem:[%s402 + $0x60] sm:$0x3] 0.0
      %410 = vst [vmem:[%s402 + $0x70] sm:$0x3] 0.0
      %411 = vst [vmem:[%s402 + $0xa] sm:$0x3] 0.0
      %412 = vst [vmem:[%s402 + $0x1a] sm:$0x3] 0.0
      %413 = vst [vmem:[%s402 + $0x2a] sm:$0x3] 0.0
      %414 = vst [vmem:[%s402 + $0x3a] sm:$0x3] 0.0
      %415 = vst [vmem:[%s402 + $0x4a] sm:$0x3] 0.0
      %416 = vst [vmem:[%s402 + $0x5a] sm:$0x3] 0.0
      %417 = vst [vmem:[%s402 + $0x6a] sm:$0x3] 0.0
      %418 = vst [vmem:[%s402 + $0x7a] sm:$0x3] 0.0
      %419 = vst [vmem:[%s402 + $0x2] sm:$0xff] %v385
      %420 = vst [vmem:[%s402 + $0x12] sm:$0xff] %v386
      %421 = vst [vmem:[%s402 + $0x22] sm:$0xff] %v387
      %422 = vst [vmem:[%s402 + $0x32] sm:$0xff] %v388
      %423 = vst [vmem:[%s402 + $0x42] sm:$0xff] %v389
      %424 = vst [vmem:[%s402 + $0x52] sm:$0xff] %v390
      %425 = vst [vmem:[%s402 + $0x62] sm:$0xff] %v391
      %426 = vst [vmem:[%s402 + $0x72] sm:$0xff] %v392
      %v427 = vld [vmem:[%s3] sm:$0xff]
      %v428 = vld [vmem:[%s3 + $0x8] sm:$0xff]
      %v429 = vld [vmem:[%s3 + $0x10] sm:$0xff]
      %v430 = vld [vmem:[%s3 + $0x18] sm:$0x1]
      %v431 = vld [vmem:[%s4] sm:$0x1]
      %v432 = vld [vmem:[#allocation2] sm:$0xff]
      %v433 = vld [vmem:[#allocation2 + $0x10] sm:$0xff]
      %v434 = vld [vmem:[#allocation2 + $0x20] sm:$0xff]
      %v435 = vld [vmem:[#allocation2 + $0x30] sm:$0xff]
      %v436 = vld [vmem:[#allocation2 + $0x40] sm:$0xff]
      %v437 = vld [vmem:[#allocation2 + $0x50] sm:$0xff]
      %v438 = vld [vmem:[#allocation2 + $0x60] sm:$0xff]
      %v439 = vld [vmem:[#allocation2 + $0x70] sm:$0xff]
      %v440 = vlaneseq
      %v441 = vshrl.u32 %v440, 7
      %v442 = vsub.s32 0, %v441
      %v443 = vrot.slane %v427, %v442
      %v444 = vmul.f32 %v432, %v443
      %v445 = vmul.f32 %v433, %v443
      %v446 = vmul.f32 %v434, %v443
      %v447 = vmul.f32 %v435, %v443
      %v448 = vmul.f32 %v436, %v443
      %v449 = vmul.f32 %v437, %v443
      %v450 = vmul.f32 %v438, %v443
      %v451 = vmul.f32 %v439, %v443
      %v452 = vld [vmem:[#allocation2 + $0x1] sm:$0xff]
      %v453 = vld [vmem:[#allocation2 + $0x11] sm:$0xff]
      %v454 = vld [vmem:[#allocation2 + $0x21] sm:$0xff]
      %v455 = vld [vmem:[#allocation2 + $0x31] sm:$0xff]
      %v456 = vld [vmem:[#allocation2 + $0x41] sm:$0xff]
      %v457 = vld [vmem:[#allocation2 + $0x51] sm:$0xff]
      %v458 = vld [vmem:[#allocation2 + $0x61] sm:$0xff]
      %v459 = vld [vmem:[#allocation2 + $0x71] sm:$0xff]
      %v460 = vlaneseq
      %v461 = vshrl.u32 %v460, 7
      %v462 = vsub.s32 1, %v461
      %v463 = vrot.slane %v427, %v462
      %v464 = vmul.f32 %v452, %v463
      %v465 = vmul.f32 %v453, %v463
      %v466 = vmul.f32 %v454, %v463
      %v467 = vmul.f32 %v455, %v463
      %v468 = vmul.f32 %v456, %v463
      %v469 = vmul.f32 %v457, %v463
      %v470 = vmul.f32 %v458, %v463
      %v471 = vmul.f32 %v459, %v463
      %v472 = vadd.f32 %v444, %v464
      %v473 = vadd.f32 %v445, %v465
      %v474 = vadd.f32 %v446, %v466
      %v475 = vadd.f32 %v447, %v467
      %v476 = vadd.f32 %v448, %v468
      %v477 = vadd.f32 %v449, %v469
      %v478 = vadd.f32 %v450, %v470
      %v479 = vadd.f32 %v451, %v471
      %v480 = vld [vmem:[#allocation2 + $0x2] sm:$0xff]
      %v481 = vld [vmem:[#allocation2 + $0x12] sm:$0xff]
      %v482 = vld [vmem:[#allocation2 + $0x22] sm:$0xff]
      %v483 = vld [vmem:[#allocation2 + $0x32] sm:$0xff]
      %v484 = vld [vmem:[#allocation2 + $0x42] sm:$0xff]
      %v485 = vld [vmem:[#allocation2 + $0x52] sm:$0xff]
      %v486 = vld [vmem:[#allocation2 + $0x62] sm:$0xff]
      %v487 = vld [vmem:[#allocation2 + $0x72] sm:$0xff]
      %v488 = vlaneseq
      %v489 = vshrl.u32 %v488, 7
      %v490 = vsub.s32 2, %v489
      %v491 = vrot.slane %v427, %v490
      %v492 = vmul.f32 %v480, %v491
      %v493 = vmul.f32 %v481, %v491
      %v494 = vmul.f32 %v482, %v491
      %v495 = vmul.f32 %v483, %v491
      %v496 = vmul.f32 %v484, %v491
      %v497 = vmul.f32 %v485, %v491
      %v498 = vmul.f32 %v486, %v491
      %v499 = vmul.f32 %v487, %v491
      %v500 = vadd.f32 %v472, %v492
      %v501 = vadd.f32 %v473, %v493
      %v502 = vadd.f32 %v474, %v494
      %v503 = vadd.f32 %v475, %v495
      %v504 = vadd.f32 %v476, %v496
      %v505 = vadd.f32 %v477, %v497
      %v506 = vadd.f32 %v478, %v498
      %v507 = vadd.f32 %v479, %v499
      %v508 = vld [vmem:[#allocation2 + $0x3] sm:$0xff]
      %v509 = vld [vmem:[#allocation2 + $0x13] sm:$0xff]
      %v510 = vld [vmem:[#allocation2 + $0x23] sm:$0xff]
      %v511 = vld [vmem:[#allocation2 + $0x33] sm:$0xff]
      %v512 = vld [vmem:[#allocation2 + $0x43] sm:$0xff]
      %v513 = vld [vmem:[#allocation2 + $0x53] sm:$0xff]
      %v514 = vld [vmem:[#allocation2 + $0x63] sm:$0xff]
      %v515 = vld [vmem:[#allocation2 + $0x73] sm:$0xff]
      %v516 = vlaneseq
      %v517 = vshrl.u32 %v516, 7
      %v518 = vsub.s32 3, %v517
      %v519 = vrot.slane %v427, %v518
      %v520 = vmul.f32 %v508, %v519
      %v521 = vmul.f32 %v509, %v519
      %v522 = vmul.f32 %v510, %v519
      %v523 = vmul.f32 %v511, %v519
      %v524 = vmul.f32 %v512, %v519
      %v525 = vmul.f32 %v513, %v519
      %v526 = vmul.f32 %v514, %v519
      %v527 = vmul.f32 %v515, %v519
      %v528 = vadd.f32 %v500, %v520
      %v529 = vadd.f32 %v501, %v521
      %v530 = vadd.f32 %v502, %v522
      %v531 = vadd.f32 %v503, %v523
      %v532 = vadd.f32 %v504, %v524
      %v533 = vadd.f32 %v505, %v525
      %v534 = vadd.f32 %v506, %v526
      %v535 = vadd.f32 %v507, %v527
      %v536 = vld [vmem:[#allocation2 + $0x4] sm:$0xff]
      %v537 = vld [vmem:[#allocation2 + $0x14] sm:$0xff]
      %v538 = vld [vmem:[#allocation2 + $0x24] sm:$0xff]
      %v539 = vld [vmem:[#allocation2 + $0x34] sm:$0xff]
      %v540 = vld [vmem:[#allocation2 + $0x44] sm:$0xff]
      %v541 = vld [vmem:[#allocation2 + $0x54] sm:$0xff]
      %v542 = vld [vmem:[#allocation2 + $0x64] sm:$0xff]
      %v543 = vld [vmem:[#allocation2 + $0x74] sm:$0xff]
      %v544 = vlaneseq
      %v545 = vshrl.u32 %v544, 7
      %v546 = vsub.s32 4, %v545
      %v547 = vrot.slane %v427, %v546
      %v548 = vmul.f32 %v536, %v547
      %v549 = vmul.f32 %v537, %v547
      %v550 = vmul.f32 %v538, %v547
      %v551 = vmul.f32 %v539, %v547
      %v552 = vmul.f32 %v540, %v547
      %v553 = vmul.f32 %v541, %v547
      %v554 = vmul.f32 %v542, %v547
      %v555 = vmul.f32 %v543, %v547
      %v556 = vadd.f32 %v528, %v548
      %v557 = vadd.f32 %v529, %v549
      %v558 = vadd.f32 %v530, %v550
      %v559 = vadd.f32 %v531, %v551
      %v560 = vadd.f32 %v532, %v552
      %v561 = vadd.f32 %v533, %v553
      %v562 = vadd.f32 %v534, %v554
      %v563 = vadd.f32 %v535, %v555
      %s564 = scalar_lea.vmem [#allocation2], 16
      %v565 = vld [vmem:[%s564] sm:$0xff]
      %v566 = vld [vmem:[%s564 + $0x10] sm:$0xff]
      %v567 = vld [vmem:[%s564 + $0x20] sm:$0xff]
      %v568 = vld [vmem:[%s564 + $0x30] sm:$0xff]
      %v569 = vld [vmem:[%s564 + $0x40] sm:$0xff]
      %v570 = vld [vmem:[%s564 + $0x50] sm:$0xff]
      %v571 = vld [vmem:[%s564 + $0x60] sm:$0xff]
      %v572 = vld [vmem:[%s564 + $0x70] sm:$0xff]
      %v573 = vlaneseq
      %v574 = vshrl.u32 %v573, 7
      %v575 = vsub.s32 5, %v574
      %v576 = vrot.slane %v427, %v575
      %v577 = vmul.f32 %v565, %v576
      %v578 = vmul.f32 %v566, %v576
      %v579 = vmul.f32 %v567, %v576
      %v580 = vmul.f32 %v568, %v576
      %v581 = vmul.f32 %v569, %v576
      %v582 = vmul.f32 %v570, %v576
      %v583 = vmul.f32 %v571, %v576
      %v584 = vmul.f32 %v572, %v576
      %v585 = vadd.f32 %v556, %v577
      %v586 = vadd.f32 %v557, %v578
      %v587 = vadd.f32 %v558, %v579
      %v588 = vadd.f32 %v559, %v580
      %v589 = vadd.f32 %v560, %v581
      %v590 = vadd.f32 %v561, %v582
      %v591 = vadd.f32 %v562, %v583
      %v592 = vadd.f32 %v563, %v584
      %v593 = vld [vmem:[%s564 + $0x1] sm:$0xff]
      %v594 = vld [vmem:[%s564 + $0x11] sm:$0xff]
      %v595 = vld [vmem:[%s564 + $0x21] sm:$0xff]
      %v596 = vld [vmem:[%s564 + $0x31] sm:$0xff]
      %v597 = vld [vmem:[%s564 + $0x41] sm:$0xff]
      %v598 = vld [vmem:[%s564 + $0x51] sm:$0xff]
      %v599 = vld [vmem:[%s564 + $0x61] sm:$0xff]
      %v600 = vld [vmem:[%s564 + $0x71] sm:$0xff]
      %v601 = vlaneseq
      %v602 = vshrl.u32 %v601, 7
      %v603 = vsub.s32 6, %v602
      %v604 = vrot.slane %v427, %v603
      %v605 = vmul.f32 %v593, %v604
      %v606 = vmul.f32 %v594, %v604
      %v607 = vmul.f32 %v595, %v604
      %v608 = vmul.f32 %v596, %v604
      %v609 = vmul.f32 %v597, %v604
      %v610 = vmul.f32 %v598, %v604
      %v611 = vmul.f32 %v599, %v604
      %v612 = vmul.f32 %v600, %v604
      %v613 = vadd.f32 %v585, %v605
      %v614 = vadd.f32 %v586, %v606
      %v615 = vadd.f32 %v587, %v607
      %v616 = vadd.f32 %v588, %v608
      %v617 = vadd.f32 %v589, %v609
      %v618 = vadd.f32 %v590, %v610
      %v619 = vadd.f32 %v591, %v611
      %v620 = vadd.f32 %v592, %v612
      %v621 = vld [vmem:[%s564 + $0x2] sm:$0xff]
      %v622 = vld [vmem:[%s564 + $0x12] sm:$0xff]
      %v623 = vld [vmem:[%s564 + $0x22] sm:$0xff]
      %v624 = vld [vmem:[%s564 + $0x32] sm:$0xff]
      %v625 = vld [vmem:[%s564 + $0x42] sm:$0xff]
      %v626 = vld [vmem:[%s564 + $0x52] sm:$0xff]
      %v627 = vld [vmem:[%s564 + $0x62] sm:$0xff]
      %v628 = vld [vmem:[%s564 + $0x72] sm:$0xff]
      %v629 = vlaneseq
      %v630 = vshrl.u32 %v629, 7
      %v631 = vsub.s32 7, %v630
      %v632 = vrot.slane %v427, %v631
      %v633 = vmul.f32 %v621, %v632
      %v634 = vmul.f32 %v622, %v632
      %v635 = vmul.f32 %v623, %v632
      %v636 = vmul.f32 %v624, %v632
      %v637 = vmul.f32 %v625, %v632
      %v638 = vmul.f32 %v626, %v632
      %v639 = vmul.f32 %v627, %v632
      %v640 = vmul.f32 %v628, %v632
      %v641 = vadd.f32 %v613, %v633
      %v642 = vadd.f32 %v614, %v634
      %v643 = vadd.f32 %v615, %v635
      %v644 = vadd.f32 %v616, %v636
      %v645 = vadd.f32 %v617, %v637
      %v646 = vadd.f32 %v618, %v638
      %v647 = vadd.f32 %v619, %v639
      %v648 = vadd.f32 %v620, %v640
      %v649 = vld [vmem:[%s564 + $0x3] sm:$0xff]
      %v650 = vld [vmem:[%s564 + $0x13] sm:$0xff]
      %v651 = vld [vmem:[%s564 + $0x23] sm:$0xff]
      %v652 = vld [vmem:[%s564 + $0x33] sm:$0xff]
      %v653 = vld [vmem:[%s564 + $0x43] sm:$0xff]
      %v654 = vld [vmem:[%s564 + $0x53] sm:$0xff]
      %v655 = vld [vmem:[%s564 + $0x63] sm:$0xff]
      %v656 = vld [vmem:[%s564 + $0x73] sm:$0xff]
      %v657 = vlaneseq
      %v658 = vshrl.u32 %v657, 7
      %v659 = vsub.s32 0, %v658
      %v660 = vrot.slane %v428, %v659
      %v661 = vmul.f32 %v649, %v660
      %v662 = vmul.f32 %v650, %v660
      %v663 = vmul.f32 %v651, %v660
      %v664 = vmul.f32 %v652, %v660
      %v665 = vmul.f32 %v653, %v660
      %v666 = vmul.f32 %v654, %v660
      %v667 = vmul.f32 %v655, %v660
      %v668 = vmul.f32 %v656, %v660
      %v669 = vadd.f32 %v641, %v661
      %v670 = vadd.f32 %v642, %v662
      %v671 = vadd.f32 %v643, %v663
      %v672 = vadd.f32 %v644, %v664
      %v673 = vadd.f32 %v645, %v665
      %v674 = vadd.f32 %v646, %v666
      %v675 = vadd.f32 %v647, %v667
      %v676 = vadd.f32 %v648, %v668
      %v677 = vld [vmem:[%s564 + $0x4] sm:$0xff]
      %v678 = vld [vmem:[%s564 + $0x14] sm:$0xff]
      %v679 = vld [vmem:[%s564 + $0x24] sm:$0xff]
      %v680 = vld [vmem:[%s564 + $0x34] sm:$0xff]
      %v681 = vld [vmem:[%s564 + $0x44] sm:$0xff]
      %v682 = vld [vmem:[%s564 + $0x54] sm:$0xff]
      %v683 = vld [vmem:[%s564 + $0x64] sm:$0xff]
      %v684 = vld [vmem:[%s564 + $0x74] sm:$0xff]
      %v685 = vlaneseq
      %v686 = vshrl.u32 %v685, 7
      %v687 = vsub.s32 1, %v686
      %v688 = vrot.slane %v428, %v687
      %v689 = vmul.f32 %v677, %v688
      %v690 = vmul.f32 %v678, %v688
      %v691 = vmul.f32 %v679, %v688
      %v692 = vmul.f32 %v680, %v688
      %v693 = vmul.f32 %v681, %v688
      %v694 = vmul.f32 %v682, %v688
      %v695 = vmul.f32 %v683, %v688
      %v696 = vmul.f32 %v684, %v688
      %v697 = vadd.f32 %v669, %v689
      %v698 = vadd.f32 %v670, %v690
      %v699 = vadd.f32 %v671, %v691
      %v700 = vadd.f32 %v672, %v692
      %v701 = vadd.f32 %v673, %v693
      %v702 = vadd.f32 %v674, %v694
      %v703 = vadd.f32 %v675, %v695
      %v704 = vadd.f32 %v676, %v696
      %v705 = vld [vmem:[%s402] sm:$0xff]
      %v706 = vld [vmem:[%s402 + $0x10] sm:$0xff]
      %v707 = vld [vmem:[%s402 + $0x20] sm:$0xff]
      %v708 = vld [vmem:[%s402 + $0x30] sm:$0xff]
      %v709 = vld [vmem:[%s402 + $0x40] sm:$0xff]
      %v710 = vld [vmem:[%s402 + $0x50] sm:$0xff]
      %v711 = vld [vmem:[%s402 + $0x60] sm:$0xff]
      %v712 = vld [vmem:[%s402 + $0x70] sm:$0xff]
      %v713 = vlaneseq
      %v714 = vshrl.u32 %v713, 7
      %v715 = vsub.s32 2, %v714
      %v716 = vrot.slane %v428, %v715
      %v717 = vmul.f32 %v705, %v716
      %v718 = vmul.f32 %v706, %v716
      %v719 = vmul.f32 %v707, %v716
      %v720 = vmul.f32 %v708, %v716
      %v721 = vmul.f32 %v709, %v716
      %v722 = vmul.f32 %v710, %v716
      %v723 = vmul.f32 %v711, %v716
      %v724 = vmul.f32 %v712, %v716
      %v725 = vadd.f32 %v697, %v717
      %v726 = vadd.f32 %v698, %v718
      %v727 = vadd.f32 %v699, %v719
      %v728 = vadd.f32 %v700, %v720
      %v729 = vadd.f32 %v701, %v721
      %v730 = vadd.f32 %v702, %v722
      %v731 = vadd.f32 %v703, %v723
      %v732 = vadd.f32 %v704, %v724
      %v733 = vld [vmem:[%s402 + $0x1] sm:$0xff]
      %v734 = vld [vmem:[%s402 + $0x11] sm:$0xff]
      %v735 = vld [vmem:[%s402 + $0x21] sm:$0xff]
      %v736 = vld [vmem:[%s402 + $0x31] sm:$0xff]
      %v737 = vld [vmem:[%s402 + $0x41] sm:$0xff]
      %v738 = vld [vmem:[%s402 + $0x51] sm:$0xff]
      %v739 = vld [vmem:[%s402 + $0x61] sm:$0xff]
      %v740 = vld [vmem:[%s402 + $0x71] sm:$0xff]
      %v741 = vlaneseq
      %v742 = vshrl.u32 %v741, 7
      %v743 = vsub.s32 3, %v742
      %v744 = vrot.slane %v428, %v743
      %v745 = vmul.f32 %v733, %v744
      %v746 = vmul.f32 %v734, %v744
      %v747 = vmul.f32 %v735, %v744
      %v748 = vmul.f32 %v736, %v744
      %v749 = vmul.f32 %v737, %v744
      %v750 = vmul.f32 %v738, %v744
      %v751 = vmul.f32 %v739, %v744
      %v752 = vmul.f32 %v740, %v744
      %v753 = vadd.f32 %v725, %v745
      %v754 = vadd.f32 %v726, %v746
      %v755 = vadd.f32 %v727, %v747
      %v756 = vadd.f32 %v728, %v748
      %v757 = vadd.f32 %v729, %v749
      %v758 = vadd.f32 %v730, %v750
      %v759 = vadd.f32 %v731, %v751
      %v760 = vadd.f32 %v732, %v752
      %v761 = vld [vmem:[%s402 + $0x2] sm:$0xff]
      %v762 = vld [vmem:[%s402 + $0x12] sm:$0xff]
      %v763 = vld [vmem:[%s402 + $0x22] sm:$0xff]
      %v764 = vld [vmem:[%s402 + $0x32] sm:$0xff]
      %v765 = vld [vmem:[%s402 + $0x42] sm:$0xff]
      %v766 = vld [vmem:[%s402 + $0x52] sm:$0xff]
      %v767 = vld [vmem:[%s402 + $0x62] sm:$0xff]
      %v768 = vld [vmem:[%s402 + $0x72] sm:$0xff]
      %v769 = vlaneseq
      %v770 = vshrl.u32 %v769, 7
      %v771 = vsub.s32 4, %v770
      %v772 = vrot.slane %v428, %v771
      %v773 = vmul.f32 %v761, %v772
      %v774 = vmul.f32 %v762, %v772
      %v775 = vmul.f32 %v763, %v772
      %v776 = vmul.f32 %v764, %v772
      %v777 = vmul.f32 %v765, %v772
      %v778 = vmul.f32 %v766, %v772
      %v779 = vmul.f32 %v767, %v772
      %v780 = vmul.f32 %v768, %v772
      %v781 = vadd.f32 %v753, %v773
      %v782 = vadd.f32 %v754, %v774
      %v783 = vadd.f32 %v755, %v775
      %v784 = vadd.f32 %v756, %v776
      %v785 = vadd.f32 %v757, %v777
      %v786 = vadd.f32 %v758, %v778
      %v787 = vadd.f32 %v759, %v779
      %v788 = vadd.f32 %v760, %v780
      %v789 = vld [vmem:[%s402 + $0x3] sm:$0xff]
      %v790 = vld [vmem:[%s402 + $0x13] sm:$0xff]
      %v791 = vld [vmem:[%s402 + $0x23] sm:$0xff]
      %v792 = vld [vmem:[%s402 + $0x33] sm:$0xff]
      %v793 = vld [vmem:[%s402 + $0x43] sm:$0xff]
      %v794 = vld [vmem:[%s402 + $0x53] sm:$0xff]
      %v795 = vld [vmem:[%s402 + $0x63] sm:$0xff]
      %v796 = vld [vmem:[%s402 + $0x73] sm:$0xff]
      %v797 = vlaneseq
      %v798 = vshrl.u32 %v797, 7
      %v799 = vsub.s32 5, %v798
      %v800 = vrot.slane %v428, %v799
      %v801 = vmul.f32 %v789, %v800
      %v802 = vmul.f32 %v790, %v800
      %v803 = vmul.f32 %v791, %v800
      %v804 = vmul.f32 %v792, %v800
      %v805 = vmul.f32 %v793, %v800
      %v806 = vmul.f32 %v794, %v800
      %v807 = vmul.f32 %v795, %v800
      %v808 = vmul.f32 %v796, %v800
      %v809 = vadd.f32 %v781, %v801
      %v810 = vadd.f32 %v782, %v802
      %v811 = vadd.f32 %v783, %v803
      %v812 = vadd.f32 %v784, %v804
      %v813 = vadd.f32 %v785, %v805
      %v814 = vadd.f32 %v786, %v806
      %v815 = vadd.f32 %v787, %v807
      %v816 = vadd.f32 %v788, %v808
      %v817 = vld [vmem:[%s402 + $0x4] sm:$0xff]
      %v818 = vld [vmem:[%s402 + $0x14] sm:$0xff]
      %v819 = vld [vmem:[%s402 + $0x24] sm:$0xff]
      %v820 = vld [vmem:[%s402 + $0x34] sm:$0xff]
      %v821 = vld [vmem:[%s402 + $0x44] sm:$0xff]
      %v822 = vld [vmem:[%s402 + $0x54] sm:$0xff]
      %v823 = vld [vmem:[%s402 + $0x64] sm:$0xff]
      %v824 = vld [vmem:[%s402 + $0x74] sm:$0xff]
      %v825 = vlaneseq
      %v826 = vshrl.u32 %v825, 7
      %v827 = vsub.s32 6, %v826
      %v828 = vrot.slane %v428, %v827
      %v829 = vmul.f32 %v817, %v828
      %v830 = vmul.f32 %v818, %v828
      %v831 = vmul.f32 %v819, %v828
      %v832 = vmul.f32 %v820, %v828
      %v833 = vmul.f32 %v821, %v828
      %v834 = vmul.f32 %v822, %v828
      %v835 = vmul.f32 %v823, %v828
      %v836 = vmul.f32 %v824, %v828
      %v837 = vadd.f32 %v809, %v829
      %v838 = vadd.f32 %v810, %v830
      %v839 = vadd.f32 %v811, %v831
      %v840 = vadd.f32 %v812, %v832
      %v841 = vadd.f32 %v813, %v833
      %v842 = vadd.f32 %v814, %v834
      %v843 = vadd.f32 %v815, %v835
      %v844 = vadd.f32 %v816, %v836
      %s845 = scalar_lea.vmem [#allocation2], 48
      %v846 = vld [vmem:[%s845] sm:$0xff]
      %v847 = vld [vmem:[%s845 + $0x10] sm:$0xff]
      %v848 = vld [vmem:[%s845 + $0x20] sm:$0xff]
      %v849 = vld [vmem:[%s845 + $0x30] sm:$0xff]
      %v850 = vld [vmem:[%s845 + $0x40] sm:$0xff]
      %v851 = vld [vmem:[%s845 + $0x50] sm:$0xff]
      %v852 = vld [vmem:[%s845 + $0x60] sm:$0xff]
      %v853 = vld [vmem:[%s845 + $0x70] sm:$0xff]
      %v854 = vlaneseq
      %v855 = vshrl.u32 %v854, 7
      %v856 = vsub.s32 7, %v855
      %v857 = vrot.slane %v428, %v856
      %v858 = vmul.f32 %v846, %v857
      %v859 = vmul.f32 %v847, %v857
      %v860 = vmul.f32 %v848, %v857
      %v861 = vmul.f32 %v849, %v857
      %v862 = vmul.f32 %v850, %v857
      %v863 = vmul.f32 %v851, %v857
      %v864 = vmul.f32 %v852, %v857
      %v865 = vmul.f32 %v853, %v857
      %v866 = vadd.f32 %v837, %v858
      %v867 = vadd.f32 %v838, %v859
      %v868 = vadd.f32 %v839, %v860
      %v869 = vadd.f32 %v840, %v861
      %v870 = vadd.f32 %v841, %v862
      %v871 = vadd.f32 %v842, %v863
      %v872 = vadd.f32 %v843, %v864
      %v873 = vadd.f32 %v844, %v865
      %v874 = vld [vmem:[%s845 + $0x1] sm:$0xff]
      %v875 = vld [vmem:[%s845 + $0x11] sm:$0xff]
      %v876 = vld [vmem:[%s845 + $0x21] sm:$0xff]
      %v877 = vld [vmem:[%s845 + $0x31] sm:$0xff]
      %v878 = vld [vmem:[%s845 + $0x41] sm:$0xff]
      %v879 = vld [vmem:[%s845 + $0x51] sm:$0xff]
      %v880 = vld [vmem:[%s845 + $0x61] sm:$0xff]
      %v881 = vld [vmem:[%s845 + $0x71] sm:$0xff]
      %v882 = vlaneseq
      %v883 = vshrl.u32 %v882, 7
      %v884 = vsub.s32 0, %v883
      %v885 = vrot.slane %v429, %v884
      %v886 = vmul.f32 %v874, %v885
      %v887 = vmul.f32 %v875, %v885
      %v888 = vmul.f32 %v876, %v885
      %v889 = vmul.f32 %v877, %v885
      %v890 = vmul.f32 %v878, %v885
      %v891 = vmul.f32 %v879, %v885
      %v892 = vmul.f32 %v880, %v885
      %v893 = vmul.f32 %v881, %v885
      %v894 = vadd.f32 %v866, %v886
      %v895 = vadd.f32 %v867, %v887
      %v896 = vadd.f32 %v868, %v888
      %v897 = vadd.f32 %v869, %v889
      %v898 = vadd.f32 %v870, %v890
      %v899 = vadd.f32 %v871, %v891
      %v900 = vadd.f32 %v872, %v892
      %v901 = vadd.f32 %v873, %v893
      %v902 = vld [vmem:[%s845 + $0x2] sm:$0xff]
      %v903 = vld [vmem:[%s845 + $0x12] sm:$0xff]
      %v904 = vld [vmem:[%s845 + $0x22] sm:$0xff]
      %v905 = vld [vmem:[%s845 + $0x32] sm:$0xff]
      %v906 = vld [vmem:[%s845 + $0x42] sm:$0xff]
      %v907 = vld [vmem:[%s845 + $0x52] sm:$0xff]
      %v908 = vld [vmem:[%s845 + $0x62] sm:$0xff]
      %v909 = vld [vmem:[%s845 + $0x72] sm:$0xff]
      %v910 = vlaneseq
      %v911 = vshrl.u32 %v910, 7
      %v912 = vsub.s32 1, %v911
      %v913 = vrot.slane %v429, %v912
      %v914 = vmul.f32 %v902, %v913
      %v915 = vmul.f32 %v903, %v913
      %v916 = vmul.f32 %v904, %v913
      %v917 = vmul.f32 %v905, %v913
      %v918 = vmul.f32 %v906, %v913
      %v919 = vmul.f32 %v907, %v913
      %v920 = vmul.f32 %v908, %v913
      %v921 = vmul.f32 %v909, %v913
      %v922 = vadd.f32 %v894, %v914
      %v923 = vadd.f32 %v895, %v915
      %v924 = vadd.f32 %v896, %v916
      %v925 = vadd.f32 %v897, %v917
      %v926 = vadd.f32 %v898, %v918
      %v927 = vadd.f32 %v899, %v919
      %v928 = vadd.f32 %v900, %v920
      %v929 = vadd.f32 %v901, %v921
      %v930 = vld [vmem:[%s845 + $0x3] sm:$0xff]
      %v931 = vld [vmem:[%s845 + $0x13] sm:$0xff]
      %v932 = vld [vmem:[%s845 + $0x23] sm:$0xff]
      %v933 = vld [vmem:[%s845 + $0x33] sm:$0xff]
      %v934 = vld [vmem:[%s845 + $0x43] sm:$0xff]
      %v935 = vld [vmem:[%s845 + $0x53] sm:$0xff]
      %v936 = vld [vmem:[%s845 + $0x63] sm:$0xff]
      %v937 = vld [vmem:[%s845 + $0x73] sm:$0xff]
      %v938 = vlaneseq
      %v939 = vshrl.u32 %v938, 7
      %v940 = vsub.s32 2, %v939
      %v941 = vrot.slane %v429, %v940
      %v942 = vmul.f32 %v930, %v941
      %v943 = vmul.f32 %v931, %v941
      %v944 = vmul.f32 %v932, %v941
      %v945 = vmul.f32 %v933, %v941
      %v946 = vmul.f32 %v934, %v941
      %v947 = vmul.f32 %v935, %v941
      %v948 = vmul.f32 %v936, %v941
      %v949 = vmul.f32 %v937, %v941
      %v950 = vadd.f32 %v922, %v942
      %v951 = vadd.f32 %v923, %v943
      %v952 = vadd.f32 %v924, %v944
      %v953 = vadd.f32 %v925, %v945
      %v954 = vadd.f32 %v926, %v946
      %v955 = vadd.f32 %v927, %v947
      %v956 = vadd.f32 %v928, %v948
      %v957 = vadd.f32 %v929, %v949
      %v958 = vld [vmem:[%s845 + $0x4] sm:$0xff]
      %v959 = vld [vmem:[%s845 + $0x14] sm:$0xff]
      %v960 = vld [vmem:[%s845 + $0x24] sm:$0xff]
      %v961 = vld [vmem:[%s845 + $0x34] sm:$0xff]
      %v962 = vld [vmem:[%s845 + $0x44] sm:$0xff]
      %v963 = vld [vmem:[%s845 + $0x54] sm:$0xff]
      %v964 = vld [vmem:[%s845 + $0x64] sm:$0xff]
      %v965 = vld [vmem:[%s845 + $0x74] sm:$0xff]
      %v966 = vlaneseq
      %v967 = vshrl.u32 %v966, 7
      %v968 = vsub.s32 3, %v967
      %v969 = vrot.slane %v429, %v968
      %v970 = vmul.f32 %v958, %v969
      %v971 = vmul.f32 %v959, %v969
      %v972 = vmul.f32 %v960, %v969
      %v973 = vmul.f32 %v961, %v969
      %v974 = vmul.f32 %v962, %v969
      %v975 = vmul.f32 %v963, %v969
      %v976 = vmul.f32 %v964, %v969
      %v977 = vmul.f32 %v965, %v969
      %v978 = vadd.f32 %v950, %v970
      %v979 = vadd.f32 %v951, %v971
      %v980 = vadd.f32 %v952, %v972
      %v981 = vadd.f32 %v953, %v973
      %v982 = vadd.f32 %v954, %v974
      %v983 = vadd.f32 %v955, %v975
      %v984 = vadd.f32 %v956, %v976
      %v985 = vadd.f32 %v957, %v977
      %s986 = scalar_lea.vmem [#allocation2], 64
      %v987 = vld [vmem:[%s986] sm:$0xff]
      %v988 = vld [vmem:[%s986 + $0x10] sm:$0xff]
      %v989 = vld [vmem:[%s986 + $0x20] sm:$0xff]
      %v990 = vld [vmem:[%s986 + $0x30] sm:$0xff]
      %v991 = vld [vmem:[%s986 + $0x40] sm:$0xff]
      %v992 = vld [vmem:[%s986 + $0x50] sm:$0xff]
      %v993 = vld [vmem:[%s986 + $0x60] sm:$0xff]
      %v994 = vld [vmem:[%s986 + $0x70] sm:$0xff]
      %v995 = vlaneseq
      %v996 = vshrl.u32 %v995, 7
      %v997 = vsub.s32 4, %v996
      %v998 = vrot.slane %v429, %v997
      %v999 = vmul.f32 %v987, %v998
      %v1000 = vmul.f32 %v988, %v998
      %v1001 = vmul.f32 %v989, %v998
      %v1002 = vmul.f32 %v990, %v998
      %v1003 = vmul.f32 %v991, %v998
      %v1004 = vmul.f32 %v992, %v998
      %v1005 = vmul.f32 %v993, %v998
      %v1006 = vmul.f32 %v994, %v998
      %v1007 = vadd.f32 %v978, %v999
      %v1008 = vadd.f32 %v979, %v1000
      %v1009 = vadd.f32 %v980, %v1001
      %v1010 = vadd.f32 %v981, %v1002
      %v1011 = vadd.f32 %v982, %v1003
      %v1012 = vadd.f32 %v983, %v1004
      %v1013 = vadd.f32 %v984, %v1005
      %v1014 = vadd.f32 %v985, %v1006
      %v1015 = vld [vmem:[%s986 + $0x1] sm:$0xff]
      %v1016 = vld [vmem:[%s986 + $0x11] sm:$0xff]
      %v1017 = vld [vmem:[%s986 + $0x21] sm:$0xff]
      %v1018 = vld [vmem:[%s986 + $0x31] sm:$0xff]
      %v1019 = vld [vmem:[%s986 + $0x41] sm:$0xff]
      %v1020 = vld [vmem:[%s986 + $0x51] sm:$0xff]
      %v1021 = vld [vmem:[%s986 + $0x61] sm:$0xff]
      %v1022 = vld [vmem:[%s986 + $0x71] sm:$0xff]
      %v1023 = vlaneseq
      %v1024 = vshrl.u32 %v1023, 7
      %v1025 = vsub.s32 5, %v1024
      %v1026 = vrot.slane %v429, %v1025
      %v1027 = vmul.f32 %v1015, %v1026
      %v1028 = vmul.f32 %v1016, %v1026
      %v1029 = vmul.f32 %v1017, %v1026
      %v1030 = vmul.f32 %v1018, %v1026
      %v1031 = vmul.f32 %v1019, %v1026
      %v1032 = vmul.f32 %v1020, %v1026
      %v1033 = vmul.f32 %v1021, %v1026
      %v1034 = vmul.f32 %v1022, %v1026
      %v1035 = vadd.f32 %v1007, %v1027
      %v1036 = vadd.f32 %v1008, %v1028
      %v1037 = vadd.f32 %v1009, %v1029
      %v1038 = vadd.f32 %v1010, %v1030
      %v1039 = vadd.f32 %v1011, %v1031
      %v1040 = vadd.f32 %v1012, %v1032
      %v1041 = vadd.f32 %v1013, %v1033
      %v1042 = vadd.f32 %v1014, %v1034
      %v1043 = vld [vmem:[%s986 + $0x2] sm:$0xff]
      %v1044 = vld [vmem:[%s986 + $0x12] sm:$0xff]
      %v1045 = vld [vmem:[%s986 + $0x22] sm:$0xff]
      %v1046 = vld [vmem:[%s986 + $0x32] sm:$0xff]
      %v1047 = vld [vmem:[%s986 + $0x42] sm:$0xff]
      %v1048 = vld [vmem:[%s986 + $0x52] sm:$0xff]
      %v1049 = vld [vmem:[%s986 + $0x62] sm:$0xff]
      %v1050 = vld [vmem:[%s986 + $0x72] sm:$0xff]
      %v1051 = vlaneseq
      %v1052 = vshrl.u32 %v1051, 7
      %v1053 = vsub.s32 6, %v1052
      %v1054 = vrot.slane %v429, %v1053
      %v1055 = vmul.f32 %v1043, %v1054
      %v1056 = vmul.f32 %v1044, %v1054
      %v1057 = vmul.f32 %v1045, %v1054
      %v1058 = vmul.f32 %v1046, %v1054
      %v1059 = vmul.f32 %v1047, %v1054
      %v1060 = vmul.f32 %v1048, %v1054
      %v1061 = vmul.f32 %v1049, %v1054
      %v1062 = vmul.f32 %v1050, %v1054
      %v1063 = vadd.f32 %v1035, %v1055
      %v1064 = vadd.f32 %v1036, %v1056
      %v1065 = vadd.f32 %v1037, %v1057
      %v1066 = vadd.f32 %v1038, %v1058
      %v1067 = vadd.f32 %v1039, %v1059
      %v1068 = vadd.f32 %v1040, %v1060
      %v1069 = vadd.f32 %v1041, %v1061
      %v1070 = vadd.f32 %v1042, %v1062
      %v1071 = vld [vmem:[%s986 + $0x3] sm:$0xff]
      %v1072 = vld [vmem:[%s986 + $0x13] sm:$0xff]
      %v1073 = vld [vmem:[%s986 + $0x23] sm:$0xff]
      %v1074 = vld [vmem:[%s986 + $0x33] sm:$0xff]
      %v1075 = vld [vmem:[%s986 + $0x43] sm:$0xff]
      %v1076 = vld [vmem:[%s986 + $0x53] sm:$0xff]
      %v1077 = vld [vmem:[%s986 + $0x63] sm:$0xff]
      %v1078 = vld [vmem:[%s986 + $0x73] sm:$0xff]
      %v1079 = vlaneseq
      %v1080 = vshrl.u32 %v1079, 7
      %v1081 = vsub.s32 7, %v1080
      %v1082 = vrot.slane %v429, %v1081
      %v1083 = vmul.f32 %v1071, %v1082
      %v1084 = vmul.f32 %v1072, %v1082
      %v1085 = vmul.f32 %v1073, %v1082
      %v1086 = vmul.f32 %v1074, %v1082
      %v1087 = vmul.f32 %v1075, %v1082
      %v1088 = vmul.f32 %v1076, %v1082
      %v1089 = vmul.f32 %v1077, %v1082
      %v1090 = vmul.f32 %v1078, %v1082
      %v1091 = vadd.f32 %v1063, %v1083
      %v1092 = vadd.f32 %v1064, %v1084
      %v1093 = vadd.f32 %v1065, %v1085
      %v1094 = vadd.f32 %v1066, %v1086
      %v1095 = vadd.f32 %v1067, %v1087
      %v1096 = vadd.f32 %v1068, %v1088
      %v1097 = vadd.f32 %v1069, %v1089
      %v1098 = vadd.f32 %v1070, %v1090
      %v1099 = vld [vmem:[%s986 + $0x4] sm:$0xff]
      %v1100 = vld [vmem:[%s986 + $0x14] sm:$0xff]
      %v1101 = vld [vmem:[%s986 + $0x24] sm:$0xff]
      %v1102 = vld [vmem:[%s986 + $0x34] sm:$0xff]
      %v1103 = vld [vmem:[%s986 + $0x44] sm:$0xff]
      %v1104 = vld [vmem:[%s986 + $0x54] sm:$0xff]
      %v1105 = vld [vmem:[%s986 + $0x64] sm:$0xff]
      %v1106 = vld [vmem:[%s986 + $0x74] sm:$0xff]
      %v1107 = vlaneseq
      %v1108 = vshrl.u32 %v1107, 7
      %v1109 = vsub.s32 0, %v1108
      %v1110 = vrot.slane %v430, %v1109
      %v1111 = vmul.f32 %v1099, %v1110
      %v1112 = vmul.f32 %v1100, %v1110
      %v1113 = vmul.f32 %v1101, %v1110
      %v1114 = vmul.f32 %v1102, %v1110
      %v1115 = vmul.f32 %v1103, %v1110
      %v1116 = vmul.f32 %v1104, %v1110
      %v1117 = vmul.f32 %v1105, %v1110
      %v1118 = vmul.f32 %v1106, %v1110
      %v1119 = vadd.f32 %v1091, %v1111
      %v1120 = vadd.f32 %v1092, %v1112
      %v1121 = vadd.f32 %v1093, %v1113
      %v1122 = vadd.f32 %v1094, %v1114
      %v1123 = vadd.f32 %v1095, %v1115
      %v1124 = vadd.f32 %v1096, %v1116
      %v1125 = vadd.f32 %v1097, %v1117
      %v1126 = vadd.f32 %v1098, %v1118
      %v1128 = vlaneseq
      %v1129 = vshrl.u32 %v1128, 7
      %v1130 = vsub.s32 0, %v1129
      %v1131 = vrot.slane %v431, %v1130
      %v1133 = vadd.f32 %v1119, %v1131
      %v1134 = vadd.f32 %v1120, %v1131
      %v1135 = vadd.f32 %v1121, %v1131
      %v1136 = vadd.f32 %v1122, %v1131
      %v1137 = vadd.f32 %v1123, %v1131
      %v1138 = vadd.f32 %v1124, %v1131
      %v1139 = vadd.f32 %v1125, %v1131
      %v1140 = vadd.f32 %v1126, %v1131
      %v1141 = vmax.f32 %v1133, 0.0
      %v1142 = vmax.f32 %v1134, 0.0
      %v1143 = vmax.f32 %v1135, 0.0
      %v1144 = vmax.f32 %v1136, 0.0
      %v1145 = vmax.f32 %v1137, 0.0
      %v1146 = vmax.f32 %v1138, 0.0
      %v1147 = vmax.f32 %v1139, 0.0
      %v1148 = vmax.f32 %v1140, 0.0
      %v1149 = vpack.c.bf16 %v1142, %v1141
      %v1150 = vpack.c.bf16 %v1144, %v1143
      %v1151 = vpack.c.bf16 %v1146, %v1145
      %v1152 = vpack.c.bf16 %v1148, %v1147
      %v1153 = vld [vmem:[%s5] sm:$0xf]
      %v1154 = vld [vmem:[%s5 + $0x4] sm:$0xf]
      %v1155 = vld [vmem:[%s5 + $0x8] sm:$0xf]
      %v1156 = vld [vmem:[%s5 + $0xc] sm:$0xf]
      %v1157 = vld [vmem:[%s5 + $0x10] sm:$0xf]
      %v1158 = vld [vmem:[%s5 + $0x14] sm:$0xf]
      %v1159 = vld [vmem:[%s5 + $0x18] sm:$0xf]
      %v1160 = vld [vmem:[%s5 + $0x1c] sm:$0xf]
      %v1161 = vld [vmem:[%s5 + $0x20] sm:$0xf]
      %v1162 = vld [vmem:[%s5 + $0x24] sm:$0xf]
      %v1163 = vld [vmem:[%s5 + $0x28] sm:$0xf]
      %v1164 = vld [vmem:[%s5 + $0x2c] sm:$0xf]
      %v1165 = vld [vmem:[%s5 + $0x30] sm:$0xf]
      %v1166 = vld [vmem:[%s5 + $0x34] sm:$0xf]
      %v1167 = vld [vmem:[%s5 + $0x38] sm:$0xf]
      %v1168 = vld [vmem:[%s5 + $0x3c] sm:$0xf]
      %v1169 = vld [vmem:[%s6] sm:$0x1]
      %v1171 = vlaneseq
      %v1172 = vshrl.u32 %v1171, 7
      %v1173 = vsub.s32 0, %v1172
      %v1174 = vrot.slane %v1169, %v1173
      %v1192 = vunpack.c.l.b16 %v1153
      %v1193 = vunpack.c.l.b16 %v1154
      %v1194 = vunpack.c.l.b16 %v1155
      %v1195 = vunpack.c.l.b16 %v1156
      %v1196 = vunpack.c.l.b16 %v1157
      %v1197 = vunpack.c.l.b16 %v1158
      %v1198 = vunpack.c.l.b16 %v1159
      %v1199 = vunpack.c.l.b16 %v1160
      %v1200 = vunpack.c.l.b16 %v1161
      %v1201 = vunpack.c.l.b16 %v1162
      %v1202 = vunpack.c.l.b16 %v1163
      %v1203 = vunpack.c.l.b16 %v1164
      %v1204 = vunpack.c.l.b16 %v1165
      %v1205 = vunpack.c.l.b16 %v1166
      %v1206 = vunpack.c.l.b16 %v1167
      %v1207 = vunpack.c.l.b16 %v1168
      %v1208 = vpack.c.b16 %v1193, %v1192
      %v1209 = vpack.c.b16 %v1195, %v1194
      %v1210 = vpack.c.b16 %v1197, %v1196
      %v1211 = vpack.c.b16 %v1199, %v1198
      %v1212 = vpack.c.b16 %v1201, %v1200
      %v1213 = vpack.c.b16 %v1203, %v1202
      %v1214 = vpack.c.b16 %v1205, %v1204
      %v1215 = vpack.c.b16 %v1207, %v1206
      %1224 = vmatprep.subr.bf16.mxu0 0
      %1225 = vmatpush1.bf16.msra.mxu0 %v1208
      %1226 = vmatprep.subr.bf16.mxu0 0
      %1227 = vmatpush1.bf16.msra.mxu0 %v1209
      %1228 = vmatprep.subr.bf16.mxu0 0
      %1229 = vmatpush1.bf16.msra.mxu0 %v1210
      %1230 = vmatprep.subr.bf16.mxu0 0
      %1231 = vmatpush1.bf16.msra.mxu0 %v1211
      %1232 = vmatprep.subr.bf16.mxu0 0
      %1233 = vmatpush1.bf16.msra.mxu0 %v1212
      %1234 = vmatprep.subr.bf16.mxu0 0
      %1235 = vmatpush1.bf16.msra.mxu0 %v1213
      %1236 = vmatprep.subr.bf16.mxu0 0
      %1237 = vmatpush1.bf16.msra.mxu0 %v1214
      %1238 = vmatprep.subr.bf16.mxu0 0
      %1239 = vmatpush1.bf16.msra.mxu0 %v1215
      %1240 = vmatprep.subr.bf16.mxu0 0
      %1241 = vmatpush1.bf16.msra.mxu0 0
      %1242 = vmatprep.subr.bf16.mxu0 0
      %1243 = vmatpush1.bf16.msra.mxu0 0
      %1244 = vmatprep.subr.bf16.mxu0 0
      %1245 = vmatpush1.bf16.msra.mxu0 0
      %1246 = vmatprep.subr.bf16.mxu0 0
      %1247 = vmatpush1.bf16.msra.mxu0 0
      %1248 = vmatprep.subr.bf16.mxu0 0
      %1249 = vmatpush1.bf16.msra.mxu0 0
      %1250 = vmatprep.subr.bf16.mxu0 0
      %1251 = vmatpush1.bf16.msra.mxu0 0
      %1252 = vmatprep.subr.bf16.mxu0 0
      %1253 = vmatpush1.bf16.msra.mxu0 0
      %1254 = vmatprep.subr.bf16.mxu0 0
      %1255 = vmatpush1.bf16.msra.mxu0 0
      %1256 = vmatprep.mubr.bf16.mxu0 0
      %1257 = vmatmul.mubr.bf16.gmra.mrb[0].mxu0 %v1149
      %v1258 = vpop.f32.mrb[0].mxu0
      %v1259 = vadd.f32 %v1174, %v1258
      %v1260 = vpop.f32.mrb[0].mxu0
      %v1261 = vpop.f32.mrb[0].mxu0
      %v1262 = vadd.f32 %v1174, %v1261
      %v1263 = vpop.f32.mrb[0].mxu0
      %1264 = vmatprep.mubr.bf16.mxu0 0
      %1265 = vmatmul.mubr.bf16.gmra.mrb[0].mxu0 %v1150
      %v1266 = vpop.f32.mrb[0].mxu0
      %v1267 = vadd.f32 %v1174, %v1266
      %v1268 = vpop.f32.mrb[0].mxu0
      %v1269 = vpop.f32.mrb[0].mxu0
      %v1270 = vadd.f32 %v1174, %v1269
      %v1271 = vpop.f32.mrb[0].mxu0
      %1272 = vmatprep.mubr.bf16.mxu0 0
      %1273 = vmatmul.mubr.bf16.gmra.mrb[0].mxu0 %v1151
      %v1274 = vpop.f32.mrb[0].mxu0
      %v1275 = vadd.f32 %v1174, %v1274
      %v1276 = vpop.f32.mrb[0].mxu0
      %v1277 = vpop.f32.mrb[0].mxu0
      %v1278 = vadd.f32 %v1174, %v1277
      %v1279 = vpop.f32.mrb[0].mxu0
      %1280 = vmatprep.mubr.bf16.mxu0 0
      %1281 = vmatmul.mubr.bf16.gmra.mrb[0].mxu0 %v1152
      %v1282 = vpop.f32.mrb[0].mxu0
      %v1283 = vadd.f32 %v1174, %v1282
      %v1284 = vpop.f32.mrb[0].mxu0
      %v1285 = vpop.f32.mrb[0].mxu0
      %v1286 = vadd.f32 %v1174, %v1285
      %v1287 = vpop.f32.mrb[0].mxu0
      %1288 = vdwg.mxu0
      %v1289 = vsel %vm307, %v280, 0.0
      %v1290 = vsel %vm307, %v281, 0.0
      %v1291 = vsel %vm307, %v282, 0.0
      %v1292 = vsel %vm307, %v283, 0.0
      %v1293 = vsel %vm307, %v284, 0.0
      %v1294 = vsel %vm307, %v285, 0.0
      %v1295 = vsel %vm307, %v286, 0.0
      %v1296 = vsel %vm307, %v287, 0.0
      %v1297 = vadd.f32 %v1259, %v1289
      %v1298 = vadd.f32 %v1262, %v1290
      %v1299 = vadd.f32 %v1267, %v1291
      %v1300 = vadd.f32 %v1270, %v1292
      %v1301 = vadd.f32 %v1275, %v1293
      %v1302 = vadd.f32 %v1278, %v1294
      %v1303 = vadd.f32 %v1283, %v1295
      %v1304 = vadd.f32 %v1286, %v1296
      %1305 = vst [vmem:[%s278] sm:$0xff] %v1297
      %1306 = vst [vmem:[%s278 + $0x8] sm:$0xff] %v1298
      %1307 = vst [vmem:[%s278 + $0x10] sm:$0xff] %v1299
      %1308 = vst [vmem:[%s278 + $0x18] sm:$0xff] %v1300
      %1309 = vst [vmem:[%s278 + $0x20] sm:$0xff] %v1301
      %1310 = vst [vmem:[%s278 + $0x28] sm:$0xff] %v1302
      %1311 = vst [vmem:[%s278 + $0x30] sm:$0xff] %v1303
      %1312 = vst [vmem:[%s278 + $0x38] sm:$0xff] %v1304
      %p1313 = scmp.lt.s32.totalorder %s18, 1
      %s1314 = scalar_select %p1313, %s18, 1
      %s1315 = smul.addr %s1314, 8
      %s1316 = smul.addr %s1315, 8
      %s1317 = scalar_lea.vmem %s7, %s1316
      // Predicated region
      $region49: #{_lambda_.3} parent=47 // pred_check
        %p1318 = pneg %p188
      $region50: #{_lambda_.3} parent=47 // pred_check_branch
        %1320 = sbr.rel (%p1318) target = $region52
      $region51: #{_lambda_.3} parent=47 // pred_region
        _
      $region52: #{_lambda_.3} parent=47 // pred_fallthru
        _
    $region48: #{_lambda_.3} parent=5 // pred_fallthru
      _
    %p1321 = scmp.le.s32.totalorder 2, %s13
    // Predicated region
    $region53: #{_lambda_.3} parent=5 // pred_check
      %p1322 = pneg %p1321
    $region54: #{_lambda_.3} parent=5 // pred_check_branch
      %1324 = sbr.rel (%p1322) target = $region56
    $region55: #{_lambda_.3} parent=5 // pred_region
      %s1325 = ssub.s32 %s13, 2
      // Predicated region
      $region57: #{_lambda_.3} parent=55 // pred_check
        %p1326 = pneg %p194
      $region58: #{_lambda_.3} parent=55 // pred_check_branch
        %1328 = sbr.rel (%p1326) target = $region60
      $region59: #{_lambda_.3} parent=55 // pred_region
        %p1329 = scmp.lt.s32.totalorder %s19, 1
        %s1330 = scalar_select %p1329, %s19, 1
        %s1331 = smul.addr %s1330, 8
        %s1332 = smul.addr %s1331, 8
        %s1333 = scalar_lea.vmem %s7, %s1332
      $region60: #{_lambda_.3} parent=55 // pred_fallthru
        _
    $region56: #{_lambda_.3} parent=5 // pred_fallthru
      _
  $region6: #{_lambda_.3} parent=0 // loop_footer
    %s17 = sadd.s32 1, %s13
  $region7: #{_lambda_.3} parent=0 // loop_footer_branch
    %12 = sbr.rel target = $region3
  $region8: #{_lambda_.3} parent=0 // loop_exit
    _

// kernel: _lambda_.2
$region0: #{_lambda_.2}
  #allocation0 [shape = 'u32[]', space=smem, size = 0x4, offset = 0x4, fixed_abs, tag = 'smem constant byte address 0x4 - core index']
  #allocation1 [shape = 'u32[144,128]{1,0:T(1,128)}', space=vmem, size = 0x12000, scoped, tag = 'internal scratch']
  #allocation2 [shape = 'f32[1,10,10,128]{3,2,1,0:T(8,128)}', space=vmem, size = 0x14000, scoped, tag = 'scratch operand']
  #allocation3 [shape = 'f32[1,10,10,128]{3,2,1,0:T(8,128)}', space=vmem, size = 0x14000, scoped, tag = 'scratch operand']
  #allocation4 [shape = 'f32[1,10,10,128]{3,2,1,0:T(8,128)}', space=vmem, size = 0x14000, scoped, tag = 'scratch operand']
  #allocation5 [shape = 'f32[1,10,10,128]{3,2,1,0:T(8,128)}', space=vmem, size = 0x14000, scoped, tag = 'scratch operand']
  %s0 = inlined_call_operand.vmem [shape: f32[2,256,8], index: 0, kind: input, shape index: {}]
  %s1 = inlined_call_operand.vmem [shape: bf16[8,128], index: 1, kind: input, shape index: {}]
  %s2 = inlined_call_operand.vmem [shape: f32[1,128], index: 2, kind: input, shape index: {}]
  %s3 = inlined_call_operand.vmem [shape: f32[25,128], index: 3, kind: input, shape index: {}]
  %s4 = inlined_call_operand.vmem [shape: f32[1,128], index: 4, kind: input, shape index: {}]
  %s5 = inlined_call_operand.vmem [shape: bf16[128,128], index: 5, kind: input, shape index: {}]
  %s6 = inlined_call_operand.vmem [shape: f32[1,128], index: 6, kind: input, shape index: {}]
  %s7 = inlined_call_operand.vmem [shape: bf16[8,128], index: 7, kind: input, shape index: {}]
  %s8 = inlined_call_operand.vmem [shape: f32[2,64,128], index: 8, kind: output, shape index: {}]
  %s9 = sld [smem:[#allocation0]]
  $region65: #{_lambda_.2} parent=0
    _
  %s11 = ssub.s32 1, %s9
  %s12 = scalar_select 0, %s11, %s9
  loop: start=0, step=1, limit=4
  $region2: #{_lambda_.2} parent=0 // loop_pre_header
    _
  $region3: #{_lambda_.2} parent=0 // loop_header
    %s14 = sphi 0, %s18
    %p15 = scmp.ge.s32.totalorder %s14, 4
    %s24 = sphi 0, %s26
    %s27 = sphi 0, %s24
    %s28 = sphi 0, %s27
    %s44 = sphi 0, %s28
    %s48 = sphi 0, %s48
    %s50 = sphi 0, %s48
    %s51 = sphi 0, %s50
    %s65 = sphi 0, %s51
    %s69 = sphi 0, %s69
    %s71 = sphi 0, %s69
    %s72 = sphi 0, %s71
    %s86 = sphi 0, %s72
    %s90 = sphi 0, %s90
    %s92 = sphi 0, %s90
    %s93 = sphi 0, %s92
    %s107 = sphi 0, %s93
    %s111 = sphi 0, %s111
    %s113 = sphi 0, %s111
    %s114 = sphi 0, %s113
    %s128 = sphi 0, %s114
    %s132 = sphi 0, %s132
    %s134 = sphi 0, %s132
    %s135 = sphi 0, %s134
    %s149 = sphi 0, %s135
    %s153 = sphi 0, %s153
    %s155 = sphi 0, %s153
    %s156 = sphi 0, %s155
    %s170 = sphi 0, %s156
    %s174 = sphi 0, %s174
    %s176 = sphi 0, %s174
    %s177 = sphi 0, %s176
    %s191 = sphi 0, %s177
    %s197 = sphi 0, %s199
    %s200 = sphi 0, %s197
    %s201 = sphi 0, %s200
    %s217 = sphi 0, %s201
  $region4: #{_lambda_.2} parent=0 // loop_header_branch
    %17 = sbr.rel (%p15) target = $region8
  $region5: #{_lambda_.2} parent=0 // loop_body
    %s19 = ssub.s32 %s14, 1
    %s20 = ssub.s32 %s14, 2
    %s21 = sadd.s32 %s14, 1
    %s22 = ssub.s32 %s14, %s21
    %p23 = scmp.eq.s32.totalorder %s22, 0
    %s25 = sadd.s32 %s24, 1
    %s26 = scalar_select %p23, %s24, %s25
    %p29 = pneg %p23
    %p30 = scmp.eq.s32.totalorder %s14, 1
    %p31 = por %p29, %p30
    %p32 = scmp.ne.s32.totalorder %s24, %s27
    %p33 = scmp.eq.s32.totalorder %s14, 0
    %p34 = por %p32, %p33
    %p35 = scmp.ne.s32.totalorder %s24, %s27
    %p36 = scmp.eq.s32.totalorder %s19, 1
    %p37 = por %p35, %p36
    %p38 = scmp.ne.s32.totalorder %s27, %s28
    %p39 = scmp.eq.s32.totalorder %s19, 0
    %p40 = por %p38, %p39
    %p41 = scmp.ne.s32.totalorder %s27, %s28
    %p42 = scmp.eq.s32.totalorder %s20, 1
    %p43 = por %p41, %p42
    %p45 = scmp.ne.s32.totalorder %s28, %s44
    %p46 = scmp.eq.s32.totalorder %s20, 0
    %p47 = por %p45, %p46
    %s49 = sadd.s32 %s48, 1
    %p52 = scmp.eq.s32.totalorder %s14, 1
    %p53 = scmp.ne.s32.totalorder %s48, %s50
    %p54 = scmp.eq.s32.totalorder %s14, 0
    %p55 = por %p53, %p54
    %p56 = scmp.ne.s32.totalorder %s48, %s50
    %p57 = scmp.eq.s32.totalorder %s19, 1
    %p58 = por %p56, %p57
    %p59 = scmp.ne.s32.totalorder %s50, %s51
    %p60 = scmp.eq.s32.totalorder %s19, 0
    %p61 = por %p59, %p60
    %p62 = scmp.ne.s32.totalorder %s50, %s51
    %p63 = scmp.eq.s32.totalorder %s20, 1
    %p64 = por %p62, %p63
    %p66 = scmp.ne.s32.totalorder %s51, %s65
    %p67 = scmp.eq.s32.totalorder %s20, 0
    %p68 = por %p66, %p67
    %s70 = sadd.s32 %s69, 1
    %p73 = scmp.eq.s32.totalorder %s14, 1
    %p74 = scmp.ne.s32.totalorder %s69, %s71
    %p75 = scmp.eq.s32.totalorder %s14, 0
    %p76 = por %p74, %p75
    %p77 = scmp.ne.s32.totalorder %s69, %s71
    %p78 = scmp.eq.s32.totalorder %s19, 1
    %p79 = por %p77, %p78
    %p80 = scmp.ne.s32.totalorder %s71, %s72
    %p81 = scmp.eq.s32.totalorder %s19, 0
    %p82 = por %p80, %p81
    %p83 = scmp.ne.s32.totalorder %s71, %s72
    %p84 = scmp.eq.s32.totalorder %s20, 1
    %p85 = por %p83, %p84
    %p87 = scmp.ne.s32.totalorder %s72, %s86
    %p88 = scmp.eq.s32.totalorder %s20, 0
    %p89 = por %p87, %p88
    %s91 = sadd.s32 %s90, 1
    %p94 = scmp.eq.s32.totalorder %s14, 1
    %p95 = scmp.ne.s32.totalorder %s90, %s92
    %p96 = scmp.eq.s32.totalorder %s14, 0
    %p97 = por %p95, %p96
    %p98 = scmp.ne.s32.totalorder %s90, %s92
    %p99 = scmp.eq.s32.totalorder %s19, 1
    %p100 = por %p98, %p99
    %p101 = scmp.ne.s32.totalorder %s92, %s93
    %p102 = scmp.eq.s32.totalorder %s19, 0
    %p103 = por %p101, %p102
    %p104 = scmp.ne.s32.totalorder %s92, %s93
    %p105 = scmp.eq.s32.totalorder %s20, 1
    %p106 = por %p104, %p105
    %p108 = scmp.ne.s32.totalorder %s93, %s107
    %p109 = scmp.eq.s32.totalorder %s20, 0
    %p110 = por %p108, %p109
    %s112 = sadd.s32 %s111, 1
    %p115 = scmp.eq.s32.totalorder %s14, 1
    %p116 = scmp.ne.s32.totalorder %s111, %s113
    %p117 = scmp.eq.s32.totalorder %s14, 0
    %p118 = por %p116, %p117
    %p119 = scmp.ne.s32.totalorder %s111, %s113
    %p120 = scmp.eq.s32.totalorder %s19, 1
    %p121 = por %p119, %p120
    %p122 = scmp.ne.s32.totalorder %s113, %s114
    %p123 = scmp.eq.s32.totalorder %s19, 0
    %p124 = por %p122, %p123
    %p125 = scmp.ne.s32.totalorder %s113, %s114
    %p126 = scmp.eq.s32.totalorder %s20, 1
    %p127 = por %p125, %p126
    %p129 = scmp.ne.s32.totalorder %s114, %s128
    %p130 = scmp.eq.s32.totalorder %s20, 0
    %p131 = por %p129, %p130
    %s133 = sadd.s32 %s132, 1
    %p136 = scmp.eq.s32.totalorder %s14, 1
    %p137 = scmp.ne.s32.totalorder %s132, %s134
    %p138 = scmp.eq.s32.totalorder %s14, 0
    %p139 = por %p137, %p138
    %p140 = scmp.ne.s32.totalorder %s132, %s134
    %p141 = scmp.eq.s32.totalorder %s19, 1
    %p142 = por %p140, %p141
    %p143 = scmp.ne.s32.totalorder %s134, %s135
    %p144 = scmp.eq.s32.totalorder %s19, 0
    %p145 = por %p143, %p144
    %p146 = scmp.ne.s32.totalorder %s134, %s135
    %p147 = scmp.eq.s32.totalorder %s20, 1
    %p148 = por %p146, %p147
    %p150 = scmp.ne.s32.totalorder %s135, %s149
    %p151 = scmp.eq.s32.totalorder %s20, 0
    %p152 = por %p150, %p151
    %s154 = sadd.s32 %s153, 1
    %p157 = scmp.eq.s32.totalorder %s14, 1
    %p158 = scmp.ne.s32.totalorder %s153, %s155
    %p159 = scmp.eq.s32.totalorder %s14, 0
    %p160 = por %p158, %p159
    %p161 = scmp.ne.s32.totalorder %s153, %s155
    %p162 = scmp.eq.s32.totalorder %s19, 1
    %p163 = por %p161, %p162
    %p164 = scmp.ne.s32.totalorder %s155, %s156
    %p165 = scmp.eq.s32.totalorder %s19, 0
    %p166 = por %p164, %p165
    %p167 = scmp.ne.s32.totalorder %s155, %s156
    %p168 = scmp.eq.s32.totalorder %s20, 1
    %p169 = por %p167, %p168
    %p171 = scmp.ne.s32.totalorder %s156, %s170
    %p172 = scmp.eq.s32.totalorder %s20, 0
    %p173 = por %p171, %p172
    %s175 = sadd.s32 %s174, 1
    %p178 = scmp.eq.s32.totalorder %s14, 1
    %p179 = scmp.ne.s32.totalorder %s174, %s176
    %p180 = scmp.eq.s32.totalorder %s14, 0
    %p181 = por %p179, %p180
    %p182 = scmp.ne.s32.totalorder %s174, %s176
    %p183 = scmp.eq.s32.totalorder %s19, 1
    %p184 = por %p182, %p183
    %p185 = scmp.ne.s32.totalorder %s176, %s177
    %p186 = scmp.eq.s32.totalorder %s19, 0
    %p187 = por %p185, %p186
    %p188 = scmp.ne.s32.totalorder %s176, %s177
    %p189 = scmp.eq.s32.totalorder %s20, 1
    %p190 = por %p188, %p189
    %p192 = scmp.ne.s32.totalorder %s177, %s191
    %p193 = scmp.eq.s32.totalorder %s20, 0
    %p194 = por %p192, %p193
    %s195 = ssub.s32 %s14, %s21
    %p196 = scmp.eq.s32.totalorder %s195, 0
    %s198 = sadd.s32 %s197, 1
    %s199 = scalar_select %p196, %s197, %s198
    %p202 = pneg %p196
    %p203 = scmp.eq.s32.totalorder %s14, 1
    %p204 = por %p202, %p203
    %p205 = scmp.ne.s32.totalorder %s197, %s200
    %p206 = scmp.eq.s32.totalorder %s14, 0
    %p207 = por %p205, %p206
    %p208 = scmp.ne.s32.totalorder %s197, %s200
    %p209 = scmp.eq.s32.totalorder %s19, 1
    %p210 = por %p208, %p209
    %p211 = scmp.ne.s32.totalorder %s200, %s201
    %p212 = scmp.eq.s32.totalorder %s19, 0
    %p213 = por %p211, %p212
    %p214 = scmp.ne.s32.totalorder %s200, %s201
    %p215 = scmp.eq.s32.totalorder %s20, 1
    %p216 = por %p214, %p215
    %p218 = scmp.ne.s32.totalorder %s201, %s217
    %p219 = scmp.eq.s32.totalorder %s20, 0
    %p220 = por %p218, %p219
    %p221 = scmp.le.s32.totalorder 1, %s14
    %p222 = scmp.lt.s32.totalorder %s14, 3
    %p223 = pnand %p221, %p222
    %p224 = pneg %p223
    // Predicated region
    $region9: #{_lambda_.2} parent=5 // pred_check
      _
    $region10: #{_lambda_.2} parent=5 // pred_check_branch
      %226 = sbr.rel (%p223) target = $region12
    $region11: #{_lambda_.2} parent=5 // pred_region
      %s227 = ssub.s32 %s14, 1
      // Predicated region
      $region13: #{_lambda_.2} parent=11 // pred_check
        %p228 = pneg %p61
      $region14: #{_lambda_.2} parent=11 // pred_check_branch
        %230 = sbr.rel (%p228) target = $region16
      $region15: #{_lambda_.2} parent=11 // pred_region
        _
      $region16: #{_lambda_.2} parent=11 // pred_fallthru
        _
      // Predicated region
      $region17: #{_lambda_.2} parent=11 // pred_check
        %p231 = pneg %p82
      $region18: #{_lambda_.2} parent=11 // pred_check_branch
        %233 = sbr.rel (%p231) target = $region20
      $region19: #{_lambda_.2} parent=11 // pred_region
        _
      $region20: #{_lambda_.2} parent=11 // pred_fallthru
        _
      // Predicated region
      $region21: #{_lambda_.2} parent=11 // pred_check
        %p234 = pneg %p103
      $region22: #{_lambda_.2} parent=11 // pred_check_branch
        %236 = sbr.rel (%p234) target = $region24
      $region23: #{_lambda_.2} parent=11 // pred_region
        _
      $region24: #{_lambda_.2} parent=11 // pred_fallthru
        _
      // Predicated region
      $region25: #{_lambda_.2} parent=11 // pred_check
        %p237 = pneg %p124
      $region26: #{_lambda_.2} parent=11 // pred_check_branch
        %239 = sbr.rel (%p237) target = $region28
      $region27: #{_lambda_.2} parent=11 // pred_region
        _
      $region28: #{_lambda_.2} parent=11 // pred_fallthru
        _
      // Predicated region
      $region29: #{_lambda_.2} parent=11 // pred_check
        %p240 = pneg %p145
      $region30: #{_lambda_.2} parent=11 // pred_check_branch
        %242 = sbr.rel (%p240) target = $region32
      $region31: #{_lambda_.2} parent=11 // pred_region
        _
      $region32: #{_lambda_.2} parent=11 // pred_fallthru
        _
      // Predicated region
      $region33: #{_lambda_.2} parent=11 // pred_check
        %p243 = pneg %p166
      $region34: #{_lambda_.2} parent=11 // pred_check_branch
        %245 = sbr.rel (%p243) target = $region36
      $region35: #{_lambda_.2} parent=11 // pred_region
        _
      $region36: #{_lambda_.2} parent=11 // pred_fallthru
        _
      // Predicated region
      $region37: #{_lambda_.2} parent=11 // pred_check
        %p246 = pneg %p187
      $region38: #{_lambda_.2} parent=11 // pred_check_branch
        %248 = sbr.rel (%p246) target = $region40
      $region39: #{_lambda_.2} parent=11 // pred_region
        _
      $region40: #{_lambda_.2} parent=11 // pred_fallthru
        _
    $region12: #{_lambda_.2} parent=5 // pred_fallthru
      _
    %p249 = scmp.lt.s32.totalorder %s14, 2
    // Predicated region
    $region41: #{_lambda_.2} parent=5 // pred_check
      %p250 = pneg %p249
    $region42: #{_lambda_.2} parent=5 // pred_check_branch
      %252 = sbr.rel (%p250) target = $region44
    $region43: #{_lambda_.2} parent=5 // pred_region
      // Predicated region
      $region45: #{_lambda_.2} parent=43 // pred_check
        %p253 = pneg %p34
      $region46: #{_lambda_.2} parent=43 // pred_check_branch
        %255 = sbr.rel (%p253) target = $region48
      $region47: #{_lambda_.2} parent=43 // pred_region
        %p256 = scmp.lt.s32.totalorder %s14, 1
        %s257 = scalar_select %p256, %s14, 1
        %s258 = smul.addr %s257, 32
        %s259 = smul.addr %s258, 8
        %s260 = scalar_lea.vmem %s0, %s259
      $region48: #{_lambda_.2} parent=43 // pred_fallthru
        _
    $region44: #{_lambda_.2} parent=5 // pred_fallthru
      _
    %p261 = scmp.le.s32.totalorder 1, %s14
    %p262 = scmp.lt.s32.totalorder %s14, 3
    %p263 = pnand %p261, %p262
    %p264 = pneg %p263
    // Predicated region
    $region49: #{_lambda_.2} parent=5 // pred_check
      _
    $region50: #{_lambda_.2} parent=5 // pred_check_branch
      %266 = sbr.rel (%p263) target = $region52
    $region51: #{_lambda_.2} parent=5 // pred_region
      %s267 = ssub.s32 %s14, 1
      %p268 = scmp.lt.s32.totalorder %s19, 1
      %s269 = scalar_select %p268, %s19, 1
      %s270 = smul.addr %s269, 32
      %s271 = smul.addr %s270, 8
      %s272 = scalar_lea.vmem %s0, %s271
      %p273 = pneg %p40
      %p274 = pneg %p37
      %p275 = pneg %p61
      %p276 = pneg %p58
      %p277 = pneg %p82
      %p278 = pneg %p79
      %p279 = pneg %p103
      %p280 = pneg %p100
      %p281 = pneg %p124
      %p282 = pneg %p121
      %p283 = pneg %p145
      %p284 = pneg %p142
      %p285 = pneg %p166
      %p286 = pneg %p163
      %p287 = pneg %p187
      %p288 = pneg %p184
      %p289 = pneg %p213
      %p290 = pneg %p210
      %p291 = scmp.lt.s32.totalorder %s19, 1
      %s292 = scalar_select %p291, %s19, 1
      %s293 = smul.addr %s292, 8
      %s294 = smul.addr %s293, 8
      %s295 = scalar_lea.vmem %s8, %s294
      %p296 = scmp.lt.s32.totalorder %s19, 1
      %s297 = scalar_select %p296, %s19, 1
      %s298 = smul.addr %s297, 32
      %s299 = smul.addr %s298, 8
      %s300 = scalar_lea.vmem %s0, %s299
      %p301 = scmp.lt.s32.totalorder %s19, 1
      %s302 = scalar_select %p301, %s19, 1
      %s303 = smul.addr %s302, 8
      %s304 = smul.addr %s303, 8
      %s305 = scalar_lea.vmem %s8, %s304
      %v307 = vld [vmem:[%s300] sm:$0xff]
      %v308 = vld [vmem:[%s300 + $0x8] sm:$0xff]
      %v309 = vld [vmem:[%s300 + $0x10] sm:$0xff]
      %v310 = vld [vmem:[%s300 + $0x18] sm:$0xff]
      %v311 = vld [vmem:[%s300 + $0x20] sm:$0xff]
      %v312 = vld [vmem:[%s300 + $0x28] sm:$0xff]
      %v313 = vld [vmem:[%s300 + $0x30] sm:$0xff]
      %v314 = vld [vmem:[%s300 + $0x38] sm:$0xff]
      %v315 = vld [vmem:[%s300 + $0x40] sm:$0xff]
      %v316 = vld [vmem:[%s300 + $0x48] sm:$0xff]
      %v317 = vld [vmem:[%s300 + $0x50] sm:$0xff]
      %v318 = vld [vmem:[%s300 + $0x58] sm:$0xff]
      %v319 = vld [vmem:[%s300 + $0x60] sm:$0xff]
      %v320 = vld [vmem:[%s300 + $0x68] sm:$0xff]
      %v321 = vld [vmem:[%s300 + $0x70] sm:$0xff]
      %v322 = vld [vmem:[%s300 + $0x78] sm:$0xff]
      %v323 = vld [vmem:[%s300 + $0x80] sm:$0xff]
      %v324 = vld [vmem:[%s300 + $0x88] sm:$0xff]
      %v325 = vld [vmem:[%s300 + $0x90] sm:$0xff]
      %v326 = vld [vmem:[%s300 + $0x98] sm:$0xff]
      %v327 = vld [vmem:[%s300 + $0xa0] sm:$0xff]
      %v328 = vld [vmem:[%s300 + $0xa8] sm:$0xff]
      %v329 = vld [vmem:[%s300 + $0xb0] sm:$0xff]
      %v330 = vld [vmem:[%s300 + $0xb8] sm:$0xff]
      %v331 = vld [vmem:[%s300 + $0xc0] sm:$0xff]
      %v332 = vld [vmem:[%s300 + $0xc8] sm:$0xff]
      %v333 = vld [vmem:[%s300 + $0xd0] sm:$0xff]
      %v334 = vld [vmem:[%s300 + $0xd8] sm:$0xff]
      %v335 = vld [vmem:[%s300 + $0xe0] sm:$0xff]
      %v336 = vld [vmem:[%s300 + $0xe8] sm:$0xff]
      %v337 = vld [vmem:[%s300 + $0xf0] sm:$0xff]
      %v338 = vld [vmem:[%s300 + $0xf8] sm:$0xff]
      %v339 = vpack.c.bf16 %v308, %v307
      %v340 = vpack.c.bf16 %v310, %v309
      %v341 = vpack.c.bf16 %v312, %v311
      %v342 = vpack.c.bf16 %v314, %v313
      %v343 = vpack.c.bf16 %v316, %v315
      %v344 = vpack.c.bf16 %v318, %v317
      %v345 = vpack.c.bf16 %v320, %v319
      %v346 = vpack.c.bf16 %v322, %v321
      %v347 = vpack.c.bf16 %v324, %v323
      %v348 = vpack.c.bf16 %v326, %v325
      %v349 = vpack.c.bf16 %v328, %v327
      %v350 = vpack.c.bf16 %v330, %v329
      %v351 = vpack.c.bf16 %v332, %v331
      %v352 = vpack.c.bf16 %v334, %v333
      %v353 = vpack.c.bf16 %v336, %v335
      %v354 = vpack.c.bf16 %v338, %v337
      %v355 = vld [vmem:[%s1] sm:$0xf]
      %v356 = vld [vmem:[%s2] sm:$0x1]
      %v358 = vlaneseq
      %v359 = vshrl.u32 %v358, 7
      %v360 = vsub.s32 0, %v359
      %v361 = vrot.slane %v356, %v360
      %vm363 = vcmask 64512
      %v365 = vsel %vm363, %v339, 0
      %v368 = vsel %vm363, %v340, 0
      %v371 = vsel %vm363, %v341, 0
      %v374 = vsel %vm363, %v342, 0
      %v377 = vsel %vm363, %v343, 0
      %v380 = vsel %vm363, %v344, 0
      %v383 = vsel %vm363, %v345, 0
      %v386 = vsel %vm363, %v346, 0
      %v389 = vsel %vm363, %v347, 0
      %v392 = vsel %vm363, %v348, 0
      %v395 = vsel %vm363, %v349, 0
      %v398 = vsel %vm363, %v350, 0
      %v401 = vsel %vm363, %v351, 0
      %v404 = vsel %vm363, %v352, 0
      %v407 = vsel %vm363, %v353, 0
      %v410 = vsel %vm363, %v354, 0
      %vm412 = vcmask 1043456
      %v414 = vsel %vm412, %v355, 0
      %416 = vmatprep.subr.bf16.mxu0 0
      %417 = vmatpush1.bf16.msra.mxu0 %v414
      %418 = vmatprep.subr.bf16.mxu0 0
      %419 = vmatpush1.bf16.msra.mxu0 0
      %420 = vmatprep.subr.bf16.mxu0 0
      %421 = vmatpush1.bf16.msra.mxu0 0
      %422 = vmatprep.subr.bf16.mxu0 0
      %423 = vmatpush1.bf16.msra.mxu0 0
      %424 = vmatprep.subr.bf16.mxu0 0
      %425 = vmatpush1.bf16.msra.mxu0 0
      %426 = vmatprep.subr.bf16.mxu0 0
      %427 = vmatpush1.bf16.msra.mxu0 0
      %428 = vmatprep.subr.bf16.mxu0 0
      %429 = vmatpush1.bf16.msra.mxu0 0
      %430 = vmatprep.subr.bf16.mxu0 0
      %431 = vmatpush1.bf16.msra.mxu0 0
      %432 = vmatprep.subr.bf16.mxu0 0
      %433 = vmatpush1.bf16.msra.mxu0 0
      %434 = vmatprep.subr.bf16.mxu0 0
      %435 = vmatpush1.bf16.msra.mxu0 0
      %436 = vmatprep.subr.bf16.mxu0 0
      %437 = vmatpush1.bf16.msra.mxu0 0
      %438 = vmatprep.subr.bf16.mxu0 0
      %439 = vmatpush1.bf16.msra.mxu0 0
      %440 = vmatprep.subr.bf16.mxu0 0
      %441 = vmatpush1.bf16.msra.mxu0 0
      %442 = vmatprep.subr.bf16.mxu0 0
      %443 = vmatpush1.bf16.msra.mxu0 0
      %444 = vmatprep.subr.bf16.mxu0 0
      %445 = vmatpush1.bf16.msra.mxu0 0
      %446 = vmatprep.subr.bf16.mxu0 0
      %447 = vmatpush1.bf16.msra.mxu0 0
      %448 = vmatprep.mubr.bf16.mxu0 0
      %449 = vmatmul.mubr.bf16.gmra.mrb[0].mxu0 %v365
      %v450 = vpop.f32.mrb[0].mxu0
      %v451 = vadd.f32 %v361, %v450
      %v452 = vpop.f32.mrb[0].mxu0
      %v453 = vpop.f32.mrb[0].mxu0
      %v454 = vadd.f32 %v361, %v453
      %v455 = vpop.f32.mrb[0].mxu0
      %456 = vmatprep.mubr.bf16.mxu0 0
      %457 = vmatmul.mubr.bf16.gmra.mrb[0].mxu0 %v368
      %v458 = vpop.f32.mrb[0].mxu0
      %v459 = vadd.f32 %v361, %v458
      %v460 = vpop.f32.mrb[0].mxu0
      %v461 = vpop.f32.mrb[0].mxu0
      %v462 = vadd.f32 %v361, %v461
      %v463 = vpop.f32.mrb[0].mxu0
      %464 = vmatprep.mubr.bf16.mxu0 0
      %465 = vmatmul.mubr.bf16.gmra.mrb[0].mxu0 %v371
      %v466 = vpop.f32.mrb[0].mxu0
      %v467 = vadd.f32 %v361, %v466
      %v468 = vpop.f32.mrb[0].mxu0
      %v469 = vpop.f32.mrb[0].mxu0
      %v470 = vadd.f32 %v361, %v469
      %v471 = vpop.f32.mrb[0].mxu0
      %472 = vmatprep.mubr.bf16.mxu0 0
      %473 = vmatmul.mubr.bf16.gmra.mrb[0].mxu0 %v374
      %v474 = vpop.f32.mrb[0].mxu0
      %v475 = vadd.f32 %v361, %v474
      %v476 = vpop.f32.mrb[0].mxu0
      %v477 = vpop.f32.mrb[0].mxu0
      %v478 = vadd.f32 %v361, %v477
      %v479 = vpop.f32.mrb[0].mxu0
      %480 = vmatprep.mubr.bf16.mxu0 0
      %481 = vmatmul.mubr.bf16.gmra.mrb[0].mxu0 %v377
      %v482 = vpop.f32.mrb[0].mxu0
      %v483 = vadd.f32 %v361, %v482
      %v484 = vpop.f32.mrb[0].mxu0
      %v485 = vpop.f32.mrb[0].mxu0
      %v486 = vadd.f32 %v361, %v485
      %v487 = vpop.f32.mrb[0].mxu0
      %488 = vmatprep.mubr.bf16.mxu0 0
      %489 = vmatmul.mubr.bf16.gmra.mrb[0].mxu0 %v380
      %v490 = vpop.f32.mrb[0].mxu0
      %v491 = vadd.f32 %v361, %v490
      %v492 = vpop.f32.mrb[0].mxu0
      %v493 = vpop.f32.mrb[0].mxu0
      %v494 = vadd.f32 %v361, %v493
      %v495 = vpop.f32.mrb[0].mxu0
      %496 = vmatprep.mubr.bf16.mxu0 0
      %497 = vmatmul.mubr.bf16.gmra.mrb[0].mxu0 %v383
      %v498 = vpop.f32.mrb[0].mxu0
      %v499 = vadd.f32 %v361, %v498
      %v500 = vpop.f32.mrb[0].mxu0
      %v501 = vpop.f32.mrb[0].mxu0
      %v502 = vadd.f32 %v361, %v501
      %v503 = vpop.f32.mrb[0].mxu0
      %504 = vmatprep.mubr.bf16.mxu0 0
      %505 = vmatmul.mubr.bf16.gmra.mrb[0].mxu0 %v386
      %v506 = vpop.f32.mrb[0].mxu0
      %v507 = vadd.f32 %v361, %v506
      %v508 = vpop.f32.mrb[0].mxu0
      %v509 = vpop.f32.mrb[0].mxu0
      %v510 = vadd.f32 %v361, %v509
      %v511 = vpop.f32.mrb[0].mxu0
      %512 = vmatprep.mubr.bf16.mxu0 0
      %513 = vmatmul.mubr.bf16.gmra.mrb[0].mxu0 %v389
      %v514 = vpop.f32.mrb[0].mxu0
      %v515 = vadd.f32 %v361, %v514
      %v516 = vpop.f32.mrb[0].mxu0
      %v517 = vpop.f32.mrb[0].mxu0
      %v518 = vadd.f32 %v361, %v517
      %v519 = vpop.f32.mrb[0].mxu0
      %520 = vmatprep.mubr.bf16.mxu0 0
      %521 = vmatmul.mubr.bf16.gmra.mrb[0].mxu0 %v392
      %v522 = vpop.f32.mrb[0].mxu0
      %v523 = vadd.f32 %v361, %v522
      %v524 = vpop.f32.mrb[0].mxu0
      %v525 = vpop.f32.mrb[0].mxu0
      %v526 = vadd.f32 %v361, %v525
      %v527 = vpop.f32.mrb[0].mxu0
      %528 = vmatprep.mubr.bf16.mxu0 0
      %529 = vmatmul.mubr.bf16.gmra.mrb[0].mxu0 %v395
      %v530 = vpop.f32.mrb[0].mxu0
      %v531 = vadd.f32 %v361, %v530
      %v532 = vpop.f32.mrb[0].mxu0
      %v533 = vpop.f32.mrb[0].mxu0
      %v534 = vadd.f32 %v361, %v533
      %v535 = vpop.f32.mrb[0].mxu0
      %536 = vmatprep.mubr.bf16.mxu0 0
      %537 = vmatmul.mubr.bf16.gmra.mrb[0].mxu0 %v398
      %v538 = vpop.f32.mrb[0].mxu0
      %v539 = vadd.f32 %v361, %v538
      %v540 = vpop.f32.mrb[0].mxu0
      %v541 = vpop.f32.mrb[0].mxu0
      %v542 = vadd.f32 %v361, %v541
      %v543 = vpop.f32.mrb[0].mxu0
      %544 = vmatprep.mubr.bf16.mxu0 0
      %545 = vmatmul.mubr.bf16.gmra.mrb[0].mxu0 %v401
      %v546 = vpop.f32.mrb[0].mxu0
      %v547 = vadd.f32 %v361, %v546
      %v548 = vpop.f32.mrb[0].mxu0
      %v549 = vpop.f32.mrb[0].mxu0
      %v550 = vadd.f32 %v361, %v549
      %v551 = vpop.f32.mrb[0].mxu0
      %552 = vmatprep.mubr.bf16.mxu0 0
      %553 = vmatmul.mubr.bf16.gmra.mrb[0].mxu0 %v404
      %v554 = vpop.f32.mrb[0].mxu0
      %v555 = vadd.f32 %v361, %v554
      %v556 = vpop.f32.mrb[0].mxu0
      %v557 = vpop.f32.mrb[0].mxu0
      %v558 = vadd.f32 %v361, %v557
      %v559 = vpop.f32.mrb[0].mxu0
      %560 = vmatprep.mubr.bf16.mxu0 0
      %561 = vmatmul.mubr.bf16.gmra.mrb[0].mxu0 %v407
      %v562 = vpop.f32.mrb[0].mxu0
      %v563 = vadd.f32 %v361, %v562
      %v564 = vpop.f32.mrb[0].mxu0
      %v565 = vpop.f32.mrb[0].mxu0
      %v566 = vadd.f32 %v361, %v565
      %v567 = vpop.f32.mrb[0].mxu0
      %568 = vmatprep.mubr.bf16.mxu0 0
      %569 = vmatmul.mubr.bf16.gmra.mrb[0].mxu0 %v410
      %v570 = vpop.f32.mrb[0].mxu0
      %v571 = vadd.f32 %v361, %v570
      %v572 = vpop.f32.mrb[0].mxu0
      %v573 = vpop.f32.mrb[0].mxu0
      %v574 = vadd.f32 %v361, %v573
      %v575 = vpop.f32.mrb[0].mxu0
      %576 = vdwg.mxu0
      %v577 = vmax.f32 %v451, 0.0
      %v578 = vmax.f32 %v454, 0.0
      %v579 = vmax.f32 %v459, 0.0
      %v580 = vmax.f32 %v462, 0.0
      %v581 = vmax.f32 %v467, 0.0
      %v582 = vmax.f32 %v470, 0.0
      %v583 = vmax.f32 %v475, 0.0
      %v584 = vmax.f32 %v478, 0.0
      %v585 = vmax.f32 %v483, 0.0
      %v586 = vmax.f32 %v486, 0.0
      %v587 = vmax.f32 %v491, 0.0
      %v588 = vmax.f32 %v494, 0.0
      %v589 = vmax.f32 %v499, 0.0
      %v590 = vmax.f32 %v502, 0.0
      %v591 = vmax.f32 %v507, 0.0
      %v592 = vmax.f32 %v510, 0.0
      %v593 = vmax.f32 %v515, 0.0
      %v594 = vmax.f32 %v518, 0.0
      %v595 = vmax.f32 %v523, 0.0
      %v596 = vmax.f32 %v526, 0.0
      %v597 = vmax.f32 %v531, 0.0
      %v598 = vmax.f32 %v534, 0.0
      %v599 = vmax.f32 %v539, 0.0
      %v600 = vmax.f32 %v542, 0.0
      %v601 = vmax.f32 %v547, 0.0
      %v602 = vmax.f32 %v550, 0.0
      %v603 = vmax.f32 %v555, 0.0
      %v604 = vmax.f32 %v558, 0.0
      %v605 = vmax.f32 %v563, 0.0
      %v606 = vmax.f32 %v566, 0.0
      %v607 = vmax.f32 %v571, 0.0
      %v608 = vmax.f32 %v574, 0.0
      %609 = vst [vmem:[#allocation2] sm:$0xff] 0.0
      %610 = vst [vmem:[#allocation2 + $0x8] sm:$0x3] 0.0
      %s611 = scalar_lea.vmem [#allocation2], 144
      %612 = vst [vmem:[%s611] sm:$0xff] 0.0
      %613 = vst [vmem:[%s611 + $0x8] sm:$0x3] 0.0
      %s614 = scalar_lea.vmem [#allocation2], 16
      %615 = vst [vmem:[%s614] sm:$0x1] 0.0
      %616 = vst [vmem:[%s614 + $0x10] sm:$0x1] 0.0
      %617 = vst [vmem:[%s614 + $0x20] sm:$0x1] 0.0
      %618 = vst [vmem:[%s614 + $0x30] sm:$0x1] 0.0
      %619 = vst [vmem:[%s614 + $0x40] sm:$0x1] 0.0
      %620 = vst [vmem:[%s614 + $0x50] sm:$0x1] 0.0
      %621 = vst [vmem:[%s614 + $0x60] sm:$0x1] 0.0
      %622 = vst [vmem:[%s614 + $0x70] sm:$0x1] 0.0
      %623 = vst [vmem:[%s614 + $0x9] sm:$0x1] 0.0
      %624 = vst [vmem:[%s614 + $0x19] sm:$0x1] 0.0
      %625 = vst [vmem:[%s614 + $0x29] sm:$0x1] 0.0
      %626 = vst [vmem:[%s614 + $0x39] sm:$0x1] 0.0
      %627 = vst [vmem:[%s614 + $0x49] sm:$0x1] 0.0
      %628 = vst [vmem:[%s614 + $0x59] sm:$0x1] 0.0
      %629 = vst [vmem:[%s614 + $0x69] sm:$0x1] 0.0
      %630 = vst [vmem:[%s614 + $0x79] sm:$0x1] 0.0
      %631 = vst [vmem:[%s614 + $0x1] sm:$0xff] %v577
      %632 = vst [vmem:[%s614 + $0x11] sm:$0xff] %v578
      %633 = vst [vmem:[%s614 + $0x21] sm:$0xff] %v579
      %634 = vst [vmem:[%s614 + $0x31] sm:$0xff] %v580
      %635 = vst [vmem:[%s614 + $0x41] sm:$0xff] %v581
      %636 = vst [vmem:[%s614 + $0x51] sm:$0xff] %v582
      %637 = vst [vmem:[%s614 + $0x61] sm:$0xff] %v583
      %638 = vst [vmem:[%s614 + $0x71] sm:$0xff] %v584
      %639 = vst [vmem:[#allocation3] sm:$0xff] 0.0
      %640 = vst [vmem:[#allocation3 + $0x8] sm:$0x3] 0.0
      %s641 = scalar_lea.vmem [#allocation3], 144
      %642 = vst [vmem:[%s641] sm:$0xff] 0.0
      %643 = vst [vmem:[%s641 + $0x8] sm:$0x3] 0.0
      %s644 = scalar_lea.vmem [#allocation3], 16
      %645 = vst [vmem:[%s644] sm:$0x1] 0.0
      %646 = vst [vmem:[%s644 + $0x10] sm:$0x1] 0.0
      %647 = vst [vmem:[%s644 + $0x20] sm:$0x1] 0.0
      %648 = vst [vmem:[%s644 + $0x30] sm:$0x1] 0.0
      %649 = vst [vmem:[%s644 + $0x40] sm:$0x1] 0.0
      %650 = vst [vmem:[%s644 + $0x50] sm:$0x1] 0.0
      %651 = vst [vmem:[%s644 + $0x60] sm:$0x1] 0.0
      %652 = vst [vmem:[%s644 + $0x70] sm:$0x1] 0.0
      %653 = vst [vmem:[%s644 + $0x9] sm:$0x1] 0.0
      %654 = vst [vmem:[%s644 + $0x19] sm:$0x1] 0.0
      %655 = vst [vmem:[%s644 + $0x29] sm:$0x1] 0.0
      %656 = vst [vmem:[%s644 + $0x39] sm:$0x1] 0.0
      %657 = vst [vmem:[%s644 + $0x49] sm:$0x1] 0.0
      %658 = vst [vmem:[%s644 + $0x59] sm:$0x1] 0.0
      %659 = vst [vmem:[%s644 + $0x69] sm:$0x1] 0.0
      %660 = vst [vmem:[%s644 + $0x79] sm:$0x1] 0.0
      %661 = vst [vmem:[%s644 + $0x1] sm:$0xff] %v585
      %662 = vst [vmem:[%s644 + $0x11] sm:$0xff] %v586
      %663 = vst [vmem:[%s644 + $0x21] sm:$0xff] %v587
      %664 = vst [vmem:[%s644 + $0x31] sm:$0xff] %v588
      %665 = vst [vmem:[%s644 + $0x41] sm:$0xff] %v589
      %666 = vst [vmem:[%s644 + $0x51] sm:$0xff] %v590
      %667 = vst [vmem:[%s644 + $0x61] sm:$0xff] %v591
      %668 = vst [vmem:[%s644 + $0x71] sm:$0xff] %v592
      %669 = vst [vmem:[#allocation4] sm:$0xff] 0.0
      %670 = vst [vmem:[#allocation4 + $0x8] sm:$0x3] 0.0
      %s671 = scalar_lea.vmem [#allocation4], 144
      %672 = vst [vmem:[%s671] sm:$0xff] 0.0
      %673 = vst [vmem:[%s671 + $0x8] sm:$0x3] 0.0
      %s674 = scalar_lea.vmem [#allocation4], 16
      %675 = vst [vmem:[%s674] sm:$0x1] 0.0
      %676 = vst [vmem:[%s674 + $0x10] sm:$0x1] 0.0
      %677 = vst [vmem:[%s674 + $0x20] sm:$0x1] 0.0
      %678 = vst [vmem:[%s674 + $0x30] sm:$0x1] 0.0
      %679 = vst [vmem:[%s674 + $0x40] sm:$0x1] 0.0
      %680 = vst [vmem:[%s674 + $0x50] sm:$0x1] 0.0
      %681 = vst [vmem:[%s674 + $0x60] sm:$0x1] 0.0
      %682 = vst [vmem:[%s674 + $0x70] sm:$0x1] 0.0
      %683 = vst [vmem:[%s674 + $0x9] sm:$0x1] 0.0
      %684 = vst [vmem:[%s674 + $0x19] sm:$0x1] 0.0
      %685 = vst [vmem:[%s674 + $0x29] sm:$0x1] 0.0
      %686 = vst [vmem:[%s674 + $0x39] sm:$0x1] 0.0
      %687 = vst [vmem:[%s674 + $0x49] sm:$0x1] 0.0
      %688 = vst [vmem:[%s674 + $0x59] sm:$0x1] 0.0
      %689 = vst [vmem:[%s674 + $0x69] sm:$0x1] 0.0
      %690 = vst [vmem:[%s674 + $0x79] sm:$0x1] 0.0
      %691 = vst [vmem:[%s674 + $0x1] sm:$0xff] %v593
      %692 = vst [vmem:[%s674 + $0x11] sm:$0xff] %v594
      %693 = vst [vmem:[%s674 + $0x21] sm:$0xff] %v595
      %694 = vst [vmem:[%s674 + $0x31] sm:$0xff] %v596
      %695 = vst [vmem:[%s674 + $0x41] sm:$0xff] %v597
      %696 = vst [vmem:[%s674 + $0x51] sm:$0xff] %v598
      %697 = vst [vmem:[%s674 + $0x61] sm:$0xff] %v599
      %698 = vst [vmem:[%s674 + $0x71] sm:$0xff] %v600
      %699 = vst [vmem:[#allocation5] sm:$0xff] 0.0
      %700 = vst [vmem:[#allocation5 + $0x8] sm:$0x3] 0.0
      %s701 = scalar_lea.vmem [#allocation5], 144
      %702 = vst [vmem:[%s701] sm:$0xff] 0.0
      %703 = vst [vmem:[%s701 + $0x8] sm:$0x3] 0.0
      %s704 = scalar_lea.vmem [#allocation5], 16
      %705 = vst [vmem:[%s704] sm:$0x1] 0.0
      %706 = vst [vmem:[%s704 + $0x10] sm:$0x1] 0.0
      %707 = vst [vmem:[%s704 + $0x20] sm:$0x1] 0.0
      %708 = vst [vmem:[%s704 + $0x30] sm:$0x1] 0.0
      %709 = vst [vmem:[%s704 + $0x40] sm:$0x1] 0.0
      %710 = vst [vmem:[%s704 + $0x50] sm:$0x1] 0.0
      %711 = vst [vmem:[%s704 + $0x60] sm:$0x1] 0.0
      %712 = vst [vmem:[%s704 + $0x70] sm:$0x1] 0.0
      %713 = vst [vmem:[%s704 + $0x9] sm:$0x1] 0.0
      %714 = vst [vmem:[%s704 + $0x19] sm:$0x1] 0.0
      %715 = vst [vmem:[%s704 + $0x29] sm:$0x1] 0.0
      %716 = vst [vmem:[%s704 + $0x39] sm:$0x1] 0.0
      %717 = vst [vmem:[%s704 + $0x49] sm:$0x1] 0.0
      %718 = vst [vmem:[%s704 + $0x59] sm:$0x1] 0.0
      %719 = vst [vmem:[%s704 + $0x69] sm:$0x1] 0.0
      %720 = vst [vmem:[%s704 + $0x79] sm:$0x1] 0.0
      %721 = vst [vmem:[%s704 + $0x1] sm:$0xff] %v601
      %722 = vst [vmem:[%s704 + $0x11] sm:$0xff] %v602
      %723 = vst [vmem:[%s704 + $0x21] sm:$0xff] %v603
      %724 = vst [vmem:[%s704 + $0x31] sm:$0xff] %v604
      %725 = vst [vmem:[%s704 + $0x41] sm:$0xff] %v605
      %726 = vst [vmem:[%s704 + $0x51] sm:$0xff] %v606
      %727 = vst [vmem:[%s704 + $0x61] sm:$0xff] %v607
      %728 = vst [vmem:[%s704 + $0x71] sm:$0xff] %v608
      %v729 = vld [vmem:[%s3] sm:$0xff]
      %v730 = vld [vmem:[%s3 + $0x8] sm:$0xff]
      %v731 = vld [vmem:[%s3 + $0x10] sm:$0xff]
      %v732 = vld [vmem:[%s3 + $0x18] sm:$0x1]
      %v733 = vld [vmem:[%s4] sm:$0x1]
      %v734 = vld [vmem:[#allocation2] sm:$0xff]
      %v735 = vld [vmem:[#allocation2 + $0x10] sm:$0xff]
      %v736 = vld [vmem:[#allocation2 + $0x20] sm:$0xff]
      %v737 = vld [vmem:[#allocation2 + $0x30] sm:$0xff]
      %v738 = vld [vmem:[#allocation2 + $0x40] sm:$0xff]
      %v739 = vld [vmem:[#allocation2 + $0x50] sm:$0xff]
      %v740 = vld [vmem:[#allocation2 + $0x60] sm:$0xff]
      %v741 = vld [vmem:[#allocation2 + $0x70] sm:$0xff]
      %v742 = vlaneseq
      %v743 = vshrl.u32 %v742, 7
      %v744 = vsub.s32 0, %v743
      %v745 = vrot.slane %v729, %v744
      %v746 = vmul.f32 %v734, %v745
      %v747 = vmul.f32 %v735, %v745
      %v748 = vmul.f32 %v736, %v745
      %v749 = vmul.f32 %v737, %v745
      %v750 = vmul.f32 %v738, %v745
      %v751 = vmul.f32 %v739, %v745
      %v752 = vmul.f32 %v740, %v745
      %v753 = vmul.f32 %v741, %v745
      %v754 = vld [vmem:[#allocation3] sm:$0xff]
      %v755 = vld [vmem:[#allocation3 + $0x10] sm:$0xff]
      %v756 = vld [vmem:[#allocation3 + $0x20] sm:$0xff]
      %v757 = vld [vmem:[#allocation3 + $0x30] sm:$0xff]
      %v758 = vld [vmem:[#allocation3 + $0x40] sm:$0xff]
      %v759 = vld [vmem:[#allocation3 + $0x50] sm:$0xff]
      %v760 = vld [vmem:[#allocation3 + $0x60] sm:$0xff]
      %v761 = vld [vmem:[#allocation3 + $0x70] sm:$0xff]
      %v762 = vlaneseq
      %v763 = vshrl.u32 %v762, 7
      %v764 = vsub.s32 1, %v763
      %v765 = vrot.slane %v729, %v764
      %v766 = vmul.f32 %v754, %v765
      %v767 = vmul.f32 %v755, %v765
      %v768 = vmul.f32 %v756, %v765
      %v769 = vmul.f32 %v757, %v765
      %v770 = vmul.f32 %v758, %v765
      %v771 = vmul.f32 %v759, %v765
      %v772 = vmul.f32 %v760, %v765
      %v773 = vmul.f32 %v761, %v765
      %v774 = vadd.f32 %v746, %v766
      %v775 = vadd.f32 %v747, %v767
      %v776 = vadd.f32 %v748, %v768
      %v777 = vadd.f32 %v749, %v769
      %v778 = vadd.f32 %v750, %v770
      %v779 = vadd.f32 %v751, %v771
      %v780 = vadd.f32 %v752, %v772
      %v781 = vadd.f32 %v753, %v773
      %v782 = vld [vmem:[#allocation2 + $0x1] sm:$0xff]
      %v783 = vld [vmem:[#allocation2 + $0x11] sm:$0xff]
      %v784 = vld [vmem:[#allocation2 + $0x21] sm:$0xff]
      %v785 = vld [vmem:[#allocation2 + $0x31] sm:$0xff]
      %v786 = vld [vmem:[#allocation2 + $0x41] sm:$0xff]
      %v787 = vld [vmem:[#allocation2 + $0x51] sm:$0xff]
      %v788 = vld [vmem:[#allocation2 + $0x61] sm:$0xff]
      %v789 = vld [vmem:[#allocation2 + $0x71] sm:$0xff]
      %v790 = vlaneseq
      %v791 = vshrl.u32 %v790, 7
      %v792 = vsub.s32 2, %v791
      %v793 = vrot.slane %v729, %v792
      %v794 = vmul.f32 %v782, %v793
      %v795 = vmul.f32 %v783, %v793
      %v796 = vmul.f32 %v784, %v793
      %v797 = vmul.f32 %v785, %v793
      %v798 = vmul.f32 %v786, %v793
      %v799 = vmul.f32 %v787, %v793
      %v800 = vmul.f32 %v788, %v793
      %v801 = vmul.f32 %v789, %v793
      %v802 = vadd.f32 %v774, %v794
      %v803 = vadd.f32 %v775, %v795
      %v804 = vadd.f32 %v776, %v796
      %v805 = vadd.f32 %v777, %v797
      %v806 = vadd.f32 %v778, %v798
      %v807 = vadd.f32 %v779, %v799
      %v808 = vadd.f32 %v780, %v800
      %v809 = vadd.f32 %v781, %v801
      %v810 = vld [vmem:[#allocation3 + $0x1] sm:$0xff]
      %v811 = vld [vmem:[#allocation3 + $0x11] sm:$0xff]
      %v812 = vld [vmem:[#allocation3 + $0x21] sm:$0xff]
      %v813 = vld [vmem:[#allocation3 + $0x31] sm:$0xff]
      %v814 = vld [vmem:[#allocation3 + $0x41] sm:$0xff]
      %v815 = vld [vmem:[#allocation3 + $0x51] sm:$0xff]
      %v816 = vld [vmem:[#allocation3 + $0x61] sm:$0xff]
      %v817 = vld [vmem:[#allocation3 + $0x71] sm:$0xff]
      %v818 = vlaneseq
      %v819 = vshrl.u32 %v818, 7
      %v820 = vsub.s32 3, %v819
      %v821 = vrot.slane %v729, %v820
      %v822 = vmul.f32 %v810, %v821
      %v823 = vmul.f32 %v811, %v821
      %v824 = vmul.f32 %v812, %v821
      %v825 = vmul.f32 %v813, %v821
      %v826 = vmul.f32 %v814, %v821
      %v827 = vmul.f32 %v815, %v821
      %v828 = vmul.f32 %v816, %v821
      %v829 = vmul.f32 %v817, %v821
      %v830 = vadd.f32 %v802, %v822
      %v831 = vadd.f32 %v803, %v823
      %v832 = vadd.f32 %v804, %v824
      %v833 = vadd.f32 %v805, %v825
      %v834 = vadd.f32 %v806, %v826
      %v835 = vadd.f32 %v807, %v827
      %v836 = vadd.f32 %v808, %v828
      %v837 = vadd.f32 %v809, %v829
      %v838 = vld [vmem:[#allocation2 + $0x2] sm:$0xff]
      %v839 = vld [vmem:[#allocation2 + $0x12] sm:$0xff]
      %v840 = vld [vmem:[#allocation2 + $0x22] sm:$0xff]
      %v841 = vld [vmem:[#allocation2 + $0x32] sm:$0xff]
      %v842 = vld [vmem:[#allocation2 + $0x42] sm:$0xff]
      %v843 = vld [vmem:[#allocation2 + $0x52] sm:$0xff]
      %v844 = vld [vmem:[#allocation2 + $0x62] sm:$0xff]
      %v845 = vld [vmem:[#allocation2 + $0x72] sm:$0xff]
      %v846 = vlaneseq
      %v847 = vshrl.u32 %v846, 7
      %v848 = vsub.s32 4, %v847
      %v849 = vrot.slane %v729, %v848
      %v850 = vmul.f32 %v838, %v849
      %v851 = vmul.f32 %v839, %v849
      %v852 = vmul.f32 %v840, %v849
      %v853 = vmul.f32 %v841, %v849
      %v854 = vmul.f32 %v842, %v849
      %v855 = vmul.f32 %v843, %v849
      %v856 = vmul.f32 %v844, %v849
      %v857 = vmul.f32 %v845, %v849
      %v858 = vadd.f32 %v830, %v850
      %v859 = vadd.f32 %v831, %v851
      %v860 = vadd.f32 %v832, %v852
      %v861 = vadd.f32 %v833, %v853
      %v862 = vadd.f32 %v834, %v854
      %v863 = vadd.f32 %v835, %v855
      %v864 = vadd.f32 %v836, %v856
      %v865 = vadd.f32 %v837, %v857
      %v866 = vld [vmem:[#allocation4] sm:$0xff]
      %v867 = vld [vmem:[#allocation4 + $0x10] sm:$0xff]
      %v868 = vld [vmem:[#allocation4 + $0x20] sm:$0xff]
      %v869 = vld [vmem:[#allocation4 + $0x30] sm:$0xff]
      %v870 = vld [vmem:[#allocation4 + $0x40] sm:$0xff]
      %v871 = vld [vmem:[#allocation4 + $0x50] sm:$0xff]
      %v872 = vld [vmem:[#allocation4 + $0x60] sm:$0xff]
      %v873 = vld [vmem:[#allocation4 + $0x70] sm:$0xff]
      %v874 = vlaneseq
      %v875 = vshrl.u32 %v874, 7
      %v876 = vsub.s32 5, %v875
      %v877 = vrot.slane %v729, %v876
      %v878 = vmul.f32 %v866, %v877
      %v879 = vmul.f32 %v867, %v877
      %v880 = vmul.f32 %v868, %v877
      %v881 = vmul.f32 %v869, %v877
      %v882 = vmul.f32 %v870, %v877
      %v883 = vmul.f32 %v871, %v877
      %v884 = vmul.f32 %v872, %v877
      %v885 = vmul.f32 %v873, %v877
      %v886 = vadd.f32 %v858, %v878
      %v887 = vadd.f32 %v859, %v879
      %v888 = vadd.f32 %v860, %v880
      %v889 = vadd.f32 %v861, %v881
      %v890 = vadd.f32 %v862, %v882
      %v891 = vadd.f32 %v863, %v883
      %v892 = vadd.f32 %v864, %v884
      %v893 = vadd.f32 %v865, %v885
      %v894 = vld [vmem:[#allocation5] sm:$0xff]
      %v895 = vld [vmem:[#allocation5 + $0x10] sm:$0xff]
      %v896 = vld [vmem:[#allocation5 + $0x20] sm:$0xff]
      %v897 = vld [vmem:[#allocation5 + $0x30] sm:$0xff]
      %v898 = vld [vmem:[#allocation5 + $0x40] sm:$0xff]
      %v899 = vld [vmem:[#allocation5 + $0x50] sm:$0xff]
      %v900 = vld [vmem:[#allocation5 + $0x60] sm:$0xff]
      %v901 = vld [vmem:[#allocation5 + $0x70] sm:$0xff]
      %v902 = vlaneseq
      %v903 = vshrl.u32 %v902, 7
      %v904 = vsub.s32 6, %v903
      %v905 = vrot.slane %v729, %v904
      %v906 = vmul.f32 %v894, %v905
      %v907 = vmul.f32 %v895, %v905
      %v908 = vmul.f32 %v896, %v905
      %v909 = vmul.f32 %v897, %v905
      %v910 = vmul.f32 %v898, %v905
      %v911 = vmul.f32 %v899, %v905
      %v912 = vmul.f32 %v900, %v905
      %v913 = vmul.f32 %v901, %v905
      %v914 = vadd.f32 %v886, %v906
      %v915 = vadd.f32 %v887, %v907
      %v916 = vadd.f32 %v888, %v908
      %v917 = vadd.f32 %v889, %v909
      %v918 = vadd.f32 %v890, %v910
      %v919 = vadd.f32 %v891, %v911
      %v920 = vadd.f32 %v892, %v912
      %v921 = vadd.f32 %v893, %v913
      %v922 = vld [vmem:[#allocation4 + $0x1] sm:$0xff]
      %v923 = vld [vmem:[#allocation4 + $0x11] sm:$0xff]
      %v924 = vld [vmem:[#allocation4 + $0x21] sm:$0xff]
      %v925 = vld [vmem:[#allocation4 + $0x31] sm:$0xff]
      %v926 = vld [vmem:[#allocation4 + $0x41] sm:$0xff]
      %v927 = vld [vmem:[#allocation4 + $0x51] sm:$0xff]
      %v928 = vld [vmem:[#allocation4 + $0x61] sm:$0xff]
      %v929 = vld [vmem:[#allocation4 + $0x71] sm:$0xff]
      %v930 = vlaneseq
      %v931 = vshrl.u32 %v930, 7
      %v932 = vsub.s32 7, %v931
      %v933 = vrot.slane %v729, %v932
      %v934 = vmul.f32 %v922, %v933
      %v935 = vmul.f32 %v923, %v933
      %v936 = vmul.f32 %v924, %v933
      %v937 = vmul.f32 %v925, %v933
      %v938 = vmul.f32 %v926, %v933
      %v939 = vmul.f32 %v927, %v933
      %v940 = vmul.f32 %v928, %v933
      %v941 = vmul.f32 %v929, %v933
      %v942 = vadd.f32 %v914, %v934
      %v943 = vadd.f32 %v915, %v935
      %v944 = vadd.f32 %v916, %v936
      %v945 = vadd.f32 %v917, %v937
      %v946 = vadd.f32 %v918, %v938
      %v947 = vadd.f32 %v919, %v939
      %v948 = vadd.f32 %v920, %v940
      %v949 = vadd.f32 %v921, %v941
      %v950 = vld [vmem:[#allocation5 + $0x1] sm:$0xff]
      %v951 = vld [vmem:[#allocation5 + $0x11] sm:$0xff]
      %v952 = vld [vmem:[#allocation5 + $0x21] sm:$0xff]
      %v953 = vld [vmem:[#allocation5 + $0x31] sm:$0xff]
      %v954 = vld [vmem:[#allocation5 + $0x41] sm:$0xff]
      %v955 = vld [vmem:[#allocation5 + $0x51] sm:$0xff]
      %v956 = vld [vmem:[#allocation5 + $0x61] sm:$0xff]
      %v957 = vld [vmem:[#allocation5 + $0x71] sm:$0xff]
      %v958 = vlaneseq
      %v959 = vshrl.u32 %v958, 7
      %v960 = vsub.s32 0, %v959
      %v961 = vrot.slane %v730, %v960
      %v962 = vmul.f32 %v950, %v961
      %v963 = vmul.f32 %v951, %v961
      %v964 = vmul.f32 %v952, %v961
      %v965 = vmul.f32 %v953, %v961
      %v966 = vmul.f32 %v954, %v961
      %v967 = vmul.f32 %v955, %v961
      %v968 = vmul.f32 %v956, %v961
      %v969 = vmul.f32 %v957, %v961
      %v970 = vadd.f32 %v942, %v962
      %v971 = vadd.f32 %v943, %v963
      %v972 = vadd.f32 %v944, %v964
      %v973 = vadd.f32 %v945, %v965
      %v974 = vadd.f32 %v946, %v966
      %v975 = vadd.f32 %v947, %v967
      %v976 = vadd.f32 %v948, %v968
      %v977 = vadd.f32 %v949, %v969
      %v978 = vld [vmem:[#allocation4 + $0x2] sm:$0xff]
      %v979 = vld [vmem:[#allocation4 + $0x12] sm:$0xff]
      %v980 = vld [vmem:[#allocation4 + $0x22] sm:$0xff]
      %v981 = vld [vmem:[#allocation4 + $0x32] sm:$0xff]
      %v982 = vld [vmem:[#allocation4 + $0x42] sm:$0xff]
      %v983 = vld [vmem:[#allocation4 + $0x52] sm:$0xff]
      %v984 = vld [vmem:[#allocation4 + $0x62] sm:$0xff]
      %v985 = vld [vmem:[#allocation4 + $0x72] sm:$0xff]
      %v986 = vlaneseq
      %v987 = vshrl.u32 %v986, 7
      %v988 = vsub.s32 1, %v987
      %v989 = vrot.slane %v730, %v988
      %v990 = vmul.f32 %v978, %v989
      %v991 = vmul.f32 %v979, %v989
      %v992 = vmul.f32 %v980, %v989
      %v993 = vmul.f32 %v981, %v989
      %v994 = vmul.f32 %v982, %v989
      %v995 = vmul.f32 %v983, %v989
      %v996 = vmul.f32 %v984, %v989
      %v997 = vmul.f32 %v985, %v989
      %v998 = vadd.f32 %v970, %v990
      %v999 = vadd.f32 %v971, %v991
      %v1000 = vadd.f32 %v972, %v992
      %v1001 = vadd.f32 %v973, %v993
      %v1002 = vadd.f32 %v974, %v994
      %v1003 = vadd.f32 %v975, %v995
      %v1004 = vadd.f32 %v976, %v996
      %v1005 = vadd.f32 %v977, %v997
      %v1006 = vld [vmem:[%s614] sm:$0xff]
      %v1007 = vld [vmem:[%s614 + $0x10] sm:$0xff]
      %v1008 = vld [vmem:[%s614 + $0x20] sm:$0xff]
      %v1009 = vld [vmem:[%s614 + $0x30] sm:$0xff]
      %v1010 = vld [vmem:[%s614 + $0x40] sm:$0xff]
      %v1011 = vld [vmem:[%s614 + $0x50] sm:$0xff]
      %v1012 = vld [vmem:[%s614 + $0x60] sm:$0xff]
      %v1013 = vld [vmem:[%s614 + $0x70] sm:$0xff]
      %v1014 = vlaneseq
      %v1015 = vshrl.u32 %v1014, 7
      %v1016 = vsub.s32 2, %v1015
      %v1017 = vrot.slane %v730, %v1016
      %v1018 = vmul.f32 %v1006, %v1017
      %v1019 = vmul.f32 %v1007, %v1017
      %v1020 = vmul.f32 %v1008, %v1017
      %v1021 = vmul.f32 %v1009, %v1017
      %v1022 = vmul.f32 %v1010, %v1017
      %v1023 = vmul.f32 %v1011, %v1017
      %v1024 = vmul.f32 %v1012, %v1017
      %v1025 = vmul.f32 %v1013, %v1017
      %v1026 = vadd.f32 %v998, %v1018
      %v1027 = vadd.f32 %v999, %v1019
      %v1028 = vadd.f32 %v1000, %v1020
      %v1029 = vadd.f32 %v1001, %v1021
      %v1030 = vadd.f32 %v1002, %v1022
      %v1031 = vadd.f32 %v1003, %v1023
      %v1032 = vadd.f32 %v1004, %v1024
      %v1033 = vadd.f32 %v1005, %v1025
      %v1034 = vld [vmem:[%s644] sm:$0xff]
      %v1035 = vld [vmem:[%s644 + $0x10] sm:$0xff]
      %v1036 = vld [vmem:[%s644 + $0x20] sm:$0xff]
      %v1037 = vld [vmem:[%s644 + $0x30] sm:$0xff]
      %v1038 = vld [vmem:[%s644 + $0x40] sm:$0xff]
      %v1039 = vld [vmem:[%s644 + $0x50] sm:$0xff]
      %v1040 = vld [vmem:[%s644 + $0x60] sm:$0xff]
      %v1041 = vld [vmem:[%s644 + $0x70] sm:$0xff]
      %v1042 = vlaneseq
      %v1043 = vshrl.u32 %v1042, 7
      %v1044 = vsub.s32 3, %v1043
      %v1045 = vrot.slane %v730, %v1044
      %v1046 = vmul.f32 %v1034, %v1045
      %v1047 = vmul.f32 %v1035, %v1045
      %v1048 = vmul.f32 %v1036, %v1045
      %v1049 = vmul.f32 %v1037, %v1045
      %v1050 = vmul.f32 %v1038, %v1045
      %v1051 = vmul.f32 %v1039, %v1045
      %v1052 = vmul.f32 %v1040, %v1045
      %v1053 = vmul.f32 %v1041, %v1045
      %v1054 = vadd.f32 %v1026, %v1046
      %v1055 = vadd.f32 %v1027, %v1047
      %v1056 = vadd.f32 %v1028, %v1048
      %v1057 = vadd.f32 %v1029, %v1049
      %v1058 = vadd.f32 %v1030, %v1050
      %v1059 = vadd.f32 %v1031, %v1051
      %v1060 = vadd.f32 %v1032, %v1052
      %v1061 = vadd.f32 %v1033, %v1053
      %v1062 = vld [vmem:[%s614 + $0x1] sm:$0xff]
      %v1063 = vld [vmem:[%s614 + $0x11] sm:$0xff]
      %v1064 = vld [vmem:[%s614 + $0x21] sm:$0xff]
      %v1065 = vld [vmem:[%s614 + $0x31] sm:$0xff]
      %v1066 = vld [vmem:[%s614 + $0x41] sm:$0xff]
      %v1067 = vld [vmem:[%s614 + $0x51] sm:$0xff]
      %v1068 = vld [vmem:[%s614 + $0x61] sm:$0xff]
      %v1069 = vld [vmem:[%s614 + $0x71] sm:$0xff]
      %v1070 = vlaneseq
      %v1071 = vshrl.u32 %v1070, 7
      %v1072 = vsub.s32 4, %v1071
      %v1073 = vrot.slane %v730, %v1072
      %v1074 = vmul.f32 %v1062, %v1073
      %v1075 = vmul.f32 %v1063, %v1073
      %v1076 = vmul.f32 %v1064, %v1073
      %v1077 = vmul.f32 %v1065, %v1073
      %v1078 = vmul.f32 %v1066, %v1073
      %v1079 = vmul.f32 %v1067, %v1073
      %v1080 = vmul.f32 %v1068, %v1073
      %v1081 = vmul.f32 %v1069, %v1073
      %v1082 = vadd.f32 %v1054, %v1074
      %v1083 = vadd.f32 %v1055, %v1075
      %v1084 = vadd.f32 %v1056, %v1076
      %v1085 = vadd.f32 %v1057, %v1077
      %v1086 = vadd.f32 %v1058, %v1078
      %v1087 = vadd.f32 %v1059, %v1079
      %v1088 = vadd.f32 %v1060, %v1080
      %v1089 = vadd.f32 %v1061, %v1081
      %v1090 = vld [vmem:[%s644 + $0x1] sm:$0xff]
      %v1091 = vld [vmem:[%s644 + $0x11] sm:$0xff]
      %v1092 = vld [vmem:[%s644 + $0x21] sm:$0xff]
      %v1093 = vld [vmem:[%s644 + $0x31] sm:$0xff]
      %v1094 = vld [vmem:[%s644 + $0x41] sm:$0xff]
      %v1095 = vld [vmem:[%s644 + $0x51] sm:$0xff]
      %v1096 = vld [vmem:[%s644 + $0x61] sm:$0xff]
      %v1097 = vld [vmem:[%s644 + $0x71] sm:$0xff]
      %v1098 = vlaneseq
      %v1099 = vshrl.u32 %v1098, 7
      %v1100 = vsub.s32 5, %v1099
      %v1101 = vrot.slane %v730, %v1100
      %v1102 = vmul.f32 %v1090, %v1101
      %v1103 = vmul.f32 %v1091, %v1101
      %v1104 = vmul.f32 %v1092, %v1101
      %v1105 = vmul.f32 %v1093, %v1101
      %v1106 = vmul.f32 %v1094, %v1101
      %v1107 = vmul.f32 %v1095, %v1101
      %v1108 = vmul.f32 %v1096, %v1101
      %v1109 = vmul.f32 %v1097, %v1101
      %v1110 = vadd.f32 %v1082, %v1102
      %v1111 = vadd.f32 %v1083, %v1103
      %v1112 = vadd.f32 %v1084, %v1104
      %v1113 = vadd.f32 %v1085, %v1105
      %v1114 = vadd.f32 %v1086, %v1106
      %v1115 = vadd.f32 %v1087, %v1107
      %v1116 = vadd.f32 %v1088, %v1108
      %v1117 = vadd.f32 %v1089, %v1109
      %v1118 = vld [vmem:[%s614 + $0x2] sm:$0xff]
      %v1119 = vld [vmem:[%s614 + $0x12] sm:$0xff]
      %v1120 = vld [vmem:[%s614 + $0x22] sm:$0xff]
      %v1121 = vld [vmem:[%s614 + $0x32] sm:$0xff]
      %v1122 = vld [vmem:[%s614 + $0x42] sm:$0xff]
      %v1123 = vld [vmem:[%s614 + $0x52] sm:$0xff]
      %v1124 = vld [vmem:[%s614 + $0x62] sm:$0xff]
      %v1125 = vld [vmem:[%s614 + $0x72] sm:$0xff]
      %v1126 = vlaneseq
      %v1127 = vshrl.u32 %v1126, 7
      %v1128 = vsub.s32 6, %v1127
      %v1129 = vrot.slane %v730, %v1128
      %v1130 = vmul.f32 %v1118, %v1129
      %v1131 = vmul.f32 %v1119, %v1129
      %v1132 = vmul.f32 %v1120, %v1129
      %v1133 = vmul.f32 %v1121, %v1129
      %v1134 = vmul.f32 %v1122, %v1129
      %v1135 = vmul.f32 %v1123, %v1129
      %v1136 = vmul.f32 %v1124, %v1129
      %v1137 = vmul.f32 %v1125, %v1129
      %v1138 = vadd.f32 %v1110, %v1130
      %v1139 = vadd.f32 %v1111, %v1131
      %v1140 = vadd.f32 %v1112, %v1132
      %v1141 = vadd.f32 %v1113, %v1133
      %v1142 = vadd.f32 %v1114, %v1134
      %v1143 = vadd.f32 %v1115, %v1135
      %v1144 = vadd.f32 %v1116, %v1136
      %v1145 = vadd.f32 %v1117, %v1137
      %v1146 = vld [vmem:[%s674] sm:$0xff]
      %v1147 = vld [vmem:[%s674 + $0x10] sm:$0xff]
      %v1148 = vld [vmem:[%s674 + $0x20] sm:$0xff]
      %v1149 = vld [vmem:[%s674 + $0x30] sm:$0xff]
      %v1150 = vld [vmem:[%s674 + $0x40] sm:$0xff]
      %v1151 = vld [vmem:[%s674 + $0x50] sm:$0xff]
      %v1152 = vld [vmem:[%s674 + $0x60] sm:$0xff]
      %v1153 = vld [vmem:[%s674 + $0x70] sm:$0xff]
      %v1154 = vlaneseq
      %v1155 = vshrl.u32 %v1154, 7
      %v1156 = vsub.s32 7, %v1155
      %v1157 = vrot.slane %v730, %v1156
      %v1158 = vmul.f32 %v1146, %v1157
      %v1159 = vmul.f32 %v1147, %v1157
      %v1160 = vmul.f32 %v1148, %v1157
      %v1161 = vmul.f32 %v1149, %v1157
      %v1162 = vmul.f32 %v1150, %v1157
      %v1163 = vmul.f32 %v1151, %v1157
      %v1164 = vmul.f32 %v1152, %v1157
      %v1165 = vmul.f32 %v1153, %v1157
      %v1166 = vadd.f32 %v1138, %v1158
      %v1167 = vadd.f32 %v1139, %v1159
      %v1168 = vadd.f32 %v1140, %v1160
      %v1169 = vadd.f32 %v1141, %v1161
      %v1170 = vadd.f32 %v1142, %v1162
      %v1171 = vadd.f32 %v1143, %v1163
      %v1172 = vadd.f32 %v1144, %v1164
      %v1173 = vadd.f32 %v1145, %v1165
      %v1174 = vld [vmem:[%s704] sm:$0xff]
      %v1175 = vld [vmem:[%s704 + $0x10] sm:$0xff]
      %v1176 = vld [vmem:[%s704 + $0x20] sm:$0xff]
      %v1177 = vld [vmem:[%s704 + $0x30] sm:$0xff]
      %v1178 = vld [vmem:[%s704 + $0x40] sm:$0xff]
      %v1179 = vld [vmem:[%s704 + $0x50] sm:$0xff]
      %v1180 = vld [vmem:[%s704 + $0x60] sm:$0xff]
      %v1181 = vld [vmem:[%s704 + $0x70] sm:$0xff]
      %v1182 = vlaneseq
      %v1183 = vshrl.u32 %v1182, 7
      %v1184 = vsub.s32 0, %v1183
      %v1185 = vrot.slane %v731, %v1184
      %v1186 = vmul.f32 %v1174, %v1185
      %v1187 = vmul.f32 %v1175, %v1185
      %v1188 = vmul.f32 %v1176, %v1185
      %v1189 = vmul.f32 %v1177, %v1185
      %v1190 = vmul.f32 %v1178, %v1185
      %v1191 = vmul.f32 %v1179, %v1185
      %v1192 = vmul.f32 %v1180, %v1185
      %v1193 = vmul.f32 %v1181, %v1185
      %v1194 = vadd.f32 %v1166, %v1186
      %v1195 = vadd.f32 %v1167, %v1187
      %v1196 = vadd.f32 %v1168, %v1188
      %v1197 = vadd.f32 %v1169, %v1189
      %v1198 = vadd.f32 %v1170, %v1190
      %v1199 = vadd.f32 %v1171, %v1191
      %v1200 = vadd.f32 %v1172, %v1192
      %v1201 = vadd.f32 %v1173, %v1193
      %v1202 = vld [vmem:[%s674 + $0x1] sm:$0xff]
      %v1203 = vld [vmem:[%s674 + $0x11] sm:$0xff]
      %v1204 = vld [vmem:[%s674 + $0x21] sm:$0xff]
      %v1205 = vld [vmem:[%s674 + $0x31] sm:$0xff]
      %v1206 = vld [vmem:[%s674 + $0x41] sm:$0xff]
      %v1207 = vld [vmem:[%s674 + $0x51] sm:$0xff]
      %v1208 = vld [vmem:[%s674 + $0x61] sm:$0xff]
      %v1209 = vld [vmem:[%s674 + $0x71] sm:$0xff]
      %v1210 = vlaneseq
      %v1211 = vshrl.u32 %v1210, 7
      %v1212 = vsub.s32 1, %v1211
      %v1213 = vrot.slane %v731, %v1212
      %v1214 = vmul.f32 %v1202, %v1213
      %v1215 = vmul.f32 %v1203, %v1213
      %v1216 = vmul.f32 %v1204, %v1213
      %v1217 = vmul.f32 %v1205, %v1213
      %v1218 = vmul.f32 %v1206, %v1213
      %v1219 = vmul.f32 %v1207, %v1213
      %v1220 = vmul.f32 %v1208, %v1213
      %v1221 = vmul.f32 %v1209, %v1213
      %v1222 = vadd.f32 %v1194, %v1214
      %v1223 = vadd.f32 %v1195, %v1215
      %v1224 = vadd.f32 %v1196, %v1216
      %v1225 = vadd.f32 %v1197, %v1217
      %v1226 = vadd.f32 %v1198, %v1218
      %v1227 = vadd.f32 %v1199, %v1219
      %v1228 = vadd.f32 %v1200, %v1220
      %v1229 = vadd.f32 %v1201, %v1221
      %v1230 = vld [vmem:[%s704 + $0x1] sm:$0xff]
      %v1231 = vld [vmem:[%s704 + $0x11] sm:$0xff]
      %v1232 = vld [vmem:[%s704 + $0x21] sm:$0xff]
      %v1233 = vld [vmem:[%s704 + $0x31] sm:$0xff]
      %v1234 = vld [vmem:[%s704 + $0x41] sm:$0xff]
      %v1235 = vld [vmem:[%s704 + $0x51] sm:$0xff]
      %v1236 = vld [vmem:[%s704 + $0x61] sm:$0xff]
      %v1237 = vld [vmem:[%s704 + $0x71] sm:$0xff]
      %v1238 = vlaneseq
      %v1239 = vshrl.u32 %v1238, 7
      %v1240 = vsub.s32 2, %v1239
      %v1241 = vrot.slane %v731, %v1240
      %v1242 = vmul.f32 %v1230, %v1241
      %v1243 = vmul.f32 %v1231, %v1241
      %v1244 = vmul.f32 %v1232, %v1241
      %v1245 = vmul.f32 %v1233, %v1241
      %v1246 = vmul.f32 %v1234, %v1241
      %v1247 = vmul.f32 %v1235, %v1241
      %v1248 = vmul.f32 %v1236, %v1241
      %v1249 = vmul.f32 %v1237, %v1241
      %v1250 = vadd.f32 %v1222, %v1242
      %v1251 = vadd.f32 %v1223, %v1243
      %v1252 = vadd.f32 %v1224, %v1244
      %v1253 = vadd.f32 %v1225, %v1245
      %v1254 = vadd.f32 %v1226, %v1246
      %v1255 = vadd.f32 %v1227, %v1247
      %v1256 = vadd.f32 %v1228, %v1248
      %v1257 = vadd.f32 %v1229, %v1249
      %v1258 = vld [vmem:[%s674 + $0x2] sm:$0xff]
      %v1259 = vld [vmem:[%s674 + $0x12] sm:$0xff]
      %v1260 = vld [vmem:[%s674 + $0x22] sm:$0xff]
      %v1261 = vld [vmem:[%s674 + $0x32] sm:$0xff]
      %v1262 = vld [vmem:[%s674 + $0x42] sm:$0xff]
      %v1263 = vld [vmem:[%s674 + $0x52] sm:$0xff]
      %v1264 = vld [vmem:[%s674 + $0x62] sm:$0xff]
      %v1265 = vld [vmem:[%s674 + $0x72] sm:$0xff]
      %v1266 = vlaneseq
      %v1267 = vshrl.u32 %v1266, 7
      %v1268 = vsub.s32 3, %v1267
      %v1269 = vrot.slane %v731, %v1268
      %v1270 = vmul.f32 %v1258, %v1269
      %v1271 = vmul.f32 %v1259, %v1269
      %v1272 = vmul.f32 %v1260, %v1269
      %v1273 = vmul.f32 %v1261, %v1269
      %v1274 = vmul.f32 %v1262, %v1269
      %v1275 = vmul.f32 %v1263, %v1269
      %v1276 = vmul.f32 %v1264, %v1269
      %v1277 = vmul.f32 %v1265, %v1269
      %v1278 = vadd.f32 %v1250, %v1270
      %v1279 = vadd.f32 %v1251, %v1271
      %v1280 = vadd.f32 %v1252, %v1272
      %v1281 = vadd.f32 %v1253, %v1273
      %v1282 = vadd.f32 %v1254, %v1274
      %v1283 = vadd.f32 %v1255, %v1275
      %v1284 = vadd.f32 %v1256, %v1276
      %v1285 = vadd.f32 %v1257, %v1277
      %s1286 = scalar_lea.vmem [#allocation2], 32
      %v1287 = vld [vmem:[%s1286] sm:$0xff]
      %v1288 = vld [vmem:[%s1286 + $0x10] sm:$0xff]
      %v1289 = vld [vmem:[%s1286 + $0x20] sm:$0xff]
      %v1290 = vld [vmem:[%s1286 + $0x30] sm:$0xff]
      %v1291 = vld [vmem:[%s1286 + $0x40] sm:$0xff]
      %v1292 = vld [vmem:[%s1286 + $0x50] sm:$0xff]
      %v1293 = vld [vmem:[%s1286 + $0x60] sm:$0xff]
      %v1294 = vld [vmem:[%s1286 + $0x70] sm:$0xff]
      %v1295 = vlaneseq
      %v1296 = vshrl.u32 %v1295, 7
      %v1297 = vsub.s32 4, %v1296
      %v1298 = vrot.slane %v731, %v1297
      %v1299 = vmul.f32 %v1287, %v1298
      %v1300 = vmul.f32 %v1288, %v1298
      %v1301 = vmul.f32 %v1289, %v1298
      %v1302 = vmul.f32 %v1290, %v1298
      %v1303 = vmul.f32 %v1291, %v1298
      %v1304 = vmul.f32 %v1292, %v1298
      %v1305 = vmul.f32 %v1293, %v1298
      %v1306 = vmul.f32 %v1294, %v1298
      %v1307 = vadd.f32 %v1278, %v1299
      %v1308 = vadd.f32 %v1279, %v1300
      %v1309 = vadd.f32 %v1280, %v1301
      %v1310 = vadd.f32 %v1281, %v1302
      %v1311 = vadd.f32 %v1282, %v1303
      %v1312 = vadd.f32 %v1283, %v1304
      %v1313 = vadd.f32 %v1284, %v1305
      %v1314 = vadd.f32 %v1285, %v1306
      %s1315 = scalar_lea.vmem [#allocation3], 32
      %v1316 = vld [vmem:[%s1315] sm:$0xff]
      %v1317 = vld [vmem:[%s1315 + $0x10] sm:$0xff]
      %v1318 = vld [vmem:[%s1315 + $0x20] sm:$0xff]
      %v1319 = vld [vmem:[%s1315 + $0x30] sm:$0xff]
      %v1320 = vld [vmem:[%s1315 + $0x40] sm:$0xff]
      %v1321 = vld [vmem:[%s1315 + $0x50] sm:$0xff]
      %v1322 = vld [vmem:[%s1315 + $0x60] sm:$0xff]
      %v1323 = vld [vmem:[%s1315 + $0x70] sm:$0xff]
      %v1324 = vlaneseq
      %v1325 = vshrl.u32 %v1324, 7
      %v1326 = vsub.s32 5, %v1325
      %v1327 = vrot.slane %v731, %v1326
      %v1328 = vmul.f32 %v1316, %v1327
      %v1329 = vmul.f32 %v1317, %v1327
      %v1330 = vmul.f32 %v1318, %v1327
      %v1331 = vmul.f32 %v1319, %v1327
      %v1332 = vmul.f32 %v1320, %v1327
      %v1333 = vmul.f32 %v1321, %v1327
      %v1334 = vmul.f32 %v1322, %v1327
      %v1335 = vmul.f32 %v1323, %v1327
      %v1336 = vadd.f32 %v1307, %v1328
      %v1337 = vadd.f32 %v1308, %v1329
      %v1338 = vadd.f32 %v1309, %v1330
      %v1339 = vadd.f32 %v1310, %v1331
      %v1340 = vadd.f32 %v1311, %v1332
      %v1341 = vadd.f32 %v1312, %v1333
      %v1342 = vadd.f32 %v1313, %v1334
      %v1343 = vadd.f32 %v1314, %v1335
      %v1344 = vld [vmem:[%s1286 + $0x1] sm:$0xff]
      %v1345 = vld [vmem:[%s1286 + $0x11] sm:$0xff]
      %v1346 = vld [vmem:[%s1286 + $0x21] sm:$0xff]
      %v1347 = vld [vmem:[%s1286 + $0x31] sm:$0xff]
      %v1348 = vld [vmem:[%s1286 + $0x41] sm:$0xff]
      %v1349 = vld [vmem:[%s1286 + $0x51] sm:$0xff]
      %v1350 = vld [vmem:[%s1286 + $0x61] sm:$0xff]
      %v1351 = vld [vmem:[%s1286 + $0x71] sm:$0xff]
      %v1352 = vlaneseq
      %v1353 = vshrl.u32 %v1352, 7
      %v1354 = vsub.s32 6, %v1353
      %v1355 = vrot.slane %v731, %v1354
      %v1356 = vmul.f32 %v1344, %v1355
      %v1357 = vmul.f32 %v1345, %v1355
      %v1358 = vmul.f32 %v1346, %v1355
      %v1359 = vmul.f32 %v1347, %v1355
      %v1360 = vmul.f32 %v1348, %v1355
      %v1361 = vmul.f32 %v1349, %v1355
      %v1362 = vmul.f32 %v1350, %v1355
      %v1363 = vmul.f32 %v1351, %v1355
      %v1364 = vadd.f32 %v1336, %v1356
      %v1365 = vadd.f32 %v1337, %v1357
      %v1366 = vadd.f32 %v1338, %v1358
      %v1367 = vadd.f32 %v1339, %v1359
      %v1368 = vadd.f32 %v1340, %v1360
      %v1369 = vadd.f32 %v1341, %v1361
      %v1370 = vadd.f32 %v1342, %v1362
      %v1371 = vadd.f32 %v1343, %v1363
      %v1372 = vld [vmem:[%s1315 + $0x1] sm:$0xff]
      %v1373 = vld [vmem:[%s1315 + $0x11] sm:$0xff]
      %v1374 = vld [vmem:[%s1315 + $0x21] sm:$0xff]
      %v1375 = vld [vmem:[%s1315 + $0x31] sm:$0xff]
      %v1376 = vld [vmem:[%s1315 + $0x41] sm:$0xff]
      %v1377 = vld [vmem:[%s1315 + $0x51] sm:$0xff]
      %v1378 = vld [vmem:[%s1315 + $0x61] sm:$0xff]
      %v1379 = vld [vmem:[%s1315 + $0x71] sm:$0xff]
      %v1380 = vlaneseq
      %v1381 = vshrl.u32 %v1380, 7
      %v1382 = vsub.s32 7, %v1381
      %v1383 = vrot.slane %v731, %v1382
      %v1384 = vmul.f32 %v1372, %v1383
      %v1385 = vmul.f32 %v1373, %v1383
      %v1386 = vmul.f32 %v1374, %v1383
      %v1387 = vmul.f32 %v1375, %v1383
      %v1388 = vmul.f32 %v1376, %v1383
      %v1389 = vmul.f32 %v1377, %v1383
      %v1390 = vmul.f32 %v1378, %v1383
      %v1391 = vmul.f32 %v1379, %v1383
      %v1392 = vadd.f32 %v1364, %v1384
      %v1393 = vadd.f32 %v1365, %v1385
      %v1394 = vadd.f32 %v1366, %v1386
      %v1395 = vadd.f32 %v1367, %v1387
      %v1396 = vadd.f32 %v1368, %v1388
      %v1397 = vadd.f32 %v1369, %v1389
      %v1398 = vadd.f32 %v1370, %v1390
      %v1399 = vadd.f32 %v1371, %v1391
      %v1400 = vld [vmem:[%s1286 + $0x2] sm:$0xff]
      %v1401 = vld [vmem:[%s1286 + $0x12] sm:$0xff]
      %v1402 = vld [vmem:[%s1286 + $0x22] sm:$0xff]
      %v1403 = vld [vmem:[%s1286 + $0x32] sm:$0xff]
      %v1404 = vld [vmem:[%s1286 + $0x42] sm:$0xff]
      %v1405 = vld [vmem:[%s1286 + $0x52] sm:$0xff]
      %v1406 = vld [vmem:[%s1286 + $0x62] sm:$0xff]
      %v1407 = vld [vmem:[%s1286 + $0x72] sm:$0xff]
      %v1408 = vlaneseq
      %v1409 = vshrl.u32 %v1408, 7
      %v1410 = vsub.s32 0, %v1409
      %v1411 = vrot.slane %v732, %v1410
      %v1412 = vmul.f32 %v1400, %v1411
      %v1413 = vmul.f32 %v1401, %v1411
      %v1414 = vmul.f32 %v1402, %v1411
      %v1415 = vmul.f32 %v1403, %v1411
      %v1416 = vmul.f32 %v1404, %v1411
      %v1417 = vmul.f32 %v1405, %v1411
      %v1418 = vmul.f32 %v1406, %v1411
      %v1419 = vmul.f32 %v1407, %v1411
      %v1420 = vadd.f32 %v1392, %v1412
      %v1421 = vadd.f32 %v1393, %v1413
      %v1422 = vadd.f32 %v1394, %v1414
      %v1423 = vadd.f32 %v1395, %v1415
      %v1424 = vadd.f32 %v1396, %v1416
      %v1425 = vadd.f32 %v1397, %v1417
      %v1426 = vadd.f32 %v1398, %v1418
      %v1427 = vadd.f32 %v1399, %v1419
      %v1429 = vlaneseq
      %v1430 = vshrl.u32 %v1429, 7
      %v1431 = vsub.s32 0, %v1430
      %v1432 = vrot.slane %v733, %v1431
      %v1434 = vadd.f32 %v1420, %v1432
      %v1435 = vadd.f32 %v1421, %v1432
      %v1436 = vadd.f32 %v1422, %v1432
      %v1437 = vadd.f32 %v1423, %v1432
      %v1438 = vadd.f32 %v1424, %v1432
      %v1439 = vadd.f32 %v1425, %v1432
      %v1440 = vadd.f32 %v1426, %v1432
      %v1441 = vadd.f32 %v1427, %v1432
      %v1442 = vmax.f32 %v1434, 0.0
      %v1443 = vmax.f32 %v1435, 0.0
      %v1444 = vmax.f32 %v1436, 0.0
      %v1445 = vmax.f32 %v1437, 0.0
      %v1446 = vmax.f32 %v1438, 0.0
      %v1447 = vmax.f32 %v1439, 0.0
      %v1448 = vmax.f32 %v1440, 0.0
      %v1449 = vmax.f32 %v1441, 0.0
      %v1450 = vpack.c.bf16 %v1443, %v1442
      %v1451 = vpack.c.bf16 %v1445, %v1444
      %v1452 = vpack.c.bf16 %v1447, %v1446
      %v1453 = vpack.c.bf16 %v1449, %v1448
      %v1454 = vld [vmem:[%s5] sm:$0xf]
      %v1455 = vld [vmem:[%s5 + $0x4] sm:$0xf]
      %v1456 = vld [vmem:[%s5 + $0x8] sm:$0xf]
      %v1457 = vld [vmem:[%s5 + $0xc] sm:$0xf]
      %v1458 = vld [vmem:[%s5 + $0x10] sm:$0xf]
      %v1459 = vld [vmem:[%s5 + $0x14] sm:$0xf]
      %v1460 = vld [vmem:[%s5 + $0x18] sm:$0xf]
      %v1461 = vld [vmem:[%s5 + $0x1c] sm:$0xf]
      %v1462 = vld [vmem:[%s5 + $0x20] sm:$0xf]
      %v1463 = vld [vmem:[%s5 + $0x24] sm:$0xf]
      %v1464 = vld [vmem:[%s5 + $0x28] sm:$0xf]
      %v1465 = vld [vmem:[%s5 + $0x2c] sm:$0xf]
      %v1466 = vld [vmem:[%s5 + $0x30] sm:$0xf]
      %v1467 = vld [vmem:[%s5 + $0x34] sm:$0xf]
      %v1468 = vld [vmem:[%s5 + $0x38] sm:$0xf]
      %v1469 = vld [vmem:[%s5 + $0x3c] sm:$0xf]
      %v1470 = vld [vmem:[%s6] sm:$0x1]
      %v1472 = vlaneseq
      %v1473 = vshrl.u32 %v1472, 7
      %v1474 = vsub.s32 0, %v1473
      %v1475 = vrot.slane %v1470, %v1474
      %v1493 = vunpack.c.l.b16 %v1454
      %v1494 = vunpack.c.l.b16 %v1455
      %v1495 = vunpack.c.l.b16 %v1456
      %v1496 = vunpack.c.l.b16 %v1457
      %v1497 = vunpack.c.l.b16 %v1458
      %v1498 = vunpack.c.l.b16 %v1459
      %v1499 = vunpack.c.l.b16 %v1460
      %v1500 = vunpack.c.l.b16 %v1461
      %v1501 = vunpack.c.l.b16 %v1462
      %v1502 = vunpack.c.l.b16 %v1463
      %v1503 = vunpack.c.l.b16 %v1464
      %v1504 = vunpack.c.l.b16 %v1465
      %v1505 = vunpack.c.l.b16 %v1466
      %v1506 = vunpack.c.l.b16 %v1467
      %v1507 = vunpack.c.l.b16 %v1468
      %v1508 = vunpack.c.l.b16 %v1469
      %v1509 = vpack.c.b16 %v1494, %v1493
      %v1510 = vpack.c.b16 %v1496, %v1495
      %v1511 = vpack.c.b16 %v1498, %v1497
      %v1512 = vpack.c.b16 %v1500, %v1499
      %v1513 = vpack.c.b16 %v1502, %v1501
      %v1514 = vpack.c.b16 %v1504, %v1503
      %v1515 = vpack.c.b16 %v1506, %v1505
      %v1516 = vpack.c.b16 %v1508, %v1507
      %1525 = vmatprep.subr.bf16.mxu0 0
      %1526 = vmatpush1.bf16.msra.mxu0 %v1509
      %1527 = vmatprep.subr.bf16.mxu0 0
      %1528 = vmatpush1.bf16.msra.mxu0 %v1510
      %1529 = vmatprep.subr.bf16.mxu0 0
      %1530 = vmatpush1.bf16.msra.mxu0 %v1511
      %1531 = vmatprep.subr.bf16.mxu0 0
      %1532 = vmatpush1.bf16.msra.mxu0 %v1512
      %1533 = vmatprep.subr.bf16.mxu0 0
      %1534 = vmatpush1.bf16.msra.mxu0 %v1513
      %1535 = vmatprep.subr.bf16.mxu0 0
      %1536 = vmatpush1.bf16.msra.mxu0 %v1514
      %1537 = vmatprep.subr.bf16.mxu0 0
      %1538 = vmatpush1.bf16.msra.mxu0 %v1515
      %1539 = vmatprep.subr.bf16.mxu0 0
      %1540 = vmatpush1.bf16.msra.mxu0 %v1516
      %1541 = vmatprep.subr.bf16.mxu0 0
      %1542 = vmatpush1.bf16.msra.mxu0 0
      %1543 = vmatprep.subr.bf16.mxu0 0
      %1544 = vmatpush1.bf16.msra.mxu0 0
      %1545 = vmatprep.subr.bf16.mxu0 0
      %1546 = vmatpush1.bf16.msra.mxu0 0
      %1547 = vmatprep.subr.bf16.mxu0 0
      %1548 = vmatpush1.bf16.msra.mxu0 0
      %1549 = vmatprep.subr.bf16.mxu0 0
      %1550 = vmatpush1.bf16.msra.mxu0 0
      %1551 = vmatprep.subr.bf16.mxu0 0
      %1552 = vmatpush1.bf16.msra.mxu0 0
      %1553 = vmatprep.subr.bf16.mxu0 0
      %1554 = vmatpush1.bf16.msra.mxu0 0
      %1555 = vmatprep.subr.bf16.mxu0 0
      %1556 = vmatpush1.bf16.msra.mxu0 0
      %1557 = vmatprep.mubr.bf16.mxu0 0
      %1558 = vmatmul.mubr.bf16.gmra.mrb[0].mxu0 %v1450
      %v1559 = vpop.f32.mrb[0].mxu0
      %v1560 = vadd.f32 %v1475, %v1559
      %v1561 = vpop.f32.mrb[0].mxu0
      %v1562 = vpop.f32.mrb[0].mxu0
      %v1563 = vadd.f32 %v1475, %v1562
      %v1564 = vpop.f32.mrb[0].mxu0
      %1565 = vmatprep.mubr.bf16.mxu0 0
      %1566 = vmatmul.mubr.bf16.gmra.mrb[0].mxu0 %v1451
      %v1567 = vpop.f32.mrb[0].mxu0
      %v1568 = vadd.f32 %v1475, %v1567
      %v1569 = vpop.f32.mrb[0].mxu0
      %v1570 = vpop.f32.mrb[0].mxu0
      %v1571 = vadd.f32 %v1475, %v1570
      %v1572 = vpop.f32.mrb[0].mxu0
      %1573 = vmatprep.mubr.bf16.mxu0 0
      %1574 = vmatmul.mubr.bf16.gmra.mrb[0].mxu0 %v1452
      %v1575 = vpop.f32.mrb[0].mxu0
      %v1576 = vadd.f32 %v1475, %v1575
      %v1577 = vpop.f32.mrb[0].mxu0
      %v1578 = vpop.f32.mrb[0].mxu0
      %v1579 = vadd.f32 %v1475, %v1578
      %v1580 = vpop.f32.mrb[0].mxu0
      %1581 = vmatprep.mubr.bf16.mxu0 0
      %1582 = vmatmul.mubr.bf16.gmra.mrb[0].mxu0 %v1453
      %v1583 = vpop.f32.mrb[0].mxu0
      %v1584 = vadd.f32 %v1475, %v1583
      %v1585 = vpop.f32.mrb[0].mxu0
      %v1586 = vpop.f32.mrb[0].mxu0
      %v1587 = vadd.f32 %v1475, %v1586
      %v1588 = vpop.f32.mrb[0].mxu0
      %1589 = vdwg.mxu0
      %v1590 = vadd.f32 %v307, %v315
      %v1591 = vadd.f32 %v308, %v316
      %v1592 = vadd.f32 %v309, %v317
      %v1593 = vadd.f32 %v310, %v318
      %v1594 = vadd.f32 %v311, %v319
      %v1595 = vadd.f32 %v312, %v320
      %v1596 = vadd.f32 %v313, %v321
      %v1597 = vadd.f32 %v314, %v322
      %v1598 = vadd.f32 %v1590, %v323
      %v1599 = vadd.f32 %v1591, %v324
      %v1600 = vadd.f32 %v1592, %v325
      %v1601 = vadd.f32 %v1593, %v326
      %v1602 = vadd.f32 %v1594, %v327
      %v1603 = vadd.f32 %v1595, %v328
      %v1604 = vadd.f32 %v1596, %v329
      %v1605 = vadd.f32 %v1597, %v330
      %v1606 = vadd.f32 %v1598, %v331
      %v1607 = vadd.f32 %v1599, %v332
      %v1608 = vadd.f32 %v1600, %v333
      %v1609 = vadd.f32 %v1601, %v334
      %v1610 = vadd.f32 %v1602, %v335
      %v1611 = vadd.f32 %v1603, %v336
      %v1612 = vadd.f32 %v1604, %v337
      %v1613 = vadd.f32 %v1605, %v338
      %v1614 = vmul.f32 %v1606, 0.25
      %v1615 = vmul.f32 %v1607, 0.25
      %v1616 = vmul.f32 %v1608, 0.25
      %v1617 = vmul.f32 %v1609, 0.25
      %v1618 = vmul.f32 %v1610, 0.25
      %v1619 = vmul.f32 %v1611, 0.25
      %v1620 = vmul.f32 %v1612, 0.25
      %v1621 = vmul.f32 %v1613, 0.25
      %v1622 = vpack.c.bf16 %v1615, %v1614
      %v1623 = vpack.c.bf16 %v1617, %v1616
      %v1624 = vpack.c.bf16 %v1619, %v1618
      %v1625 = vpack.c.bf16 %v1621, %v1620
      %v1626 = vld [vmem:[%s7] sm:$0xf]
      %v1628 = vsel %vm363, %v1622, 0
      %v1631 = vsel %vm363, %v1623, 0
      %v1634 = vsel %vm363, %v1624, 0
      %v1637 = vsel %vm363, %v1625, 0
      %v1640 = vsel %vm412, %v1626, 0
      %1642 = vmatprep.subr.bf16.mxu0 0
      %1643 = vmatpush1.bf16.msra.mxu0 %v1640
      %1644 = vmatprep.subr.bf16.mxu0 0
      %1645 = vmatpush1.bf16.msra.mxu0 0
      %1646 = vmatprep.subr.bf16.mxu0 0
      %1647 = vmatpush1.bf16.msra.mxu0 0
      %1648 = vmatprep.subr.bf16.mxu0 0
      %1649 = vmatpush1.bf16.msra.mxu0 0
      %1650 = vmatprep.subr.bf16.mxu0 0
      %1651 = vmatpush1.bf16.msra.mxu0 0
      %1652 = vmatprep.subr.bf16.mxu0 0
      %1653 = vmatpush1.bf16.msra.mxu0 0
      %1654 = vmatprep.subr.bf16.mxu0 0
      %1655 = vmatpush1.bf16.msra.mxu0 0
      %1656 = vmatprep.subr.bf16.mxu0 0
      %1657 = vmatpush1.bf16.msra.mxu0 0
      %1658 = vmatprep.subr.bf16.mxu0 0
      %1659 = vmatpush1.bf16.msra.mxu0 0
      %1660 = vmatprep.subr.bf16.mxu0 0
      %1661 = vmatpush1.bf16.msra.mxu0 0
      %1662 = vmatprep.subr.bf16.mxu0 0
      %1663 = vmatpush1.bf16.msra.mxu0 0
      %1664 = vmatprep.subr.bf16.mxu0 0
      %1665 = vmatpush1.bf16.msra.mxu0 0
      %1666 = vmatprep.subr.bf16.mxu0 0
      %1667 = vmatpush1.bf16.msra.mxu0 0
      %1668 = vmatprep.subr.bf16.mxu0 0
      %1669 = vmatpush1.bf16.msra.mxu0 0
      %1670 = vmatprep.subr.bf16.mxu0 0
      %1671 = vmatpush1.bf16.msra.mxu0 0
      %1672 = vmatprep.subr.bf16.mxu0 0
      %1673 = vmatpush1.bf16.msra.mxu0 0
      %1674 = vmatprep.mubr.bf16.mxu0 0
      %1675 = vmatmul.mubr.bf16.gmra.mrb[0].mxu0 %v1628
      %v1676 = vpop.f32.mrb[0].mxu0
      %v1677 = vadd.f32 0.0, %v1676
      %v1678 = vpop.f32.mrb[0].mxu0
      %v1679 = vpop.f32.mrb[0].mxu0
      %v1680 = vadd.f32 0.0, %v1679
      %v1681 = vpop.f32.mrb[0].mxu0
      %1682 = vmatprep.mubr.bf16.mxu0 0
      %1683 = vmatmul.mubr.bf16.gmra.mrb[0].mxu0 %v1631
      %v1684 = vpop.f32.mrb[0].mxu0
      %v1685 = vadd.f32 0.0, %v1684
      %v1686 = vpop.f32.mrb[0].mxu0
      %v1687 = vpop.f32.mrb[0].mxu0
      %v1688 = vadd.f32 0.0, %v1687
      %v1689 = vpop.f32.mrb[0].mxu0
      %1690 = vmatprep.mubr.bf16.mxu0 0
      %1691 = vmatmul.mubr.bf16.gmra.mrb[0].mxu0 %v1634
      %v1692 = vpop.f32.mrb[0].mxu0
      %v1693 = vadd.f32 0.0, %v1692
      %v1694 = vpop.f32.mrb[0].mxu0
      %v1695 = vpop.f32.mrb[0].mxu0
      %v1696 = vadd.f32 0.0, %v1695
      %v1697 = vpop.f32.mrb[0].mxu0
      %1698 = vmatprep.mubr.bf16.mxu0 0
      %1699 = vmatmul.mubr.bf16.gmra.mrb[0].mxu0 %v1637
      %v1700 = vpop.f32.mrb[0].mxu0
      %v1701 = vadd.f32 0.0, %v1700
      %v1702 = vpop.f32.mrb[0].mxu0
      %v1703 = vpop.f32.mrb[0].mxu0
      %v1704 = vadd.f32 0.0, %v1703
      %v1705 = vpop.f32.mrb[0].mxu0
      %1706 = vdwg.mxu0
      %v1707 = vadd.f32 %v1560, %v1677
      %v1708 = vadd.f32 %v1563, %v1680
      %v1709 = vadd.f32 %v1568, %v1685
      %v1710 = vadd.f32 %v1571, %v1688
      %v1711 = vadd.f32 %v1576, %v1693
      %v1712 = vadd.f32 %v1579, %v1696
      %v1713 = vadd.f32 %v1584, %v1701
      %v1714 = vadd.f32 %v1587, %v1704
      %1715 = vst [vmem:[%s305] sm:$0xff] %v1707
      %1716 = vst [vmem:[%s305 + $0x8] sm:$0xff] %v1708
      %1717 = vst [vmem:[%s305 + $0x10] sm:$0xff] %v1709
      %1718 = vst [vmem:[%s305 + $0x18] sm:$0xff] %v1710
      %1719 = vst [vmem:[%s305 + $0x20] sm:$0xff] %v1711
      %1720 = vst [vmem:[%s305 + $0x28] sm:$0xff] %v1712
      %1721 = vst [vmem:[%s305 + $0x30] sm:$0xff] %v1713
      %1722 = vst [vmem:[%s305 + $0x38] sm:$0xff] %v1714
      %p1723 = scmp.lt.s32.totalorder %s19, 1
      %s1724 = scalar_select %p1723, %s19, 1
      %s1725 = smul.addr %s1724, 8
      %s1726 = smul.addr %s1725, 8
      %s1727 = scalar_lea.vmem %s8, %s1726
      // Predicated region
      $region53: #{_lambda_.2} parent=51 // pred_check
        %p1728 = pneg %p210
      $region54: #{_lambda_.2} parent=51 // pred_check_branch
        %1730 = sbr.rel (%p1728) target = $region56
      $region55: #{_lambda_.2} parent=51 // pred_region
        _
      $region56: #{_lambda_.2} parent=51 // pred_fallthru
        _
    $region52: #{_lambda_.2} parent=5 // pred_fallthru
      _
    %p1731 = scmp.le.s32.totalorder 2, %s14
    // Predicated region
    $region57: #{_lambda_.2} parent=5 // pred_check
      %p1732 = pneg %p1731
    $region58: #{_lambda_.2} parent=5 // pred_check_branch
      %1734 = sbr.rel (%p1732) target = $region60
    $region59: #{_lambda_.2} parent=5 // pred_region
      %s1735 = ssub.s32 %s14, 2
      // Predicated region
      $region61: #{_lambda_.2} parent=59 // pred_check
        %p1736 = pneg %p216
      $region62: #{_lambda_.2} parent=59 // pred_check_branch
        %1738 = sbr.rel (%p1736) target = $region64
      $region63: #{_lambda_.2} parent=59 // pred_region
        %p1739 = scmp.lt.s32.totalorder %s20, 1
        %s1740 = scalar_select %p1739, %s20, 1
        %s1741 = smul.addr %s1740, 8
        %s1742 = smul.addr %s1741, 8
        %s1743 = scalar_lea.vmem %s8, %s1742
      $region64: #{_lambda_.2} parent=59 // pred_fallthru
        _
    $region60: #{_lambda_.2} parent=5 // pred_fallthru
      _
  $region6: #{_lambda_.2} parent=0 // loop_footer
    %s18 = sadd.s32 1, %s14
  $region7: #{_lambda_.2} parent=0 // loop_footer_branch
    %13 = sbr.rel target = $region3
  $region8: #{_lambda_.2} parent=0 // loop_exit
    _

</llo_original>
